<compile_context>
chip_gen: v7x
topology: tpu7x:2x2x1
jax: 0.10.0
libtpu: 0.0.40
codegen_flags: <defaults>
</compile_context>

<pallas_src>
import functools

import jax
import jax.numpy as jnp
from jax.experimental import pallas as pl
from jax.experimental.pallas import tpu as pltpu


# ------------------------------ fused kernel --------------------------------

def _fused_lwa_kernel(x_ref, wqkv_ref, bqkv_ref, wdw_ref, bdw_ref, mask_ref,
                      bias_ref, wproj_ref, bproj_ref, o_ref, *,
                      H, W, nh, kd, d, K, scale, mm_dtype):
    f32 = jnp.float32
    P = H * W
    pad = K // 2
    PAD = pad * W + pad            # max |flat offset| of any (dh, dw) tap

    def mm(a, b, dims):
        return jax.lax.dot_general(a.astype(mm_dtype), b.astype(mm_dtype),
                                   (dims, ((), ())),
                                   preferred_element_type=f32)

    # ---- qkv 1x1 conv + folded BN:  (nqkv, C) @ (C, P) on the MXU ----
    x = x_ref[...]                                              # (C, P)
    qkv = mm(wqkv_ref[...], x, ((1,), (0,))) + bqkv_ref[...]    # (nqkv, P)

    nq = nh * kd
    q = qkv[:nq, :]                                             # (nh*kd, P)
    k = qkv[nq:2 * nq, :]                                       # (nh*kd, P)
    v = qkv[2 * nq:, :]                                         # (nh*d , P)

    # ---- per-head depthwise KxK conv + folded BN on q (flat, lane-dense) ----
    zeros = jnp.zeros((nq, PAD), f32)
    qp = jnp.concatenate([zeros, q, zeros], axis=1)             # (nh*kd, P+2*PAD)
    wdw = wdw_ref[...]                                          # (nh*kd, K*K)
    masks = mask_ref[...]                                       # (K, P) col validity
    acc = jnp.zeros((nq, P), f32)
    for dh in range(K):
        for dw in range(K):
            off = (dh - pad) * W + (dw - pad)
            tap = wdw[:, dh * K + dw:dh * K + dw + 1]           # (nh*kd, 1)
            acc = acc + tap * (qp[:, PAD + off:PAD + off + P]
                               * masks[dw:dw + 1, :])
    q = acc + bdw_ref[...]                                      # (nh*kd, P)

    # ---- window attention: dense, block-diagonal-masked (P, P) per head ----
    heads_out = []
    for h in range(nh):
        qh = q[h * kd:(h + 1) * kd, :]                          # (kd, P)
        kh = k[h * kd:(h + 1) * kd, :]                          # (kd, P)
        vh = v[h * d:(h + 1) * d, :]                            # (d , P)
        # logits[i, j] = sum_c qh[c, i] * kh[c, j]
        logits = mm(qh, kh, ((0,), (0,))) * scale + bias_ref[h]  # (P, P)
        m = jnp.max(logits, axis=-1, keepdims=True)
        p = jnp.exp(logits - m)
        s = jnp.sum(p, axis=-1, keepdims=True)
        p = p * pl.reciprocal(s, approx=False)                  # EUP, not VALU div
        # oh[c, i] = sum_j vh[c, j] * p[i, j]
        heads_out.append(mm(vh, p, ((1,), (1,))))               # (d, P)
    o = jnp.concatenate(heads_out, axis=0)                      # (nh*d, P)

    # ---- proj: ReLU -> 1x1 conv + folded BN ----
    o = jnp.maximum(o, 0.0)
    out = mm(wproj_ref[...], o, ((1,), (0,))) + bproj_ref[...]  # (dim, P)
    o_ref[...] = out.astype(o_ref.dtype)


# ------------------------------ Pallas wrapper -------------------------------

def _pallas_forward(x, params, cfg, mm_dtype):
    B, C, H, W = x.shape
    nh, kd, d, K = cfg["num_heads"], cfg["key_dim"], cfg["d"], cfg["dw_kernel"]
    dim = cfg["dim"]
    Wh = Ww = cfg["window"]
    nWw = W // Ww
    P = H * W
    nqkv = nh * (2 * kd + d)
    scale = kd ** (-0.5)

    # --- one-time weight re-layout: reorder qkv output channels to
    #     [q(h0..), q(h1..) | k(..) | v(..)] so the kernel takes aligned slices.
    stride = 2 * kd + d
    idx_q = jnp.concatenate([h * stride + jnp.arange(kd) for h in range(nh)])
    idx_k = idx_q + kd
    idx_v = jnp.concatenate([h * stride + 2 * kd + jnp.arange(d) for h in range(nh)])
    perm = jnp.concatenate([idx_q, idx_k, idx_v])
    w_qkv = params["w_qkv"][perm]                       # (nqkv, C)
    b_qkv = params["b_qkv"][perm][:, None]              # (nqkv, 1)
    w_dw = params["w_dw"].reshape(nh * kd, K * K)       # (nh*kd, K*K)
    b_dw = params["b_dw"].reshape(nh * kd, 1)
    w_proj = params["w_proj"]                           # (dim, nh*d)
    b_proj = params["b_proj"][:, None]                  # (dim, 1)

    # --- column-validity masks for the K horizontal tap offsets (flat layout)
    col = jnp.arange(P, dtype=jnp.int32) % W
    shift = jnp.arange(K, dtype=jnp.int32) - (K // 2)
    dw_mask = ((col[None, :] + shift[:, None] >= 0)
               & (col[None, :] + shift[:, None] < W)).astype(jnp.float32)  # (K, P)

    # --- block-diagonal window bias: pos_emb within a window, -1e9 outside
    hh, ww = jnp.meshgrid(jnp.arange(H), jnp.arange(W), indexing="ij")
    win_id = ((hh // Wh) * nWw + (ww // Ww)).reshape(P)
    in_idx = ((hh % Wh) * Ww + (ww % Ww)).reshape(P)
    same = win_id[:, None] == win_id[None, :]
    pos_full = params["pos_emb"][:, in_idx[:, None], in_idx[None, :]]       # (nh,P,P)
    bias = jnp.where(same[None], pos_full, jnp.float32(-1e9))

    x_flat = x.reshape(B, C, P)                         # pure reshape, no transpose

    kernel = functools.partial(_fused_lwa_kernel, H=H, W=W, nh=nh, kd=kd, d=d,
                               K=K, scale=scale, mm_dtype=mm_dtype)
    out = pl.pallas_call(
        kernel,
        out_shape=jax.ShapeDtypeStruct((B, dim, P), jnp.float32),
        grid=(B,),
        in_specs=[
            pl.BlockSpec((None, C, P), lambda b: (b, 0, 0)),        # x (per batch)
            pl.BlockSpec((nqkv, C), lambda b: (0, 0)),              # w_qkv
            pl.BlockSpec((nqkv, 1), lambda b: (0, 0)),              # b_qkv
            pl.BlockSpec((nh * kd, K * K), lambda b: (0, 0)),       # w_dw
            pl.BlockSpec((nh * kd, 1), lambda b: (0, 0)),           # b_dw
            pl.BlockSpec((K, P), lambda b: (0, 0)),                 # dw column masks
            pl.BlockSpec((nh, P, P), lambda b: (0, 0, 0)),          # attention bias
            pl.BlockSpec((dim, nh * d), lambda b: (0, 0)),          # w_proj
            pl.BlockSpec((dim, 1), lambda b: (0, 0)),               # b_proj
        ],
        out_specs=pl.BlockSpec((None, dim, P), lambda b: (b, 0, 0)),
        compiler_params=pltpu.CompilerParams(
            dimension_semantics=("parallel",),          # 2x on v7x's dual TC
            vmem_limit_bytes=32 * 1024 * 1024),
    )(x_flat, w_qkv, b_qkv, w_dw, b_dw, dw_mask, bias, w_proj, b_proj)
    return out.reshape(B, dim, H, W)


# ------------------------------ pure-JAX reference ---------------------------

def _reference_forward(x, params, cfg, mm_dtype):
    B, C, H, W = x.shape
    nh, kd, d, K = cfg["num_heads"], cfg["key_dim"], cfg["d"], cfg["dw_kernel"]
    dim = cfg["dim"]
    Wh = Ww = cfg["window"]
    nWh, nWw = H // Wh, W // Ww
    Ws = Wh * Ww
    scale = kd ** (-0.5)

    def mm(a, b):
        return jnp.dot(a.astype(mm_dtype), b.astype(mm_dtype),
                       preferred_element_type=jnp.float32)

    # qkv 1x1 conv + BN (folded); conv weight is (out_ch, in_ch)
    xf = x.transpose(0, 2, 3, 1).reshape(B * H * W, C)
    qkv = mm(xf, params["w_qkv"].T) + params["b_qkv"][None, :]
    qkv = qkv.reshape(B, H, W, -1).transpose(0, 3, 1, 2)
    qkv = qkv.reshape(B, nh, 2 * kd + d, H, W)
    q, k, v = qkv[:, :, :kd], qkv[:, :, kd:2 * kd], qkv[:, :, 2 * kd:]

    # per-head depthwise KxK conv + BN on q
    pad = K // 2
    qp = jnp.pad(q, ((0, 0), (0, 0), (0, 0), (pad, pad), (pad, pad)))
    acc = jnp.zeros_like(q)
    for dh in range(K):
        for dw in range(K):
            acc = acc + (params["w_dw"][:, :, dh, dw][None, :, :, None, None]
                         * qp[:, :, :, dh:dh + H, dw:dw + W])
    q = acc + params["b_dw"][None, :, :, None, None]

    # window partition
    def part(t):
        c = t.shape[2]
        t = t.reshape(B, nh, c, nWh, Wh, nWw, Ww).transpose(0, 1, 3, 5, 4, 6, 2)
        return t.reshape(B, nh, nWh * nWw, Ws, c)
    qw, kw, vw = part(q), part(k), part(v)

    logits = jnp.einsum("bhnqc,bhnkc->bhnqk",
                        qw.astype(mm_dtype), kw.astype(mm_dtype),
                        preferred_element_type=jnp.float32) * scale
    logits = logits + params["pos_emb"][None, :, None]
    p = jax.nn.softmax(logits, axis=-1)
    ow = jnp.einsum("bhnqk,bhnkc->bhnqc",
                    p.astype(mm_dtype), vw.astype(mm_dtype),
                    preferred_element_type=jnp.float32)

    o = ow.reshape(B, nh, nWh, nWw, Wh, Ww, d)
    o = o.transpose(0, 1, 6, 2, 4, 3, 5).reshape(B, nh * d, H, W)

    # proj: ReLU -> 1x1 conv + BN (folded)
    of = jnp.maximum(o, 0.0).transpose(0, 2, 3, 1).reshape(B * H * W, nh * d)
    out = mm(of, params["w_proj"].T) + params["b_proj"][None, :]
    return out.reshape(B, H, W, dim).transpose(0, 3, 1, 2)


# ------------------------------ public forward -------------------------------

def local_window_attention_forward(x, params, cfg, use_pallas=True,
                                   mm_dtype=jnp.bfloat16):
    B, C, H0, W0 = x.shape
    Wh = Ww = cfg["window"]
    pad_h = (Wh - H0 % Wh) % Wh
    pad_w = (Ww - W0 % Ww) % Ww
    if pad_h or pad_w:
        x = jnp.pad(x, ((0, 0), (0, 0), (0, pad_h), (0, pad_w)))
    if use_pallas:
        out = _pallas_forward(x, params, cfg, mm_dtype)
    else:
        out = _reference_forward(x, params, cfg, mm_dtype)
    if pad_h or pad_w:
        out = out[:, :, :H0, :W0]
    return out


# ------------------------------ parameter init -------------------------------

def init_params(key, cfg):
    dim, nh, kd, d = cfg["dim"], cfg["num_heads"], cfg["key_dim"], cfg["d"]
    K, Ws = cfg["dw_kernel"], cfg["window"] ** 2
    nqkv = nh * (2 * kd + d)
    ks = jax.random.split(key, 7)
    return {
        # Conv2d_BN(dim, nqkv) folded: weight (out_ch, in_ch), bias (out_ch,)
        "w_qkv": jax.random.normal(ks[0], (nqkv, dim), jnp.float32) * 0.1,
        "b_qkv": jax.random.normal(ks[1], (nqkv,), jnp.float32) * 0.1,
        # per-head depthwise Conv2d_BN(kd, kd, ks=K, groups=kd) folded
        "w_dw": jax.random.normal(ks[2], (nh, kd, K, K), jnp.float32) * 0.1,
        "b_dw": jax.random.normal(ks[3], (nh, kd), jnp.float32) * 0.1,
        # proj Conv2d_BN(nh*d, dim) folded (random instead of bn_weight_init=0)
        "w_proj": jax.random.normal(ks[4], (dim, nh * d), jnp.float32) * 0.1,
        "b_proj": jax.random.normal(ks[5], (dim,), jnp.float32) * 0.1,
        # pos_emb (random instead of zeros so the bias path is exercised)
        "pos_emb": jax.random.normal(ks[6], (nh, Ws, Ws), jnp.float32) * 0.1,
    }


# ------------------------------ main -----------------------------------------

if __name__ == "__main__":
    cfg = dict(dim=16, key_dim=8, num_heads=2, attn_ratio=2,
               resolution=14, window=7, dw_kernel=5)
    cfg["d"] = cfg["attn_ratio"] * cfg["key_dim"]   # = 16

    key = jax.random.PRNGKey(0)
    kx, kp = jax.random.split(key)
    x = jax.random.normal(kx, (2, cfg["dim"], 14, 14), jnp.float32)
    params = init_params(kp, cfg)

    fwd_pallas = jax.jit(lambda xx, pp: local_window_attention_forward(
        xx, pp, cfg, use_pallas=True))
    fwd_ref = jax.jit(lambda xx, pp: local_window_attention_forward(
        xx, pp, cfg, use_pallas=False))

    out = jax.block_until_ready(fwd_pallas(x, params))
    ref = jax.block_until_ready(fwd_ref(x, params))

    assert out.shape == (2, cfg["dim"], 14, 14), out.shape
    assert bool(jnp.all(jnp.isfinite(out)))
    max_err = float(jnp.max(jnp.abs(out - ref)))
    assert jnp.allclose(out, ref, rtol=2e-3, atol=2e-3), max_err

    print("KERNEL_OK")
</pallas_src>

<mosaic_0001>
module attributes {stable_mosaic.version = 11 : i64} {
  func.func @_fused_lwa_kernel(%arg0: i32, %arg1: memref<1x16x196xf32, #tpu.memory_space<vmem>>, %arg2: memref<64x16xf32, #tpu.memory_space<vmem>>, %arg3: memref<64x1xf32, #tpu.memory_space<vmem>>, %arg4: memref<16x25xf32, #tpu.memory_space<vmem>>, %arg5: memref<16x1xf32, #tpu.memory_space<vmem>>, %arg6: memref<5x196xf32, #tpu.memory_space<vmem>>, %arg7: memref<2x196x196xf32, #tpu.memory_space<vmem>>, %arg8: memref<16x32xf32, #tpu.memory_space<vmem>>, %arg9: memref<16x1xf32, #tpu.memory_space<vmem>>, %arg10: memref<1x16x196xf32, #tpu.memory_space<vmem>>) attributes {dimension_semantics = [#tpu.dimension_semantics<parallel>], iteration_bounds = array<i64: 2>, scalar_prefetch = 0 : i64, scratch_operands = 0 : i64, tpu.core_type = #tpu.core_type<tc>, window_params = [{transform_indices = @transform_0, window_bounds = array<i64: 1, 16, 196>}, {pipeline_mode = #tpu.pipeline_mode<synchronous>, transform_indices = @transform_1, window_bounds = array<i64: 64, 16>}, {pipeline_mode = #tpu.pipeline_mode<synchronous>, transform_indices = @transform_2, window_bounds = array<i64: 64, 1>}, {pipeline_mode = #tpu.pipeline_mode<synchronous>, transform_indices = @transform_3, window_bounds = array<i64: 16, 25>}, {pipeline_mode = #tpu.pipeline_mode<synchronous>, transform_indices = @transform_4, window_bounds = array<i64: 16, 1>}, {pipeline_mode = #tpu.pipeline_mode<synchronous>, transform_indices = @transform_5, window_bounds = array<i64: 5, 196>}, {pipeline_mode = #tpu.pipeline_mode<synchronous>, transform_indices = @transform_6, window_bounds = array<i64: 2, 196, 196>}, {pipeline_mode = #tpu.pipeline_mode<synchronous>, transform_indices = @transform_7, window_bounds = array<i64: 16, 32>}, {pipeline_mode = #tpu.pipeline_mode<synchronous>, transform_indices = @transform_8, window_bounds = array<i64: 16, 1>}, {transform_indices = @transform_9, window_bounds = array<i64: 1, 16, 196>}]} {
    %c0 = arith.constant 0 : index
    %c0_0 = arith.constant 0 : index
    %c0_1 = arith.constant 0 : index
    %0 = vector.load %arg1[%c0, %c0_0, %c0_1] : memref<1x16x196xf32, #tpu.memory_space<vmem>>, vector<1x16x196xf32>
    %1 = vector.shape_cast %0 : vector<1x16x196xf32> to vector<16x196xf32>
    %c0_2 = arith.constant 0 : index
    %c0_3 = arith.constant 0 : index
    %2 = vector.load %arg2[%c0_2, %c0_3] : memref<64x16xf32, #tpu.memory_space<vmem>>, vector<64x16xf32>
    %3 = arith.truncf %2 : vector<64x16xf32> to vector<64x16xbf16>
    %4 = arith.truncf %1 : vector<16x196xf32> to vector<16x196xbf16>
    %cst = arith.constant dense<0.000000e+00> : vector<64x196xf32>
    %5 = tpu.matmul %3, %4, %cst {dimension_numbers = #tpu.dot_dimension_numbers<[1], [0], [0], [1], [0, 0, 1, 1], [], []>} : vector<64x16xbf16>, vector<16x196xbf16>, vector<64x196xf32> -> vector<64x196xf32>
    %c0_4 = arith.constant 0 : index
    %c0_5 = arith.constant 0 : index
    %6 = vector.load %arg3[%c0_4, %c0_5] : memref<64x1xf32, #tpu.memory_space<vmem>>, vector<64x1xf32>
    %7 = vector.broadcast %6 : vector<64x1xf32> to vector<64x196xf32>
    %8 = arith.addf %5, %7 : vector<64x196xf32>
    %9 = vector.extract_strided_slice %8 {offsets = [0, 0], sizes = [16, 196], strides = [1, 1]} : vector<64x196xf32> to vector<16x196xf32>
    %10 = vector.extract_strided_slice %8 {offsets = [16, 0], sizes = [16, 196], strides = [1, 1]} : vector<64x196xf32> to vector<16x196xf32>
    %11 = vector.extract_strided_slice %8 {offsets = [32, 0], sizes = [32, 196], strides = [1, 1]} : vector<64x196xf32> to vector<32x196xf32>
    %cst_6 = arith.constant 0.000000e+00 : f32
    %12 = vector.broadcast %cst_6 : f32 to vector<16x30xf32>
    %13 = tpu.concatenate %12, %9, %12 in 1 : vector<16x30xf32>, vector<16x196xf32>, vector<16x30xf32> -> vector<16x256xf32>
    %c0_7 = arith.constant 0 : index
    %c0_8 = arith.constant 0 : index
    %14 = vector.load %arg4[%c0_7, %c0_8] : memref<16x25xf32, #tpu.memory_space<vmem>>, vector<16x25xf32>
    %c0_9 = arith.constant 0 : index
    %c0_10 = arith.constant 0 : index
    %15 = vector.load %arg6[%c0_9, %c0_10] : memref<5x196xf32, #tpu.memory_space<vmem>>, vector<5x196xf32>
    %cst_11 = arith.constant 0.000000e+00 : f32
    %16 = vector.broadcast %cst_11 : f32 to vector<16x196xf32>
    %17 = vector.extract_strided_slice %14 {offsets = [0, 0], sizes = [16, 1], strides = [1, 1]} : vector<16x25xf32> to vector<16x1xf32>
    %18 = vector.extract_strided_slice %13 {offsets = [0, 0], sizes = [16, 196], strides = [1, 1]} : vector<16x256xf32> to vector<16x196xf32>
    %19 = vector.extract_strided_slice %15 {offsets = [0, 0], sizes = [1, 196], strides = [1, 1]} : vector<5x196xf32> to vector<1x196xf32>
    %20 = vector.broadcast %19 : vector<1x196xf32> to vector<16x196xf32>
    %21 = arith.mulf %18, %20 : vector<16x196xf32>
    %22 = vector.broadcast %17 : vector<16x1xf32> to vector<16x196xf32>
    %23 = arith.mulf %22, %21 : vector<16x196xf32>
    %24 = arith.addf %16, %23 : vector<16x196xf32>
    %25 = vector.extract_strided_slice %14 {offsets = [0, 1], sizes = [16, 1], strides = [1, 1]} : vector<16x25xf32> to vector<16x1xf32>
    %26 = vector.extract_strided_slice %13 {offsets = [0, 1], sizes = [16, 196], strides = [1, 1]} : vector<16x256xf32> to vector<16x196xf32>
    %27 = vector.extract_strided_slice %15 {offsets = [1, 0], sizes = [1, 196], strides = [1, 1]} : vector<5x196xf32> to vector<1x196xf32>
    %28 = vector.broadcast %27 : vector<1x196xf32> to vector<16x196xf32>
    %29 = arith.mulf %26, %28 : vector<16x196xf32>
    %30 = vector.broadcast %25 : vector<16x1xf32> to vector<16x196xf32>
    %31 = arith.mulf %30, %29 : vector<16x196xf32>
    %32 = arith.addf %24, %31 : vector<16x196xf32>
    %33 = vector.extract_strided_slice %14 {offsets = [0, 2], sizes = [16, 1], strides = [1, 1]} : vector<16x25xf32> to vector<16x1xf32>
    %34 = vector.extract_strided_slice %13 {offsets = [0, 2], sizes = [16, 196], strides = [1, 1]} : vector<16x256xf32> to vector<16x196xf32>
    %35 = vector.extract_strided_slice %15 {offsets = [2, 0], sizes = [1, 196], strides = [1, 1]} : vector<5x196xf32> to vector<1x196xf32>
    %36 = vector.broadcast %35 : vector<1x196xf32> to vector<16x196xf32>
    %37 = arith.mulf %34, %36 : vector<16x196xf32>
    %38 = vector.broadcast %33 : vector<16x1xf32> to vector<16x196xf32>
    %39 = arith.mulf %38, %37 : vector<16x196xf32>
    %40 = arith.addf %32, %39 : vector<16x196xf32>
    %41 = vector.extract_strided_slice %14 {offsets = [0, 3], sizes = [16, 1], strides = [1, 1]} : vector<16x25xf32> to vector<16x1xf32>
    %42 = vector.extract_strided_slice %13 {offsets = [0, 3], sizes = [16, 196], strides = [1, 1]} : vector<16x256xf32> to vector<16x196xf32>
    %43 = vector.extract_strided_slice %15 {offsets = [3, 0], sizes = [1, 196], strides = [1, 1]} : vector<5x196xf32> to vector<1x196xf32>
    %44 = vector.broadcast %43 : vector<1x196xf32> to vector<16x196xf32>
    %45 = arith.mulf %42, %44 : vector<16x196xf32>
    %46 = vector.broadcast %41 : vector<16x1xf32> to vector<16x196xf32>
    %47 = arith.mulf %46, %45 : vector<16x196xf32>
    %48 = arith.addf %40, %47 : vector<16x196xf32>
    %49 = vector.extract_strided_slice %14 {offsets = [0, 4], sizes = [16, 1], strides = [1, 1]} : vector<16x25xf32> to vector<16x1xf32>
    %50 = vector.extract_strided_slice %13 {offsets = [0, 4], sizes = [16, 196], strides = [1, 1]} : vector<16x256xf32> to vector<16x196xf32>
    %51 = vector.extract_strided_slice %15 {offsets = [4, 0], sizes = [1, 196], strides = [1, 1]} : vector<5x196xf32> to vector<1x196xf32>
    %52 = vector.broadcast %51 : vector<1x196xf32> to vector<16x196xf32>
    %53 = arith.mulf %50, %52 : vector<16x196xf32>
    %54 = vector.broadcast %49 : vector<16x1xf32> to vector<16x196xf32>
    %55 = arith.mulf %54, %53 : vector<16x196xf32>
    %56 = arith.addf %48, %55 : vector<16x196xf32>
    %57 = vector.extract_strided_slice %14 {offsets = [0, 5], sizes = [16, 1], strides = [1, 1]} : vector<16x25xf32> to vector<16x1xf32>
    %58 = vector.extract_strided_slice %13 {offsets = [0, 14], sizes = [16, 196], strides = [1, 1]} : vector<16x256xf32> to vector<16x196xf32>
    %59 = vector.extract_strided_slice %15 {offsets = [0, 0], sizes = [1, 196], strides = [1, 1]} : vector<5x196xf32> to vector<1x196xf32>
    %60 = vector.broadcast %59 : vector<1x196xf32> to vector<16x196xf32>
    %61 = arith.mulf %58, %60 : vector<16x196xf32>
    %62 = vector.broadcast %57 : vector<16x1xf32> to vector<16x196xf32>
    %63 = arith.mulf %62, %61 : vector<16x196xf32>
    %64 = arith.addf %56, %63 : vector<16x196xf32>
    %65 = vector.extract_strided_slice %14 {offsets = [0, 6], sizes = [16, 1], strides = [1, 1]} : vector<16x25xf32> to vector<16x1xf32>
    %66 = vector.extract_strided_slice %13 {offsets = [0, 15], sizes = [16, 196], strides = [1, 1]} : vector<16x256xf32> to vector<16x196xf32>
    %67 = vector.extract_strided_slice %15 {offsets = [1, 0], sizes = [1, 196], strides = [1, 1]} : vector<5x196xf32> to vector<1x196xf32>
    %68 = vector.broadcast %67 : vector<1x196xf32> to vector<16x196xf32>
    %69 = arith.mulf %66, %68 : vector<16x196xf32>
    %70 = vector.broadcast %65 : vector<16x1xf32> to vector<16x196xf32>
    %71 = arith.mulf %70, %69 : vector<16x196xf32>
    %72 = arith.addf %64, %71 : vector<16x196xf32>
    %73 = vector.extract_strided_slice %14 {offsets = [0, 7], sizes = [16, 1], strides = [1, 1]} : vector<16x25xf32> to vector<16x1xf32>
    %74 = vector.extract_strided_slice %13 {offsets = [0, 16], sizes = [16, 196], strides = [1, 1]} : vector<16x256xf32> to vector<16x196xf32>
    %75 = vector.extract_strided_slice %15 {offsets = [2, 0], sizes = [1, 196], strides = [1, 1]} : vector<5x196xf32> to vector<1x196xf32>
    %76 = vector.broadcast %75 : vector<1x196xf32> to vector<16x196xf32>
    %77 = arith.mulf %74, %76 : vector<16x196xf32>
    %78 = vector.broadcast %73 : vector<16x1xf32> to vector<16x196xf32>
    %79 = arith.mulf %78, %77 : vector<16x196xf32>
    %80 = arith.addf %72, %79 : vector<16x196xf32>
    %81 = vector.extract_strided_slice %14 {offsets = [0, 8], sizes = [16, 1], strides = [1, 1]} : vector<16x25xf32> to vector<16x1xf32>
    %82 = vector.extract_strided_slice %13 {offsets = [0, 17], sizes = [16, 196], strides = [1, 1]} : vector<16x256xf32> to vector<16x196xf32>
    %83 = vector.extract_strided_slice %15 {offsets = [3, 0], sizes = [1, 196], strides = [1, 1]} : vector<5x196xf32> to vector<1x196xf32>
    %84 = vector.broadcast %83 : vector<1x196xf32> to vector<16x196xf32>
    %85 = arith.mulf %82, %84 : vector<16x196xf32>
    %86 = vector.broadcast %81 : vector<16x1xf32> to vector<16x196xf32>
    %87 = arith.mulf %86, %85 : vector<16x196xf32>
    %88 = arith.addf %80, %87 : vector<16x196xf32>
    %89 = vector.extract_strided_slice %14 {offsets = [0, 9], sizes = [16, 1], strides = [1, 1]} : vector<16x25xf32> to vector<16x1xf32>
    %90 = vector.extract_strided_slice %13 {offsets = [0, 18], sizes = [16, 196], strides = [1, 1]} : vector<16x256xf32> to vector<16x196xf32>
    %91 = vector.extract_strided_slice %15 {offsets = [4, 0], sizes = [1, 196], strides = [1, 1]} : vector<5x196xf32> to vector<1x196xf32>
    %92 = vector.broadcast %91 : vector<1x196xf32> to vector<16x196xf32>
    %93 = arith.mulf %90, %92 : vector<16x196xf32>
    %94 = vector.broadcast %89 : vector<16x1xf32> to vector<16x196xf32>
    %95 = arith.mulf %94, %93 : vector<16x196xf32>
    %96 = arith.addf %88, %95 : vector<16x196xf32>
    %97 = vector.extract_strided_slice %14 {offsets = [0, 10], sizes = [16, 1], strides = [1, 1]} : vector<16x25xf32> to vector<16x1xf32>
    %98 = vector.extract_strided_slice %13 {offsets = [0, 28], sizes = [16, 196], strides = [1, 1]} : vector<16x256xf32> to vector<16x196xf32>
    %99 = vector.extract_strided_slice %15 {offsets = [0, 0], sizes = [1, 196], strides = [1, 1]} : vector<5x196xf32> to vector<1x196xf32>
    %100 = vector.broadcast %99 : vector<1x196xf32> to vector<16x196xf32>
    %101 = arith.mulf %98, %100 : vector<16x196xf32>
    %102 = vector.broadcast %97 : vector<16x1xf32> to vector<16x196xf32>
    %103 = arith.mulf %102, %101 : vector<16x196xf32>
    %104 = arith.addf %96, %103 : vector<16x196xf32>
    %105 = vector.extract_strided_slice %14 {offsets = [0, 11], sizes = [16, 1], strides = [1, 1]} : vector<16x25xf32> to vector<16x1xf32>
    %106 = vector.extract_strided_slice %13 {offsets = [0, 29], sizes = [16, 196], strides = [1, 1]} : vector<16x256xf32> to vector<16x196xf32>
    %107 = vector.extract_strided_slice %15 {offsets = [1, 0], sizes = [1, 196], strides = [1, 1]} : vector<5x196xf32> to vector<1x196xf32>
    %108 = vector.broadcast %107 : vector<1x196xf32> to vector<16x196xf32>
    %109 = arith.mulf %106, %108 : vector<16x196xf32>
    %110 = vector.broadcast %105 : vector<16x1xf32> to vector<16x196xf32>
    %111 = arith.mulf %110, %109 : vector<16x196xf32>
    %112 = arith.addf %104, %111 : vector<16x196xf32>
    %113 = vector.extract_strided_slice %14 {offsets = [0, 12], sizes = [16, 1], strides = [1, 1]} : vector<16x25xf32> to vector<16x1xf32>
    %114 = vector.extract_strided_slice %13 {offsets = [0, 30], sizes = [16, 196], strides = [1, 1]} : vector<16x256xf32> to vector<16x196xf32>
    %115 = vector.extract_strided_slice %15 {offsets = [2, 0], sizes = [1, 196], strides = [1, 1]} : vector<5x196xf32> to vector<1x196xf32>
    %116 = vector.broadcast %115 : vector<1x196xf32> to vector<16x196xf32>
    %117 = arith.mulf %114, %116 : vector<16x196xf32>
    %118 = vector.broadcast %113 : vector<16x1xf32> to vector<16x196xf32>
    %119 = arith.mulf %118, %117 : vector<16x196xf32>
    %120 = arith.addf %112, %119 : vector<16x196xf32>
    %121 = vector.extract_strided_slice %14 {offsets = [0, 13], sizes = [16, 1], strides = [1, 1]} : vector<16x25xf32> to vector<16x1xf32>
    %122 = vector.extract_strided_slice %13 {offsets = [0, 31], sizes = [16, 196], strides = [1, 1]} : vector<16x256xf32> to vector<16x196xf32>
    %123 = vector.extract_strided_slice %15 {offsets = [3, 0], sizes = [1, 196], strides = [1, 1]} : vector<5x196xf32> to vector<1x196xf32>
    %124 = vector.broadcast %123 : vector<1x196xf32> to vector<16x196xf32>
    %125 = arith.mulf %122, %124 : vector<16x196xf32>
    %126 = vector.broadcast %121 : vector<16x1xf32> to vector<16x196xf32>
    %127 = arith.mulf %126, %125 : vector<16x196xf32>
    %128 = arith.addf %120, %127 : vector<16x196xf32>
    %129 = vector.extract_strided_slice %14 {offsets = [0, 14], sizes = [16, 1], strides = [1, 1]} : vector<16x25xf32> to vector<16x1xf32>
    %130 = vector.extract_strided_slice %13 {offsets = [0, 32], sizes = [16, 196], strides = [1, 1]} : vector<16x256xf32> to vector<16x196xf32>
    %131 = vector.extract_strided_slice %15 {offsets = [4, 0], sizes = [1, 196], strides = [1, 1]} : vector<5x196xf32> to vector<1x196xf32>
    %132 = vector.broadcast %131 : vector<1x196xf32> to vector<16x196xf32>
    %133 = arith.mulf %130, %132 : vector<16x196xf32>
    %134 = vector.broadcast %129 : vector<16x1xf32> to vector<16x196xf32>
    %135 = arith.mulf %134, %133 : vector<16x196xf32>
    %136 = arith.addf %128, %135 : vector<16x196xf32>
    %137 = vector.extract_strided_slice %14 {offsets = [0, 15], sizes = [16, 1], strides = [1, 1]} : vector<16x25xf32> to vector<16x1xf32>
    %138 = vector.extract_strided_slice %13 {offsets = [0, 42], sizes = [16, 196], strides = [1, 1]} : vector<16x256xf32> to vector<16x196xf32>
    %139 = vector.extract_strided_slice %15 {offsets = [0, 0], sizes = [1, 196], strides = [1, 1]} : vector<5x196xf32> to vector<1x196xf32>
    %140 = vector.broadcast %139 : vector<1x196xf32> to vector<16x196xf32>
    %141 = arith.mulf %138, %140 : vector<16x196xf32>
    %142 = vector.broadcast %137 : vector<16x1xf32> to vector<16x196xf32>
    %143 = arith.mulf %142, %141 : vector<16x196xf32>
    %144 = arith.addf %136, %143 : vector<16x196xf32>
    %145 = vector.extract_strided_slice %14 {offsets = [0, 16], sizes = [16, 1], strides = [1, 1]} : vector<16x25xf32> to vector<16x1xf32>
    %146 = vector.extract_strided_slice %13 {offsets = [0, 43], sizes = [16, 196], strides = [1, 1]} : vector<16x256xf32> to vector<16x196xf32>
    %147 = vector.extract_strided_slice %15 {offsets = [1, 0], sizes = [1, 196], strides = [1, 1]} : vector<5x196xf32> to vector<1x196xf32>
    %148 = vector.broadcast %147 : vector<1x196xf32> to vector<16x196xf32>
    %149 = arith.mulf %146, %148 : vector<16x196xf32>
    %150 = vector.broadcast %145 : vector<16x1xf32> to vector<16x196xf32>
    %151 = arith.mulf %150, %149 : vector<16x196xf32>
    %152 = arith.addf %144, %151 : vector<16x196xf32>
    %153 = vector.extract_strided_slice %14 {offsets = [0, 17], sizes = [16, 1], strides = [1, 1]} : vector<16x25xf32> to vector<16x1xf32>
    %154 = vector.extract_strided_slice %13 {offsets = [0, 44], sizes = [16, 196], strides = [1, 1]} : vector<16x256xf32> to vector<16x196xf32>
    %155 = vector.extract_strided_slice %15 {offsets = [2, 0], sizes = [1, 196], strides = [1, 1]} : vector<5x196xf32> to vector<1x196xf32>
    %156 = vector.broadcast %155 : vector<1x196xf32> to vector<16x196xf32>
    %157 = arith.mulf %154, %156 : vector<16x196xf32>
    %158 = vector.broadcast %153 : vector<16x1xf32> to vector<16x196xf32>
    %159 = arith.mulf %158, %157 : vector<16x196xf32>
    %160 = arith.addf %152, %159 : vector<16x196xf32>
    %161 = vector.extract_strided_slice %14 {offsets = [0, 18], sizes = [16, 1], strides = [1, 1]} : vector<16x25xf32> to vector<16x1xf32>
    %162 = vector.extract_strided_slice %13 {offsets = [0, 45], sizes = [16, 196], strides = [1, 1]} : vector<16x256xf32> to vector<16x196xf32>
    %163 = vector.extract_strided_slice %15 {offsets = [3, 0], sizes = [1, 196], strides = [1, 1]} : vector<5x196xf32> to vector<1x196xf32>
    %164 = vector.broadcast %163 : vector<1x196xf32> to vector<16x196xf32>
    %165 = arith.mulf %162, %164 : vector<16x196xf32>
    %166 = vector.broadcast %161 : vector<16x1xf32> to vector<16x196xf32>
    %167 = arith.mulf %166, %165 : vector<16x196xf32>
    %168 = arith.addf %160, %167 : vector<16x196xf32>
    %169 = vector.extract_strided_slice %14 {offsets = [0, 19], sizes = [16, 1], strides = [1, 1]} : vector<16x25xf32> to vector<16x1xf32>
    %170 = vector.extract_strided_slice %13 {offsets = [0, 46], sizes = [16, 196], strides = [1, 1]} : vector<16x256xf32> to vector<16x196xf32>
    %171 = vector.extract_strided_slice %15 {offsets = [4, 0], sizes = [1, 196], strides = [1, 1]} : vector<5x196xf32> to vector<1x196xf32>
    %172 = vector.broadcast %171 : vector<1x196xf32> to vector<16x196xf32>
    %173 = arith.mulf %170, %172 : vector<16x196xf32>
    %174 = vector.broadcast %169 : vector<16x1xf32> to vector<16x196xf32>
    %175 = arith.mulf %174, %173 : vector<16x196xf32>
    %176 = arith.addf %168, %175 : vector<16x196xf32>
    %177 = vector.extract_strided_slice %14 {offsets = [0, 20], sizes = [16, 1], strides = [1, 1]} : vector<16x25xf32> to vector<16x1xf32>
    %178 = vector.extract_strided_slice %13 {offsets = [0, 56], sizes = [16, 196], strides = [1, 1]} : vector<16x256xf32> to vector<16x196xf32>
    %179 = vector.extract_strided_slice %15 {offsets = [0, 0], sizes = [1, 196], strides = [1, 1]} : vector<5x196xf32> to vector<1x196xf32>
    %180 = vector.broadcast %179 : vector<1x196xf32> to vector<16x196xf32>
    %181 = arith.mulf %178, %180 : vector<16x196xf32>
    %182 = vector.broadcast %177 : vector<16x1xf32> to vector<16x196xf32>
    %183 = arith.mulf %182, %181 : vector<16x196xf32>
    %184 = arith.addf %176, %183 : vector<16x196xf32>
    %185 = vector.extract_strided_slice %14 {offsets = [0, 21], sizes = [16, 1], strides = [1, 1]} : vector<16x25xf32> to vector<16x1xf32>
    %186 = vector.extract_strided_slice %13 {offsets = [0, 57], sizes = [16, 196], strides = [1, 1]} : vector<16x256xf32> to vector<16x196xf32>
    %187 = vector.extract_strided_slice %15 {offsets = [1, 0], sizes = [1, 196], strides = [1, 1]} : vector<5x196xf32> to vector<1x196xf32>
    %188 = vector.broadcast %187 : vector<1x196xf32> to vector<16x196xf32>
    %189 = arith.mulf %186, %188 : vector<16x196xf32>
    %190 = vector.broadcast %185 : vector<16x1xf32> to vector<16x196xf32>
    %191 = arith.mulf %190, %189 : vector<16x196xf32>
    %192 = arith.addf %184, %191 : vector<16x196xf32>
    %193 = vector.extract_strided_slice %14 {offsets = [0, 22], sizes = [16, 1], strides = [1, 1]} : vector<16x25xf32> to vector<16x1xf32>
    %194 = vector.extract_strided_slice %13 {offsets = [0, 58], sizes = [16, 196], strides = [1, 1]} : vector<16x256xf32> to vector<16x196xf32>
    %195 = vector.extract_strided_slice %15 {offsets = [2, 0], sizes = [1, 196], strides = [1, 1]} : vector<5x196xf32> to vector<1x196xf32>
    %196 = vector.broadcast %195 : vector<1x196xf32> to vector<16x196xf32>
    %197 = arith.mulf %194, %196 : vector<16x196xf32>
    %198 = vector.broadcast %193 : vector<16x1xf32> to vector<16x196xf32>
    %199 = arith.mulf %198, %197 : vector<16x196xf32>
    %200 = arith.addf %192, %199 : vector<16x196xf32>
    %201 = vector.extract_strided_slice %14 {offsets = [0, 23], sizes = [16, 1], strides = [1, 1]} : vector<16x25xf32> to vector<16x1xf32>
    %202 = vector.extract_strided_slice %13 {offsets = [0, 59], sizes = [16, 196], strides = [1, 1]} : vector<16x256xf32> to vector<16x196xf32>
    %203 = vector.extract_strided_slice %15 {offsets = [3, 0], sizes = [1, 196], strides = [1, 1]} : vector<5x196xf32> to vector<1x196xf32>
    %204 = vector.broadcast %203 : vector<1x196xf32> to vector<16x196xf32>
    %205 = arith.mulf %202, %204 : vector<16x196xf32>
    %206 = vector.broadcast %201 : vector<16x1xf32> to vector<16x196xf32>
    %207 = arith.mulf %206, %205 : vector<16x196xf32>
    %208 = arith.addf %200, %207 : vector<16x196xf32>
    %209 = vector.extract_strided_slice %14 {offsets = [0, 24], sizes = [16, 1], strides = [1, 1]} : vector<16x25xf32> to vector<16x1xf32>
    %210 = vector.extract_strided_slice %13 {offsets = [0, 60], sizes = [16, 196], strides = [1, 1]} : vector<16x256xf32> to vector<16x196xf32>
    %211 = vector.extract_strided_slice %15 {offsets = [4, 0], sizes = [1, 196], strides = [1, 1]} : vector<5x196xf32> to vector<1x196xf32>
    %212 = vector.broadcast %211 : vector<1x196xf32> to vector<16x196xf32>
    %213 = arith.mulf %210, %212 : vector<16x196xf32>
    %214 = vector.broadcast %209 : vector<16x1xf32> to vector<16x196xf32>
    %215 = arith.mulf %214, %213 : vector<16x196xf32>
    %216 = arith.addf %208, %215 : vector<16x196xf32>
    %c0_12 = arith.constant 0 : index
    %c0_13 = arith.constant 0 : index
    %217 = vector.load %arg5[%c0_12, %c0_13] : memref<16x1xf32, #tpu.memory_space<vmem>>, vector<16x1xf32>
    %218 = vector.broadcast %217 : vector<16x1xf32> to vector<16x196xf32>
    %219 = arith.addf %216, %218 : vector<16x196xf32>
    %220 = vector.extract_strided_slice %219 {offsets = [0, 0], sizes = [8, 196], strides = [1, 1]} : vector<16x196xf32> to vector<8x196xf32>
    %221 = vector.extract_strided_slice %10 {offsets = [0, 0], sizes = [8, 196], strides = [1, 1]} : vector<16x196xf32> to vector<8x196xf32>
    %222 = vector.extract_strided_slice %11 {offsets = [0, 0], sizes = [16, 196], strides = [1, 1]} : vector<32x196xf32> to vector<16x196xf32>
    %223 = arith.truncf %220 : vector<8x196xf32> to vector<8x196xbf16>
    %224 = arith.truncf %221 : vector<8x196xf32> to vector<8x196xbf16>
    %cst_14 = arith.constant dense<0.000000e+00> : vector<196x196xf32>
    %225 = tpu.matmul %223, %224, %cst_14 {dimension_numbers = #tpu.dot_dimension_numbers<[0], [0], [1], [1], [0, 1, 1, 1], [], []>} : vector<8x196xbf16>, vector<8x196xbf16>, vector<196x196xf32> -> vector<196x196xf32>
    %cst_15 = arith.constant 0.353553385 : f32
    %226 = vector.broadcast %cst_15 : f32 to vector<196x196xf32>
    %227 = arith.mulf %225, %226 : vector<196x196xf32>
    %c0_16 = arith.constant 0 : index
    %c0_17 = arith.constant 0 : index
    %c0_18 = arith.constant 0 : index
    %228 = vector.load %arg7[%c0_16, %c0_17, %c0_18] : memref<2x196x196xf32, #tpu.memory_space<vmem>>, vector<1x196x196xf32>
    %229 = vector.shape_cast %228 : vector<1x196x196xf32> to vector<196x196xf32>
    %230 = arith.addf %227, %229 : vector<196x196xf32>
    %cst_19 = arith.constant dense<0xFF800000> : vector<196xf32>
    %231 = vector.multi_reduction <maximumf>, %230, %cst_19 [1] : vector<196x196xf32> to vector<196xf32>
    %232 = vector.shape_cast %231 : vector<196xf32> to vector<196x1xf32>
    %233 = vector.broadcast %232 : vector<196x1xf32> to vector<196x196xf32>
    %234 = arith.subf %230, %233 : vector<196x196xf32>
    %235 = math.exp %234 : vector<196x196xf32>
    %cst_20 = arith.constant dense<0.000000e+00> : vector<196xf32>
    %236 = vector.multi_reduction <add>, %235, %cst_20 [1] : vector<196x196xf32> to vector<196xf32>
    %237 = vector.shape_cast %236 : vector<196xf32> to vector<196x1xf32>
    %238 = tpu.reciprocal %237 : vector<196x1xf32> -> vector<196x1xf32>
    %239 = vector.broadcast %238 : vector<196x1xf32> to vector<196x196xf32>
    %240 = arith.mulf %235, %239 : vector<196x196xf32>
    %241 = arith.truncf %222 : vector<16x196xf32> to vector<16x196xbf16>
    %242 = arith.truncf %240 : vector<196x196xf32> to vector<196x196xbf16>
    %cst_21 = arith.constant dense<0.000000e+00> : vector<16x196xf32>
    %243 = tpu.matmul %241, %242, %cst_21 {dimension_numbers = #tpu.dot_dimension_numbers<[1], [1], [0], [0], [0, 0, 1, 0], [], []>} : vector<16x196xbf16>, vector<196x196xbf16>, vector<16x196xf32> -> vector<16x196xf32>
    %244 = vector.extract_strided_slice %219 {offsets = [8, 0], sizes = [8, 196], strides = [1, 1]} : vector<16x196xf32> to vector<8x196xf32>
    %245 = vector.extract_strided_slice %10 {offsets = [8, 0], sizes = [8, 196], strides = [1, 1]} : vector<16x196xf32> to vector<8x196xf32>
    %246 = vector.extract_strided_slice %11 {offsets = [16, 0], sizes = [16, 196], strides = [1, 1]} : vector<32x196xf32> to vector<16x196xf32>
    %247 = arith.truncf %244 : vector<8x196xf32> to vector<8x196xbf16>
    %248 = arith.truncf %245 : vector<8x196xf32> to vector<8x196xbf16>
    %cst_22 = arith.constant dense<0.000000e+00> : vector<196x196xf32>
    %249 = tpu.matmul %247, %248, %cst_22 {dimension_numbers = #tpu.dot_dimension_numbers<[0], [0], [1], [1], [0, 1, 1, 1], [], []>} : vector<8x196xbf16>, vector<8x196xbf16>, vector<196x196xf32> -> vector<196x196xf32>
    %cst_23 = arith.constant 0.353553385 : f32
    %250 = vector.broadcast %cst_23 : f32 to vector<196x196xf32>
    %251 = arith.mulf %249, %250 : vector<196x196xf32>
    %c1 = arith.constant 1 : index
    %c0_24 = arith.constant 0 : index
    %c0_25 = arith.constant 0 : index
    %252 = vector.load %arg7[%c1, %c0_24, %c0_25] : memref<2x196x196xf32, #tpu.memory_space<vmem>>, vector<1x196x196xf32>
    %253 = vector.shape_cast %252 : vector<1x196x196xf32> to vector<196x196xf32>
    %254 = arith.addf %251, %253 : vector<196x196xf32>
    %cst_26 = arith.constant dense<0xFF800000> : vector<196xf32>
    %255 = vector.multi_reduction <maximumf>, %254, %cst_26 [1] : vector<196x196xf32> to vector<196xf32>
    %256 = vector.shape_cast %255 : vector<196xf32> to vector<196x1xf32>
    %257 = vector.broadcast %256 : vector<196x1xf32> to vector<196x196xf32>
    %258 = arith.subf %254, %257 : vector<196x196xf32>
    %259 = math.exp %258 : vector<196x196xf32>
    %cst_27 = arith.constant dense<0.000000e+00> : vector<196xf32>
    %260 = vector.multi_reduction <add>, %259, %cst_27 [1] : vector<196x196xf32> to vector<196xf32>
    %261 = vector.shape_cast %260 : vector<196xf32> to vector<196x1xf32>
    %262 = tpu.reciprocal %261 : vector<196x1xf32> -> vector<196x1xf32>
    %263 = vector.broadcast %262 : vector<196x1xf32> to vector<196x196xf32>
    %264 = arith.mulf %259, %263 : vector<196x196xf32>
    %265 = arith.truncf %246 : vector<16x196xf32> to vector<16x196xbf16>
    %266 = arith.truncf %264 : vector<196x196xf32> to vector<196x196xbf16>
    %cst_28 = arith.constant dense<0.000000e+00> : vector<16x196xf32>
    %267 = tpu.matmul %265, %266, %cst_28 {dimension_numbers = #tpu.dot_dimension_numbers<[1], [1], [0], [0], [0, 0, 1, 0], [], []>} : vector<16x196xbf16>, vector<196x196xbf16>, vector<16x196xf32> -> vector<16x196xf32>
    %268 = tpu.concatenate %243, %267 in 0 : vector<16x196xf32>, vector<16x196xf32> -> vector<32x196xf32>
    %cst_29 = arith.constant 0.000000e+00 : f32
    %269 = vector.broadcast %cst_29 : f32 to vector<32x196xf32>
    %270 = arith.maximumf %268, %269 : vector<32x196xf32>
    %c0_30 = arith.constant 0 : index
    %c0_31 = arith.constant 0 : index
    %271 = vector.load %arg8[%c0_30, %c0_31] : memref<16x32xf32, #tpu.memory_space<vmem>>, vector<16x32xf32>
    %272 = arith.truncf %271 : vector<16x32xf32> to vector<16x32xbf16>
    %273 = arith.truncf %270 : vector<32x196xf32> to vector<32x196xbf16>
    %cst_32 = arith.constant dense<0.000000e+00> : vector<16x196xf32>
    %274 = tpu.matmul %272, %273, %cst_32 {dimension_numbers = #tpu.dot_dimension_numbers<[1], [0], [0], [1], [0, 0, 1, 1], [], []>} : vector<16x32xbf16>, vector<32x196xbf16>, vector<16x196xf32> -> vector<16x196xf32>
    %c0_33 = arith.constant 0 : index
    %c0_34 = arith.constant 0 : index
    %275 = vector.load %arg9[%c0_33, %c0_34] : memref<16x1xf32, #tpu.memory_space<vmem>>, vector<16x1xf32>
    %276 = vector.broadcast %275 : vector<16x1xf32> to vector<16x196xf32>
    %277 = arith.addf %274, %276 : vector<16x196xf32>
    %c0_35 = arith.constant 0 : index
    %c0_36 = arith.constant 0 : index
    %c0_37 = arith.constant 0 : index
    %278 = vector.load %arg10[%c0_35, %c0_36, %c0_37] : memref<1x16x196xf32, #tpu.memory_space<vmem>>, vector<1x16x196xf32>
    %279 = vector.shape_cast %278 : vector<1x16x196xf32> to vector<16x196xf32>
    %280 = vector.shape_cast %277 : vector<16x196xf32> to vector<1x16x196xf32>
    tpu.vector_store %arg10[%c0_35, %c0_36, %c0_37], %280 {strides = array<i32>} : memref<1x16x196xf32, #tpu.memory_space<vmem>>, vector<1x16x196xf32>,
    return
  }
  func.func @transform_0(%arg0: i32) -> (i32, i32, i32) {
    %c0_i32 = arith.constant 0 : i32
    %c0_i32_0 = arith.constant 0 : i32
    %c0_i32_1 = arith.constant 0 : i32
    return %arg0, %c0_i32, %c0_i32_0 : i32, i32, i32
  }
  func.func @transform_1(%arg0: i32) -> (i32, i32) {
    %c0_i32 = arith.constant 0 : i32
    %c0_i32_0 = arith.constant 0 : i32
    %c0_i32_1 = arith.constant 0 : i32
    return %c0_i32, %c0_i32_0 : i32, i32
  }
  func.func @transform_2(%arg0: i32) -> (i32, i32) {
    %c0_i32 = arith.constant 0 : i32
    %c0_i32_0 = arith.constant 0 : i32
    %c0_i32_1 = arith.constant 0 : i32
    return %c0_i32, %c0_i32_0 : i32, i32
  }
  func.func @transform_3(%arg0: i32) -> (i32, i32) {
    %c0_i32 = arith.constant 0 : i32
    %c0_i32_0 = arith.constant 0 : i32
    %c0_i32_1 = arith.constant 0 : i32
    return %c0_i32, %c0_i32_0 : i32, i32
  }
  func.func @transform_4(%arg0: i32) -> (i32, i32) {
    %c0_i32 = arith.constant 0 : i32
    %c0_i32_0 = arith.constant 0 : i32
    %c0_i32_1 = arith.constant 0 : i32
    return %c0_i32, %c0_i32_0 : i32, i32
  }
  func.func @transform_5(%arg0: i32) -> (i32, i32) {
    %c0_i32 = arith.constant 0 : i32
    %c0_i32_0 = arith.constant 0 : i32
    %c0_i32_1 = arith.constant 0 : i32
    return %c0_i32, %c0_i32_0 : i32, i32
  }
  func.func @transform_6(%arg0: i32) -> (i32, i32, i32) {
    %c0_i32 = arith.constant 0 : i32
    %c0_i32_0 = arith.constant 0 : i32
    %c0_i32_1 = arith.constant 0 : i32
    %c0_i32_2 = arith.constant 0 : i32
    return %c0_i32, %c0_i32_0, %c0_i32_1 : i32, i32, i32
  }
  func.func @transform_7(%arg0: i32) -> (i32, i32) {
    %c0_i32 = arith.constant 0 : i32
    %c0_i32_0 = arith.constant 0 : i32
    %c0_i32_1 = arith.constant 0 : i32
    return %c0_i32, %c0_i32_0 : i32, i32
  }
  func.func @transform_8(%arg0: i32) -> (i32, i32) {
    %c0_i32 = arith.constant 0 : i32
    %c0_i32_0 = arith.constant 0 : i32
    %c0_i32_1 = arith.constant 0 : i32
    return %c0_i32, %c0_i32_0 : i32, i32
  }
  func.func @transform_9(%arg0: i32) -> (i32, i32, i32) {
    %c0_i32 = arith.constant 0 : i32
    %c0_i32_0 = arith.constant 0 : i32
    %c0_i32_1 = arith.constant 0 : i32
    return %arg0, %c0_i32, %c0_i32_0 : i32, i32, i32
  }
}

</mosaic_0001>

<llo_original>
// kernel: _lambda_.1
$region0: #{_lambda_.1}
  #allocation0 [shape = 'u32[]', space=smem, size = 0x4, offset = 0x4, fixed_abs, tag = 'smem constant byte address 0x4 - core index']
  #allocation1 [shape = 'u32[144,128]{1,0:T(1,128)}', space=vmem, size = 0x12000, scoped, tag = 'internal scratch']
  %s0 = inlined_call_operand.vmem [shape: f32[2,16,196], index: 0, kind: input, shape index: {}]
  %s1 = inlined_call_operand.vmem [shape: f32[64,16], index: 1, kind: input, shape index: {}]
  %s2 = inlined_call_operand.vmem [shape: f32[64,1], index: 2, kind: input, shape index: {}]
  %s3 = inlined_call_operand.vmem [shape: f32[16,25], index: 3, kind: input, shape index: {}]
  %s4 = inlined_call_operand.vmem [shape: f32[16,1], index: 4, kind: input, shape index: {}]
  %s5 = inlined_call_operand.vmem [shape: f32[5,196], index: 5, kind: input, shape index: {}]
  %s6 = inlined_call_operand.vmem [shape: f32[2,196,196], index: 6, kind: input, shape index: {}]
  %s7 = inlined_call_operand.vmem [shape: f32[16,32], index: 7, kind: input, shape index: {}]
  %s8 = inlined_call_operand.vmem [shape: f32[16,1], index: 8, kind: input, shape index: {}]
  %s9 = inlined_call_operand.vmem [shape: f32[2,16,196], index: 9, kind: output, shape index: {}]
  %s10 = sld [smem:[#allocation0]]
  $region69: #{_lambda_.1} parent=0
    _
  %s12 = ssub.s32 1, %s10
  %s13 = scalar_select 0, %s12, %s10
  loop: start=0, step=1, limit=4
  $region2: #{_lambda_.1} parent=0 // loop_pre_header
    _
  $region3: #{_lambda_.1} parent=0 // loop_header
    %s15 = sphi 0, %s19
    %p16 = scmp.ge.s32.totalorder %s15, 4
    %s25 = sphi 0, %s27
    %s28 = sphi 0, %s25
    %s29 = sphi 0, %s28
    %s45 = sphi 0, %s29
    %s49 = sphi 0, %s49
    %s51 = sphi 0, %s49
    %s52 = sphi 0, %s51
    %s66 = sphi 0, %s52
    %s70 = sphi 0, %s70
    %s72 = sphi 0, %s70
    %s73 = sphi 0, %s72
    %s87 = sphi 0, %s73
    %s91 = sphi 0, %s91
    %s93 = sphi 0, %s91
    %s94 = sphi 0, %s93
    %s108 = sphi 0, %s94
    %s112 = sphi 0, %s112
    %s114 = sphi 0, %s112
    %s115 = sphi 0, %s114
    %s129 = sphi 0, %s115
    %s133 = sphi 0, %s133
    %s135 = sphi 0, %s133
    %s136 = sphi 0, %s135
    %s150 = sphi 0, %s136
    %s154 = sphi 0, %s154
    %s156 = sphi 0, %s154
    %s157 = sphi 0, %s156
    %s171 = sphi 0, %s157
    %s175 = sphi 0, %s175
    %s177 = sphi 0, %s175
    %s178 = sphi 0, %s177
    %s192 = sphi 0, %s178
    %s196 = sphi 0, %s196
    %s198 = sphi 0, %s196
    %s199 = sphi 0, %s198
    %s213 = sphi 0, %s199
    %s219 = sphi 0, %s221
    %s222 = sphi 0, %s219
    %s223 = sphi 0, %s222
    %s239 = sphi 0, %s223
  $region4: #{_lambda_.1} parent=0 // loop_header_branch
    %18 = sbr.rel (%p16) target = $region8
  $region5: #{_lambda_.1} parent=0 // loop_body
    %s20 = ssub.s32 %s15, 1
    %s21 = ssub.s32 %s15, 2
    %s22 = sadd.s32 %s15, 1
    %s23 = ssub.s32 %s15, %s22
    %p24 = scmp.eq.s32.totalorder %s23, 0
    %s26 = sadd.s32 %s25, 1
    %s27 = scalar_select %p24, %s25, %s26
    %p30 = pneg %p24
    %p31 = scmp.eq.s32.totalorder %s15, 1
    %p32 = por %p30, %p31
    %p33 = scmp.ne.s32.totalorder %s25, %s28
    %p34 = scmp.eq.s32.totalorder %s15, 0
    %p35 = por %p33, %p34
    %p36 = scmp.ne.s32.totalorder %s25, %s28
    %p37 = scmp.eq.s32.totalorder %s20, 1
    %p38 = por %p36, %p37
    %p39 = scmp.ne.s32.totalorder %s28, %s29
    %p40 = scmp.eq.s32.totalorder %s20, 0
    %p41 = por %p39, %p40
    %p42 = scmp.ne.s32.totalorder %s28, %s29
    %p43 = scmp.eq.s32.totalorder %s21, 1
    %p44 = por %p42, %p43
    %p46 = scmp.ne.s32.totalorder %s29, %s45
    %p47 = scmp.eq.s32.totalorder %s21, 0
    %p48 = por %p46, %p47
    %s50 = sadd.s32 %s49, 1
    %p53 = scmp.eq.s32.totalorder %s15, 1
    %p54 = scmp.ne.s32.totalorder %s49, %s51
    %p55 = scmp.eq.s32.totalorder %s15, 0
    %p56 = por %p54, %p55
    %p57 = scmp.ne.s32.totalorder %s49, %s51
    %p58 = scmp.eq.s32.totalorder %s20, 1
    %p59 = por %p57, %p58
    %p60 = scmp.ne.s32.totalorder %s51, %s52
    %p61 = scmp.eq.s32.totalorder %s20, 0
    %p62 = por %p60, %p61
    %p63 = scmp.ne.s32.totalorder %s51, %s52
    %p64 = scmp.eq.s32.totalorder %s21, 1
    %p65 = por %p63, %p64
    %p67 = scmp.ne.s32.totalorder %s52, %s66
    %p68 = scmp.eq.s32.totalorder %s21, 0
    %p69 = por %p67, %p68
    %s71 = sadd.s32 %s70, 1
    %p74 = scmp.eq.s32.totalorder %s15, 1
    %p75 = scmp.ne.s32.totalorder %s70, %s72
    %p76 = scmp.eq.s32.totalorder %s15, 0
    %p77 = por %p75, %p76
    %p78 = scmp.ne.s32.totalorder %s70, %s72
    %p79 = scmp.eq.s32.totalorder %s20, 1
    %p80 = por %p78, %p79
    %p81 = scmp.ne.s32.totalorder %s72, %s73
    %p82 = scmp.eq.s32.totalorder %s20, 0
    %p83 = por %p81, %p82
    %p84 = scmp.ne.s32.totalorder %s72, %s73
    %p85 = scmp.eq.s32.totalorder %s21, 1
    %p86 = por %p84, %p85
    %p88 = scmp.ne.s32.totalorder %s73, %s87
    %p89 = scmp.eq.s32.totalorder %s21, 0
    %p90 = por %p88, %p89
    %s92 = sadd.s32 %s91, 1
    %p95 = scmp.eq.s32.totalorder %s15, 1
    %p96 = scmp.ne.s32.totalorder %s91, %s93
    %p97 = scmp.eq.s32.totalorder %s15, 0
    %p98 = por %p96, %p97
    %p99 = scmp.ne.s32.totalorder %s91, %s93
    %p100 = scmp.eq.s32.totalorder %s20, 1
    %p101 = por %p99, %p100
    %p102 = scmp.ne.s32.totalorder %s93, %s94
    %p103 = scmp.eq.s32.totalorder %s20, 0
    %p104 = por %p102, %p103
    %p105 = scmp.ne.s32.totalorder %s93, %s94
    %p106 = scmp.eq.s32.totalorder %s21, 1
    %p107 = por %p105, %p106
    %p109 = scmp.ne.s32.totalorder %s94, %s108
    %p110 = scmp.eq.s32.totalorder %s21, 0
    %p111 = por %p109, %p110
    %s113 = sadd.s32 %s112, 1
    %p116 = scmp.eq.s32.totalorder %s15, 1
    %p117 = scmp.ne.s32.totalorder %s112, %s114
    %p118 = scmp.eq.s32.totalorder %s15, 0
    %p119 = por %p117, %p118
    %p120 = scmp.ne.s32.totalorder %s112, %s114
    %p121 = scmp.eq.s32.totalorder %s20, 1
    %p122 = por %p120, %p121
    %p123 = scmp.ne.s32.totalorder %s114, %s115
    %p124 = scmp.eq.s32.totalorder %s20, 0
    %p125 = por %p123, %p124
    %p126 = scmp.ne.s32.totalorder %s114, %s115
    %p127 = scmp.eq.s32.totalorder %s21, 1
    %p128 = por %p126, %p127
    %p130 = scmp.ne.s32.totalorder %s115, %s129
    %p131 = scmp.eq.s32.totalorder %s21, 0
    %p132 = por %p130, %p131
    %s134 = sadd.s32 %s133, 1
    %p137 = scmp.eq.s32.totalorder %s15, 1
    %p138 = scmp.ne.s32.totalorder %s133, %s135
    %p139 = scmp.eq.s32.totalorder %s15, 0
    %p140 = por %p138, %p139
    %p141 = scmp.ne.s32.totalorder %s133, %s135
    %p142 = scmp.eq.s32.totalorder %s20, 1
    %p143 = por %p141, %p142
    %p144 = scmp.ne.s32.totalorder %s135, %s136
    %p145 = scmp.eq.s32.totalorder %s20, 0
    %p146 = por %p144, %p145
    %p147 = scmp.ne.s32.totalorder %s135, %s136
    %p148 = scmp.eq.s32.totalorder %s21, 1
    %p149 = por %p147, %p148
    %p151 = scmp.ne.s32.totalorder %s136, %s150
    %p152 = scmp.eq.s32.totalorder %s21, 0
    %p153 = por %p151, %p152
    %s155 = sadd.s32 %s154, 1
    %p158 = scmp.eq.s32.totalorder %s15, 1
    %p159 = scmp.ne.s32.totalorder %s154, %s156
    %p160 = scmp.eq.s32.totalorder %s15, 0
    %p161 = por %p159, %p160
    %p162 = scmp.ne.s32.totalorder %s154, %s156
    %p163 = scmp.eq.s32.totalorder %s20, 1
    %p164 = por %p162, %p163
    %p165 = scmp.ne.s32.totalorder %s156, %s157
    %p166 = scmp.eq.s32.totalorder %s20, 0
    %p167 = por %p165, %p166
    %p168 = scmp.ne.s32.totalorder %s156, %s157
    %p169 = scmp.eq.s32.totalorder %s21, 1
    %p170 = por %p168, %p169
    %p172 = scmp.ne.s32.totalorder %s157, %s171
    %p173 = scmp.eq.s32.totalorder %s21, 0
    %p174 = por %p172, %p173
    %s176 = sadd.s32 %s175, 1
    %p179 = scmp.eq.s32.totalorder %s15, 1
    %p180 = scmp.ne.s32.totalorder %s175, %s177
    %p181 = scmp.eq.s32.totalorder %s15, 0
    %p182 = por %p180, %p181
    %p183 = scmp.ne.s32.totalorder %s175, %s177
    %p184 = scmp.eq.s32.totalorder %s20, 1
    %p185 = por %p183, %p184
    %p186 = scmp.ne.s32.totalorder %s177, %s178
    %p187 = scmp.eq.s32.totalorder %s20, 0
    %p188 = por %p186, %p187
    %p189 = scmp.ne.s32.totalorder %s177, %s178
    %p190 = scmp.eq.s32.totalorder %s21, 1
    %p191 = por %p189, %p190
    %p193 = scmp.ne.s32.totalorder %s178, %s192
    %p194 = scmp.eq.s32.totalorder %s21, 0
    %p195 = por %p193, %p194
    %s197 = sadd.s32 %s196, 1
    %p200 = scmp.eq.s32.totalorder %s15, 1
    %p201 = scmp.ne.s32.totalorder %s196, %s198
    %p202 = scmp.eq.s32.totalorder %s15, 0
    %p203 = por %p201, %p202
    %p204 = scmp.ne.s32.totalorder %s196, %s198
    %p205 = scmp.eq.s32.totalorder %s20, 1
    %p206 = por %p204, %p205
    %p207 = scmp.ne.s32.totalorder %s198, %s199
    %p208 = scmp.eq.s32.totalorder %s20, 0
    %p209 = por %p207, %p208
    %p210 = scmp.ne.s32.totalorder %s198, %s199
    %p211 = scmp.eq.s32.totalorder %s21, 1
    %p212 = por %p210, %p211
    %p214 = scmp.ne.s32.totalorder %s199, %s213
    %p215 = scmp.eq.s32.totalorder %s21, 0
    %p216 = por %p214, %p215
    %s217 = ssub.s32 %s15, %s22
    %p218 = scmp.eq.s32.totalorder %s217, 0
    %s220 = sadd.s32 %s219, 1
    %s221 = scalar_select %p218, %s219, %s220
    %p224 = pneg %p218
    %p225 = scmp.eq.s32.totalorder %s15, 1
    %p226 = por %p224, %p225
    %p227 = scmp.ne.s32.totalorder %s219, %s222
    %p228 = scmp.eq.s32.totalorder %s15, 0
    %p229 = por %p227, %p228
    %p230 = scmp.ne.s32.totalorder %s219, %s222
    %p231 = scmp.eq.s32.totalorder %s20, 1
    %p232 = por %p230, %p231
    %p233 = scmp.ne.s32.totalorder %s222, %s223
    %p234 = scmp.eq.s32.totalorder %s20, 0
    %p235 = por %p233, %p234
    %p236 = scmp.ne.s32.totalorder %s222, %s223
    %p237 = scmp.eq.s32.totalorder %s21, 1
    %p238 = por %p236, %p237
    %p240 = scmp.ne.s32.totalorder %s223, %s239
    %p241 = scmp.eq.s32.totalorder %s21, 0
    %p242 = por %p240, %p241
    %p243 = scmp.le.s32.totalorder 1, %s15
    %p244 = scmp.lt.s32.totalorder %s15, 3
    %p245 = pnand %p243, %p244
    %p246 = pneg %p245
    // Predicated region
    $region9: #{_lambda_.1} parent=5 // pred_check
      _
    $region10: #{_lambda_.1} parent=5 // pred_check_branch
      %248 = sbr.rel (%p245) target = $region12
    $region11: #{_lambda_.1} parent=5 // pred_region
      %s249 = ssub.s32 %s15, 1
      // Predicated region
      $region13: #{_lambda_.1} parent=11 // pred_check
        %p250 = pneg %p62
      $region14: #{_lambda_.1} parent=11 // pred_check_branch
        %252 = sbr.rel (%p250) target = $region16
      $region15: #{_lambda_.1} parent=11 // pred_region
        _
      $region16: #{_lambda_.1} parent=11 // pred_fallthru
        _
      // Predicated region
      $region17: #{_lambda_.1} parent=11 // pred_check
        %p253 = pneg %p83
      $region18: #{_lambda_.1} parent=11 // pred_check_branch
        %255 = sbr.rel (%p253) target = $region20
      $region19: #{_lambda_.1} parent=11 // pred_region
        _
      $region20: #{_lambda_.1} parent=11 // pred_fallthru
        _
      // Predicated region
      $region21: #{_lambda_.1} parent=11 // pred_check
        %p256 = pneg %p104
      $region22: #{_lambda_.1} parent=11 // pred_check_branch
        %258 = sbr.rel (%p256) target = $region24
      $region23: #{_lambda_.1} parent=11 // pred_region
        _
      $region24: #{_lambda_.1} parent=11 // pred_fallthru
        _
      // Predicated region
      $region25: #{_lambda_.1} parent=11 // pred_check
        %p259 = pneg %p125
      $region26: #{_lambda_.1} parent=11 // pred_check_branch
        %261 = sbr.rel (%p259) target = $region28
      $region27: #{_lambda_.1} parent=11 // pred_region
        _
      $region28: #{_lambda_.1} parent=11 // pred_fallthru
        _
      // Predicated region
      $region29: #{_lambda_.1} parent=11 // pred_check
        %p262 = pneg %p146
      $region30: #{_lambda_.1} parent=11 // pred_check_branch
        %264 = sbr.rel (%p262) target = $region32
      $region31: #{_lambda_.1} parent=11 // pred_region
        _
      $region32: #{_lambda_.1} parent=11 // pred_fallthru
        _
      // Predicated region
      $region33: #{_lambda_.1} parent=11 // pred_check
        %p265 = pneg %p167
      $region34: #{_lambda_.1} parent=11 // pred_check_branch
        %267 = sbr.rel (%p265) target = $region36
      $region35: #{_lambda_.1} parent=11 // pred_region
        _
      $region36: #{_lambda_.1} parent=11 // pred_fallthru
        _
      // Predicated region
      $region37: #{_lambda_.1} parent=11 // pred_check
        %p268 = pneg %p188
      $region38: #{_lambda_.1} parent=11 // pred_check_branch
        %270 = sbr.rel (%p268) target = $region40
      $region39: #{_lambda_.1} parent=11 // pred_region
        _
      $region40: #{_lambda_.1} parent=11 // pred_fallthru
        _
      // Predicated region
      $region41: #{_lambda_.1} parent=11 // pred_check
        %p271 = pneg %p209
      $region42: #{_lambda_.1} parent=11 // pred_check_branch
        %273 = sbr.rel (%p271) target = $region44
      $region43: #{_lambda_.1} parent=11 // pred_region
        _
      $region44: #{_lambda_.1} parent=11 // pred_fallthru
        _
    $region12: #{_lambda_.1} parent=5 // pred_fallthru
      _
    %p274 = scmp.lt.s32.totalorder %s15, 2
    // Predicated region
    $region45: #{_lambda_.1} parent=5 // pred_check
      %p275 = pneg %p274
    $region46: #{_lambda_.1} parent=5 // pred_check_branch
      %277 = sbr.rel (%p275) target = $region48
    $region47: #{_lambda_.1} parent=5 // pred_region
      // Predicated region
      $region49: #{_lambda_.1} parent=47 // pred_check
        %p278 = pneg %p35
      $region50: #{_lambda_.1} parent=47 // pred_check_branch
        %280 = sbr.rel (%p278) target = $region52
      $region51: #{_lambda_.1} parent=47 // pred_region
        %p281 = scmp.lt.s32.totalorder %s15, 1
        %s282 = scalar_select %p281, %s15, 1
        %s283 = smul.addr %s282, 4
        %s284 = smul.addr %s283, 8
        %s285 = scalar_lea.vmem %s0, %s284
      $region52: #{_lambda_.1} parent=47 // pred_fallthru
        _
    $region48: #{_lambda_.1} parent=5 // pred_fallthru
      _
    %p286 = scmp.le.s32.totalorder 1, %s15
    %p287 = scmp.lt.s32.totalorder %s15, 3
    %p288 = pnand %p286, %p287
    %p289 = pneg %p288
    // Predicated region
    $region53: #{_lambda_.1} parent=5 // pred_check
      _
    $region54: #{_lambda_.1} parent=5 // pred_check_branch
      %291 = sbr.rel (%p288) target = $region56
    $region55: #{_lambda_.1} parent=5 // pred_region
      %s292 = ssub.s32 %s15, 1
      %p293 = scmp.lt.s32.totalorder %s20, 1
      %s294 = scalar_select %p293, %s20, 1
      %s295 = smul.addr %s294, 4
      %s296 = smul.addr %s295, 8
      %s297 = scalar_lea.vmem %s0, %s296
      %p298 = pneg %p41
      %p299 = pneg %p38
      %p300 = pneg %p62
      %p301 = pneg %p59
      %p302 = pneg %p83
      %p303 = pneg %p80
      %p304 = pneg %p104
      %p305 = pneg %p101
      %p306 = pneg %p125
      %p307 = pneg %p122
      %p308 = pneg %p146
      %p309 = pneg %p143
      %p310 = pneg %p167
      %p311 = pneg %p164
      %p312 = pneg %p188
      %p313 = pneg %p185
      %p314 = pneg %p209
      %p315 = pneg %p206
      %p316 = pneg %p235
      %p317 = pneg %p232
      %p318 = scmp.lt.s32.totalorder %s20, 1
      %s319 = scalar_select %p318, %s20, 1
      %s320 = smul.addr %s319, 4
      %s321 = smul.addr %s320, 8
      %s322 = scalar_lea.vmem %s9, %s321
      %p323 = scmp.lt.s32.totalorder %s20, 1
      %s324 = scalar_select %p323, %s20, 1
      %s325 = smul.addr %s324, 4
      %s326 = smul.addr %s325, 8
      %s327 = scalar_lea.vmem %s0, %s326
      %p328 = scmp.lt.s32.totalorder %s20, 1
      %s329 = scalar_select %p328, %s20, 1
      %s330 = smul.addr %s329, 4
      %s331 = smul.addr %s330, 8
      %s332 = scalar_lea.vmem %s9, %s331
      %v334 = vld [vmem:[%s327] sm:$0xff]
      %v335 = vld [vmem:[%s327 + $0x8] sm:$0xff]
      %v336 = vld [vmem:[%s327 + $0x10] sm:$0xff]
      %v337 = vld [vmem:[%s327 + $0x18] sm:$0xff]
      %v338 = vld [vmem:[%s1] sm:$0xff]
      %v339 = vld [vmem:[%s1 + $0x8] sm:$0xff]
      %v340 = vld [vmem:[%s1 + $0x10] sm:$0xff]
      %v341 = vld [vmem:[%s1 + $0x18] sm:$0xff]
      %v342 = vld [vmem:[%s1 + $0x20] sm:$0xff]
      %v343 = vld [vmem:[%s1 + $0x28] sm:$0xff]
      %v344 = vld [vmem:[%s1 + $0x30] sm:$0xff]
      %v345 = vld [vmem:[%s1 + $0x38] sm:$0xff]
      %v346 = vpack.c.bf16 %v339, %v338
      %v347 = vpack.c.bf16 %v341, %v340
      %v348 = vpack.c.bf16 %v343, %v342
      %v349 = vpack.c.bf16 %v345, %v344
      %v350 = vpack.c.bf16 %v336, %v334
      %v351 = vpack.c.bf16 %v337, %v335
      %v352 = vld [vmem:[%s2] sm:$0xff]
      %v353 = vld [vmem:[%s2 + $0x8] sm:$0xff]
      %v354 = vld [vmem:[%s2 + $0x10] sm:$0xff]
      %v355 = vld [vmem:[%s2 + $0x18] sm:$0xff]
      %v356 = vld [vmem:[%s2 + $0x20] sm:$0xff]
      %v357 = vld [vmem:[%s2 + $0x28] sm:$0xff]
      %v358 = vld [vmem:[%s2 + $0x30] sm:$0xff]
      %v359 = vld [vmem:[%s2 + $0x38] sm:$0xff]
      %361 = vset.pattern.permute.xlu0 0
      %362 = vperm.xlu0 %361, %v352
      %v363 = vpop.permute.xlu0 %362
      %366 = vset.pattern.permute.xlu0 0
      %367 = vperm.xlu0 %366, %v353
      %v368 = vpop.permute.xlu0 %367
      %371 = vset.pattern.permute.xlu0 0
      %372 = vperm.xlu0 %371, %v354
      %v373 = vpop.permute.xlu0 %372
      %376 = vset.pattern.permute.xlu0 0
      %377 = vperm.xlu0 %376, %v355
      %v378 = vpop.permute.xlu0 %377
      %381 = vset.pattern.permute.xlu0 0
      %382 = vperm.xlu0 %381, %v356
      %v383 = vpop.permute.xlu0 %382
      %386 = vset.pattern.permute.xlu0 0
      %387 = vperm.xlu0 %386, %v357
      %v388 = vpop.permute.xlu0 %387
      %391 = vset.pattern.permute.xlu0 0
      %392 = vperm.xlu0 %391, %v358
      %v393 = vpop.permute.xlu0 %392
      %396 = vset.pattern.permute.xlu0 0
      %397 = vperm.xlu0 %396, %v359
      %v398 = vpop.permute.xlu0 %397
      %vm400 = vcmask 130048
      %v402 = vsel %vm400, %v346, 0
      %v405 = vsel %vm400, %v347, 0
      %v408 = vsel %vm400, %v348, 0
      %v411 = vsel %vm400, %v349, 0
      %413 = vmatprep.subr.bf16.mxu0 %v351
      %414 = vmatpush1.bf16.msra.mxu0 %v350
      %415 = vmatprep.subr.bf16.mxu0 0
      %416 = vmatpush1.bf16.msra.mxu0 0
      %417 = vmatprep.subr.bf16.mxu0 0
      %418 = vmatpush1.bf16.msra.mxu0 0
      %419 = vmatprep.subr.bf16.mxu0 0
      %420 = vmatpush1.bf16.msra.mxu0 0
      %421 = vmatprep.subr.bf16.mxu0 0
      %422 = vmatpush1.bf16.msra.mxu0 0
      %423 = vmatprep.subr.bf16.mxu0 0
      %424 = vmatpush1.bf16.msra.mxu0 0
      %425 = vmatprep.subr.bf16.mxu0 0
      %426 = vmatpush1.bf16.msra.mxu0 0
      %427 = vmatprep.subr.bf16.mxu0 0
      %428 = vmatpush1.bf16.msra.mxu0 0
      %429 = vmatprep.subr.bf16.mxu0 0
      %430 = vmatpush1.bf16.msra.mxu0 0
      %431 = vmatprep.subr.bf16.mxu0 0
      %432 = vmatpush1.bf16.msra.mxu0 0
      %433 = vmatprep.subr.bf16.mxu0 0
      %434 = vmatpush1.bf16.msra.mxu0 0
      %435 = vmatprep.subr.bf16.mxu0 0
      %436 = vmatpush1.bf16.msra.mxu0 0
      %437 = vmatprep.subr.bf16.mxu0 0
      %438 = vmatpush1.bf16.msra.mxu0 0
      %439 = vmatprep.subr.bf16.mxu0 0
      %440 = vmatpush1.bf16.msra.mxu0 0
      %441 = vmatprep.subr.bf16.mxu0 0
      %442 = vmatpush1.bf16.msra.mxu0 0
      %443 = vmatprep.subr.bf16.mxu0 0
      %444 = vmatpush1.bf16.msra.mxu0 0
      %445 = vmatprep.mubr.bf16.mxu0 0
      %446 = vmatmul.mubr.bf16.gmra.mrb[0].mxu0 %v402
      %v447 = vpop.f32.mrb[0].mxu0
      %v448 = vadd.f32 %v363, %v447
      %v449 = vpop.f32.mrb[0].mxu0
      %v450 = vadd.f32 %v363, %v449
      %v451 = vpop.f32.mrb[0].mxu0
      %v452 = vadd.f32 %v368, %v451
      %v453 = vpop.f32.mrb[0].mxu0
      %v454 = vadd.f32 %v368, %v453
      %455 = vmatprep.mubr.bf16.mxu0 0
      %456 = vmatmul.mubr.bf16.gmra.mrb[0].mxu0 %v405
      %v457 = vpop.f32.mrb[0].mxu0
      %v458 = vadd.f32 %v373, %v457
      %v459 = vpop.f32.mrb[0].mxu0
      %v460 = vadd.f32 %v373, %v459
      %v461 = vpop.f32.mrb[0].mxu0
      %v462 = vadd.f32 %v378, %v461
      %v463 = vpop.f32.mrb[0].mxu0
      %v464 = vadd.f32 %v378, %v463
      %465 = vmatprep.mubr.bf16.mxu0 0
      %466 = vmatmul.mubr.bf16.gmra.mrb[0].mxu0 %v408
      %v467 = vpop.f32.mrb[0].mxu0
      %v468 = vadd.f32 %v383, %v467
      %v469 = vpop.f32.mrb[0].mxu0
      %v470 = vadd.f32 %v383, %v469
      %v471 = vpop.f32.mrb[0].mxu0
      %v472 = vadd.f32 %v388, %v471
      %v473 = vpop.f32.mrb[0].mxu0
      %v474 = vadd.f32 %v388, %v473
      %475 = vmatprep.mubr.bf16.mxu0 0
      %476 = vmatmul.mubr.bf16.gmra.mrb[0].mxu0 %v411
      %v477 = vpop.f32.mrb[0].mxu0
      %v478 = vadd.f32 %v393, %v477
      %v479 = vpop.f32.mrb[0].mxu0
      %v480 = vadd.f32 %v393, %v479
      %v481 = vpop.f32.mrb[0].mxu0
      %v482 = vadd.f32 %v398, %v481
      %v483 = vpop.f32.mrb[0].mxu0
      %v484 = vadd.f32 %v398, %v483
      %485 = vdwg.mxu0
      %490 = vrot.lane.b32.xlu0 %v448, 30
      %v491 = vpop.permute.xlu0 %490
      %492 = vrot.lane.b32.xlu0 %v450, 30
      %v493 = vpop.permute.xlu0 %492
      %494 = vrot.lane.b32.xlu0 %v452, 30
      %v495 = vpop.permute.xlu0 %494
      %496 = vrot.lane.b32.xlu0 %v454, 30
      %v497 = vpop.permute.xlu0 %496
      %vm498 = vcmask 244736
      %v499 = vsel %vm498, %v491, %v493
      %v500 = vsel %vm498, %v495, %v497
      %v505 = vsel %vm498, 0.0, %v491
      %v506 = vsel %vm498, 0.0, %v495
      %vm507 = vcmask 801792
      %v508 = vsel %vm507, %v499, 0.0
      %v509 = vsel %vm507, %v500, 0.0
      %v510 = vld [vmem:[%s3] sm:$0xff]
      %v511 = vld [vmem:[%s3 + $0x8] sm:$0xff]
      %v512 = vld [vmem:[%s5] sm:$0x1f]
      %v513 = vld [vmem:[%s5 + $0x8] sm:$0x1f]
      %v514 = vlaneseq
      %v515 = vshrl.u32 %v514, 7
      %v516 = vsub.s32 0, %v515
      %v517 = vrot.slane %v512, %v516
      %v518 = vlaneseq
      %v519 = vshrl.u32 %v518, 7
      %v520 = vsub.s32 0, %v519
      %v521 = vrot.slane %v513, %v520
      %v522 = vmul.f32 %v505, %v517
      %v523 = vmul.f32 %v508, %v521
      %v524 = vmul.f32 %v506, %v517
      %v525 = vmul.f32 %v509, %v521
      %527 = vset.pattern.permute.xlu0 0
      %528 = vperm.xlu0 %527, %v510
      %v529 = vpop.permute.xlu0 %528
      %532 = vset.pattern.permute.xlu0 0
      %533 = vperm.xlu0 %532, %v511
      %v534 = vpop.permute.xlu0 %533
      %v536 = vmul.f32 %v529, %v522
      %v537 = vmul.f32 %v529, %v523
      %v538 = vmul.f32 %v534, %v524
      %v539 = vmul.f32 %v534, %v525
      %v540 = vadd.f32 %v536, 0.0
      %v541 = vadd.f32 %v537, 0.0
      %v542 = vadd.f32 %v538, 0.0
      %v543 = vadd.f32 %v539, 0.0
      %v544 = vlaneseq
      %v545 = vshrl.u32 %v544, 7
      %v546 = vsub.s32 1, %v545
      %v547 = vrot.slane %v512, %v546
      %v548 = vlaneseq
      %v549 = vshrl.u32 %v548, 7
      %v550 = vsub.s32 1, %v549
      %v551 = vrot.slane %v513, %v550
      %554 = vrot.lane.b32.xlu0 %v547, 1
      %v555 = vpop.permute.xlu0 %554
      %556 = vrot.lane.b32.xlu0 %v551, 1
      %v557 = vpop.permute.xlu0 %556
      %vm558 = vcmask 7168
      %v559 = vsel %vm558, %v555, %v557
      %v562 = vmul.f32 %v505, %v555
      %v563 = vmul.f32 %v508, %v559
      %v564 = vmul.f32 %v506, %v555
      %v565 = vmul.f32 %v509, %v559
      %566 = vset.pattern.permute.xlu0 1
      %567 = vperm.xlu0 %566, %v510
      %v568 = vpop.permute.xlu0 %567
      %570 = vset.pattern.permute.xlu0 1
      %571 = vperm.xlu0 %570, %v511
      %v572 = vpop.permute.xlu0 %571
      %v574 = vmul.f32 %v568, %v562
      %v575 = vmul.f32 %v568, %v563
      %v576 = vmul.f32 %v572, %v564
      %v577 = vmul.f32 %v572, %v565
      %582 = vrot.lane.b32.xlu0 %v574, 127
      %v583 = vpop.permute.xlu0 %582
      %584 = vrot.lane.b32.xlu0 %v575, 127
      %v585 = vpop.permute.xlu0 %584
      %586 = vrot.lane.b32.xlu0 %v576, 127
      %v587 = vpop.permute.xlu0 %586
      %588 = vrot.lane.b32.xlu0 %v577, 127
      %v589 = vpop.permute.xlu0 %588
      %vm590 = vcmask 1039360
      %v591 = vsel %vm590, %v583, %v585
      %v592 = vsel %vm590, %v587, %v589
      %v597 = vadd.f32 %v540, %v591
      %v598 = vadd.f32 %v541, %v585
      %v599 = vadd.f32 %v542, %v592
      %v600 = vadd.f32 %v543, %v589
      %v601 = vlaneseq
      %v602 = vshrl.u32 %v601, 7
      %v603 = vsub.s32 2, %v602
      %v604 = vrot.slane %v512, %v603
      %v605 = vlaneseq
      %v606 = vshrl.u32 %v605, 7
      %v607 = vsub.s32 2, %v606
      %v608 = vrot.slane %v513, %v607
      %611 = vrot.lane.b32.xlu0 %v604, 2
      %v612 = vpop.permute.xlu0 %611
      %613 = vrot.lane.b32.xlu0 %v608, 2
      %v614 = vpop.permute.xlu0 %613
      %vm615 = vcmask 15360
      %v616 = vsel %vm615, %v612, %v614
      %v619 = vmul.f32 %v505, %v612
      %v620 = vmul.f32 %v508, %v616
      %v621 = vmul.f32 %v506, %v612
      %v622 = vmul.f32 %v509, %v616
      %623 = vset.pattern.permute.xlu0 2
      %624 = vperm.xlu0 %623, %v510
      %v625 = vpop.permute.xlu0 %624
      %627 = vset.pattern.permute.xlu0 2
      %628 = vperm.xlu0 %627, %v511
      %v629 = vpop.permute.xlu0 %628
      %v631 = vmul.f32 %v625, %v619
      %v632 = vmul.f32 %v625, %v620
      %v633 = vmul.f32 %v629, %v621
      %v634 = vmul.f32 %v629, %v622
      %639 = vrot.lane.b32.xlu0 %v631, 126
      %v640 = vpop.permute.xlu0 %639
      %641 = vrot.lane.b32.xlu0 %v632, 126
      %v642 = vpop.permute.xlu0 %641
      %643 = vrot.lane.b32.xlu0 %v633, 126
      %v644 = vpop.permute.xlu0 %643
      %645 = vrot.lane.b32.xlu0 %v634, 126
      %v646 = vpop.permute.xlu0 %645
      %vm647 = vcmask 1031168
      %v648 = vsel %vm647, %v640, %v642
      %v649 = vsel %vm647, %v644, %v646
      %v654 = vadd.f32 %v597, %v648
      %v655 = vadd.f32 %v598, %v642
      %v656 = vadd.f32 %v599, %v649
      %v657 = vadd.f32 %v600, %v646
      %v658 = vlaneseq
      %v659 = vshrl.u32 %v658, 7
      %v660 = vsub.s32 3, %v659
      %v661 = vrot.slane %v512, %v660
      %v662 = vlaneseq
      %v663 = vshrl.u32 %v662, 7
      %v664 = vsub.s32 3, %v663
      %v665 = vrot.slane %v513, %v664
      %668 = vrot.lane.b32.xlu0 %v661, 3
      %v669 = vpop.permute.xlu0 %668
      %670 = vrot.lane.b32.xlu0 %v665, 3
      %v671 = vpop.permute.xlu0 %670
      %vm672 = vcmask 23552
      %v673 = vsel %vm672, %v669, %v671
      %v676 = vmul.f32 %v505, %v669
      %v677 = vmul.f32 %v508, %v673
      %v678 = vmul.f32 %v506, %v669
      %v679 = vmul.f32 %v509, %v673
      %680 = vset.pattern.permute.xlu0 3
      %681 = vperm.xlu0 %680, %v510
      %v682 = vpop.permute.xlu0 %681
      %684 = vset.pattern.permute.xlu0 3
      %685 = vperm.xlu0 %684, %v511
      %v686 = vpop.permute.xlu0 %685
      %v688 = vmul.f32 %v682, %v676
      %v689 = vmul.f32 %v682, %v677
      %v690 = vmul.f32 %v686, %v678
      %v691 = vmul.f32 %v686, %v679
      %696 = vrot.lane.b32.xlu0 %v688, 125
      %v697 = vpop.permute.xlu0 %696
      %698 = vrot.lane.b32.xlu0 %v689, 125
      %v699 = vpop.permute.xlu0 %698
      %700 = vrot.lane.b32.xlu0 %v690, 125
      %v701 = vpop.permute.xlu0 %700
      %702 = vrot.lane.b32.xlu0 %v691, 125
      %v703 = vpop.permute.xlu0 %702
      %vm704 = vcmask 1022976
      %v705 = vsel %vm704, %v697, %v699
      %v706 = vsel %vm704, %v701, %v703
      %v711 = vadd.f32 %v654, %v705
      %v712 = vadd.f32 %v655, %v699
      %v713 = vadd.f32 %v656, %v706
      %v714 = vadd.f32 %v657, %v703
      %v715 = vlaneseq
      %v716 = vshrl.u32 %v715, 7
      %v717 = vsub.s32 4, %v716
      %v718 = vrot.slane %v512, %v717
      %v719 = vlaneseq
      %v720 = vshrl.u32 %v719, 7
      %v721 = vsub.s32 4, %v720
      %v722 = vrot.slane %v513, %v721
      %725 = vrot.lane.b32.xlu0 %v718, 4
      %v726 = vpop.permute.xlu0 %725
      %727 = vrot.lane.b32.xlu0 %v722, 4
      %v728 = vpop.permute.xlu0 %727
      %vm729 = vcmask 31744
      %v730 = vsel %vm729, %v726, %v728
      %v733 = vmul.f32 %v505, %v726
      %v734 = vmul.f32 %v508, %v730
      %v735 = vmul.f32 %v506, %v726
      %v736 = vmul.f32 %v509, %v730
      %737 = vset.pattern.permute.xlu0 4
      %738 = vperm.xlu0 %737, %v510
      %v739 = vpop.permute.xlu0 %738
      %741 = vset.pattern.permute.xlu0 4
      %742 = vperm.xlu0 %741, %v511
      %v743 = vpop.permute.xlu0 %742
      %v745 = vmul.f32 %v739, %v733
      %v746 = vmul.f32 %v739, %v734
      %v747 = vmul.f32 %v743, %v735
      %v748 = vmul.f32 %v743, %v736
      %753 = vrot.lane.b32.xlu0 %v745, 124
      %v754 = vpop.permute.xlu0 %753
      %755 = vrot.lane.b32.xlu0 %v746, 124
      %v756 = vpop.permute.xlu0 %755
      %757 = vrot.lane.b32.xlu0 %v747, 124
      %v758 = vpop.permute.xlu0 %757
      %759 = vrot.lane.b32.xlu0 %v748, 124
      %v760 = vpop.permute.xlu0 %759
      %vm761 = vcmask 1014784
      %v762 = vsel %vm761, %v754, %v756
      %v763 = vsel %vm761, %v758, %v760
      %v768 = vadd.f32 %v711, %v762
      %v769 = vadd.f32 %v712, %v756
      %v770 = vadd.f32 %v713, %v763
      %v771 = vadd.f32 %v714, %v760
      %774 = vrot.lane.b32.xlu0 %v517, 14
      %v775 = vpop.permute.xlu0 %774
      %776 = vrot.lane.b32.xlu0 %v521, 14
      %v777 = vpop.permute.xlu0 %776
      %vm778 = vcmask 113664
      %v779 = vsel %vm778, %v775, %v777
      %v782 = vmul.f32 %v505, %v775
      %v783 = vmul.f32 %v508, %v779
      %v784 = vmul.f32 %v506, %v775
      %v785 = vmul.f32 %v509, %v779
      %786 = vset.pattern.permute.xlu0 5
      %787 = vperm.xlu0 %786, %v510
      %v788 = vpop.permute.xlu0 %787
      %790 = vset.pattern.permute.xlu0 5
      %791 = vperm.xlu0 %790, %v511
      %v792 = vpop.permute.xlu0 %791
      %v794 = vmul.f32 %v788, %v782
      %v795 = vmul.f32 %v788, %v783
      %v796 = vmul.f32 %v792, %v784
      %v797 = vmul.f32 %v792, %v785
      %802 = vrot.lane.b32.xlu0 %v794, 114
      %v803 = vpop.permute.xlu0 %802
      %804 = vrot.lane.b32.xlu0 %v795, 114
      %v805 = vpop.permute.xlu0 %804
      %806 = vrot.lane.b32.xlu0 %v796, 114
      %v807 = vpop.permute.xlu0 %806
      %808 = vrot.lane.b32.xlu0 %v797, 114
      %v809 = vpop.permute.xlu0 %808
      %vm810 = vcmask 932864
      %v811 = vsel %vm810, %v803, %v805
      %v812 = vsel %vm810, %v807, %v809
      %v817 = vadd.f32 %v768, %v811
      %v818 = vadd.f32 %v769, %v805
      %v819 = vadd.f32 %v770, %v812
      %v820 = vadd.f32 %v771, %v809
      %821 = vrot.lane.b32.xlu0 %v547, 15
      %v822 = vpop.permute.xlu0 %821
      %823 = vrot.lane.b32.xlu0 %v551, 15
      %v824 = vpop.permute.xlu0 %823
      %vm825 = vcmask 121856
      %v826 = vsel %vm825, %v822, %v824
      %v829 = vmul.f32 %v505, %v822
      %v830 = vmul.f32 %v508, %v826
      %v831 = vmul.f32 %v506, %v822
      %v832 = vmul.f32 %v509, %v826
      %833 = vset.pattern.permute.xlu0 6
      %834 = vperm.xlu0 %833, %v510
      %v835 = vpop.permute.xlu0 %834
      %837 = vset.pattern.permute.xlu0 6
      %838 = vperm.xlu0 %837, %v511
      %v839 = vpop.permute.xlu0 %838
      %v841 = vmul.f32 %v835, %v829
      %v842 = vmul.f32 %v835, %v830
      %v843 = vmul.f32 %v839, %v831
      %v844 = vmul.f32 %v839, %v832
      %849 = vrot.lane.b32.xlu0 %v841, 113
      %v850 = vpop.permute.xlu0 %849
      %851 = vrot.lane.b32.xlu0 %v842, 113
      %v852 = vpop.permute.xlu0 %851
      %853 = vrot.lane.b32.xlu0 %v843, 113
      %v854 = vpop.permute.xlu0 %853
      %855 = vrot.lane.b32.xlu0 %v844, 113
      %v856 = vpop.permute.xlu0 %855
      %vm857 = vcmask 924672
      %v858 = vsel %vm857, %v850, %v852
      %v859 = vsel %vm857, %v854, %v856
      %v864 = vadd.f32 %v817, %v858
      %v865 = vadd.f32 %v818, %v852
      %v866 = vadd.f32 %v819, %v859
      %v867 = vadd.f32 %v820, %v856
      %868 = vrot.lane.b32.xlu0 %v604, 16
      %v869 = vpop.permute.xlu0 %868
      %870 = vrot.lane.b32.xlu0 %v608, 16
      %v871 = vpop.permute.xlu0 %870
      %v872 = vsel %vm400, %v869, %v871
      %v875 = vmul.f32 %v505, %v869
      %v876 = vmul.f32 %v508, %v872
      %v877 = vmul.f32 %v506, %v869
      %v878 = vmul.f32 %v509, %v872
      %879 = vset.pattern.permute.xlu0 7
      %880 = vperm.xlu0 %879, %v510
      %v881 = vpop.permute.xlu0 %880
      %883 = vset.pattern.permute.xlu0 7
      %884 = vperm.xlu0 %883, %v511
      %v885 = vpop.permute.xlu0 %884
      %v887 = vmul.f32 %v881, %v875
      %v888 = vmul.f32 %v881, %v876
      %v889 = vmul.f32 %v885, %v877
      %v890 = vmul.f32 %v885, %v878
      %895 = vrot.lane.b32.xlu0 %v887, 112
      %v896 = vpop.permute.xlu0 %895
      %897 = vrot.lane.b32.xlu0 %v888, 112
      %v898 = vpop.permute.xlu0 %897
      %899 = vrot.lane.b32.xlu0 %v889, 112
      %v900 = vpop.permute.xlu0 %899
      %901 = vrot.lane.b32.xlu0 %v890, 112
      %v902 = vpop.permute.xlu0 %901
      %vm903 = vcmask 916480
      %v904 = vsel %vm903, %v896, %v898
      %v905 = vsel %vm903, %v900, %v902
      %v910 = vadd.f32 %v864, %v904
      %v911 = vadd.f32 %v865, %v898
      %v912 = vadd.f32 %v866, %v905
      %v913 = vadd.f32 %v867, %v902
      %914 = vrot.lane.b32.xlu0 %v661, 17
      %v915 = vpop.permute.xlu0 %914
      %916 = vrot.lane.b32.xlu0 %v665, 17
      %v917 = vpop.permute.xlu0 %916
      %vm918 = vcmask 138240
      %v919 = vsel %vm918, %v915, %v917
      %v922 = vmul.f32 %v505, %v915
      %v923 = vmul.f32 %v508, %v919
      %v924 = vmul.f32 %v506, %v915
      %v925 = vmul.f32 %v509, %v919
      %926 = vset.pattern.permute.xlu0 8
      %927 = vperm.xlu0 %926, %v510
      %v928 = vpop.permute.xlu0 %927
      %930 = vset.pattern.permute.xlu0 8
      %931 = vperm.xlu0 %930, %v511
      %v932 = vpop.permute.xlu0 %931
      %v934 = vmul.f32 %v928, %v922
      %v935 = vmul.f32 %v928, %v923
      %v936 = vmul.f32 %v932, %v924
      %v937 = vmul.f32 %v932, %v925
      %942 = vrot.lane.b32.xlu0 %v934, 111
      %v943 = vpop.permute.xlu0 %942
      %944 = vrot.lane.b32.xlu0 %v935, 111
      %v945 = vpop.permute.xlu0 %944
      %946 = vrot.lane.b32.xlu0 %v936, 111
      %v947 = vpop.permute.xlu0 %946
      %948 = vrot.lane.b32.xlu0 %v937, 111
      %v949 = vpop.permute.xlu0 %948
      %vm950 = vcmask 908288
      %v951 = vsel %vm950, %v943, %v945
      %v952 = vsel %vm950, %v947, %v949
      %v957 = vadd.f32 %v910, %v951
      %v958 = vadd.f32 %v911, %v945
      %v959 = vadd.f32 %v912, %v952
      %v960 = vadd.f32 %v913, %v949
      %961 = vrot.lane.b32.xlu0 %v718, 18
      %v962 = vpop.permute.xlu0 %961
      %963 = vrot.lane.b32.xlu0 %v722, 18
      %v964 = vpop.permute.xlu0 %963
      %vm965 = vcmask 146432
      %v966 = vsel %vm965, %v962, %v964
      %v969 = vmul.f32 %v505, %v962
      %v970 = vmul.f32 %v508, %v966
      %v971 = vmul.f32 %v506, %v962
      %v972 = vmul.f32 %v509, %v966
      %973 = vset.pattern.permute.xlu0 9
      %974 = vperm.xlu0 %973, %v510
      %v975 = vpop.permute.xlu0 %974
      %977 = vset.pattern.permute.xlu0 9
      %978 = vperm.xlu0 %977, %v511
      %v979 = vpop.permute.xlu0 %978
      %v981 = vmul.f32 %v975, %v969
      %v982 = vmul.f32 %v975, %v970
      %v983 = vmul.f32 %v979, %v971
      %v984 = vmul.f32 %v979, %v972
      %989 = vrot.lane.b32.xlu0 %v981, 110
      %v990 = vpop.permute.xlu0 %989
      %991 = vrot.lane.b32.xlu0 %v982, 110
      %v992 = vpop.permute.xlu0 %991
      %993 = vrot.lane.b32.xlu0 %v983, 110
      %v994 = vpop.permute.xlu0 %993
      %995 = vrot.lane.b32.xlu0 %v984, 110
      %v996 = vpop.permute.xlu0 %995
      %vm997 = vcmask 900096
      %v998 = vsel %vm997, %v990, %v992
      %v999 = vsel %vm997, %v994, %v996
      %v1004 = vadd.f32 %v957, %v998
      %v1005 = vadd.f32 %v958, %v992
      %v1006 = vadd.f32 %v959, %v999
      %v1007 = vadd.f32 %v960, %v996
      %1008 = vrot.lane.b32.xlu0 %v517, 28
      %v1009 = vpop.permute.xlu0 %1008
      %1010 = vrot.lane.b32.xlu0 %v521, 28
      %v1011 = vpop.permute.xlu0 %1010
      %vm1012 = vcmask 228352
      %v1013 = vsel %vm1012, %v1009, %v1011
      %v1016 = vmul.f32 %v505, %v1009
      %v1017 = vmul.f32 %v508, %v1013
      %v1018 = vmul.f32 %v506, %v1009
      %v1019 = vmul.f32 %v509, %v1013
      %1020 = vset.pattern.permute.xlu0 10
      %1021 = vperm.xlu0 %1020, %v510
      %v1022 = vpop.permute.xlu0 %1021
      %1024 = vset.pattern.permute.xlu0 10
      %1025 = vperm.xlu0 %1024, %v511
      %v1026 = vpop.permute.xlu0 %1025
      %v1028 = vmul.f32 %v1022, %v1016
      %v1029 = vmul.f32 %v1022, %v1017
      %v1030 = vmul.f32 %v1026, %v1018
      %v1031 = vmul.f32 %v1026, %v1019
      %1036 = vrot.lane.b32.xlu0 %v1028, 100
      %v1037 = vpop.permute.xlu0 %1036
      %1038 = vrot.lane.b32.xlu0 %v1029, 100
      %v1039 = vpop.permute.xlu0 %1038
      %1040 = vrot.lane.b32.xlu0 %v1030, 100
      %v1041 = vpop.permute.xlu0 %1040
      %1042 = vrot.lane.b32.xlu0 %v1031, 100
      %v1043 = vpop.permute.xlu0 %1042
      %vm1044 = vcmask 818176
      %v1045 = vsel %vm1044, %v1037, %v1039
      %v1046 = vsel %vm1044, %v1041, %v1043
      %v1051 = vadd.f32 %v1004, %v1045
      %v1052 = vadd.f32 %v1005, %v1039
      %v1053 = vadd.f32 %v1006, %v1046
      %v1054 = vadd.f32 %v1007, %v1043
      %1055 = vrot.lane.b32.xlu0 %v547, 29
      %v1056 = vpop.permute.xlu0 %1055
      %1057 = vrot.lane.b32.xlu0 %v551, 29
      %v1058 = vpop.permute.xlu0 %1057
      %vm1059 = vcmask 236544
      %v1060 = vsel %vm1059, %v1056, %v1058
      %v1063 = vmul.f32 %v505, %v1056
      %v1064 = vmul.f32 %v508, %v1060
      %v1065 = vmul.f32 %v506, %v1056
      %v1066 = vmul.f32 %v509, %v1060
      %1067 = vset.pattern.permute.xlu0 11
      %1068 = vperm.xlu0 %1067, %v510
      %v1069 = vpop.permute.xlu0 %1068
      %1071 = vset.pattern.permute.xlu0 11
      %1072 = vperm.xlu0 %1071, %v511
      %v1073 = vpop.permute.xlu0 %1072
      %v1075 = vmul.f32 %v1069, %v1063
      %v1076 = vmul.f32 %v1069, %v1064
      %v1077 = vmul.f32 %v1073, %v1065
      %v1078 = vmul.f32 %v1073, %v1066
      %1083 = vrot.lane.b32.xlu0 %v1075, 99
      %v1084 = vpop.permute.xlu0 %1083
      %1085 = vrot.lane.b32.xlu0 %v1076, 99
      %v1086 = vpop.permute.xlu0 %1085
      %1087 = vrot.lane.b32.xlu0 %v1077, 99
      %v1088 = vpop.permute.xlu0 %1087
      %1089 = vrot.lane.b32.xlu0 %v1078, 99
      %v1090 = vpop.permute.xlu0 %1089
      %vm1091 = vcmask 809984
      %v1092 = vsel %vm1091, %v1084, %v1086
      %v1093 = vsel %vm1091, %v1088, %v1090
      %v1098 = vadd.f32 %v1051, %v1092
      %v1099 = vadd.f32 %v1052, %v1086
      %v1100 = vadd.f32 %v1053, %v1093
      %v1101 = vadd.f32 %v1054, %v1090
      %1102 = vrot.lane.b32.xlu0 %v604, 30
      %v1103 = vpop.permute.xlu0 %1102
      %1104 = vrot.lane.b32.xlu0 %v608, 30
      %v1105 = vpop.permute.xlu0 %1104
      %v1106 = vsel %vm498, %v1103, %v1105
      %v1109 = vmul.f32 %v505, %v1103
      %v1110 = vmul.f32 %v508, %v1106
      %v1111 = vmul.f32 %v506, %v1103
      %v1112 = vmul.f32 %v509, %v1106
      %1113 = vset.pattern.permute.xlu0 12
      %1114 = vperm.xlu0 %1113, %v510
      %v1115 = vpop.permute.xlu0 %1114
      %1117 = vset.pattern.permute.xlu0 12
      %1118 = vperm.xlu0 %1117, %v511
      %v1119 = vpop.permute.xlu0 %1118
      %v1121 = vmul.f32 %v1115, %v1109
      %v1122 = vmul.f32 %v1115, %v1110
      %v1123 = vmul.f32 %v1119, %v1111
      %v1124 = vmul.f32 %v1119, %v1112
      %1129 = vrot.lane.b32.xlu0 %v1121, 98
      %v1130 = vpop.permute.xlu0 %1129
      %1131 = vrot.lane.b32.xlu0 %v1122, 98
      %v1132 = vpop.permute.xlu0 %1131
      %1133 = vrot.lane.b32.xlu0 %v1123, 98
      %v1134 = vpop.permute.xlu0 %1133
      %1135 = vrot.lane.b32.xlu0 %v1124, 98
      %v1136 = vpop.permute.xlu0 %1135
      %v1137 = vsel %vm507, %v1130, %v1132
      %v1138 = vsel %vm507, %v1134, %v1136
      %v1143 = vadd.f32 %v1098, %v1137
      %v1144 = vadd.f32 %v1099, %v1132
      %v1145 = vadd.f32 %v1100, %v1138
      %v1146 = vadd.f32 %v1101, %v1136
      %1147 = vrot.lane.b32.xlu0 %v661, 31
      %v1148 = vpop.permute.xlu0 %1147
      %1149 = vrot.lane.b32.xlu0 %v665, 31
      %v1150 = vpop.permute.xlu0 %1149
      %vm1151 = vcmask 252928
      %v1152 = vsel %vm1151, %v1148, %v1150
      %v1155 = vmul.f32 %v505, %v1148
      %v1156 = vmul.f32 %v508, %v1152
      %v1157 = vmul.f32 %v506, %v1148
      %v1158 = vmul.f32 %v509, %v1152
      %1159 = vset.pattern.permute.xlu0 13
      %1160 = vperm.xlu0 %1159, %v510
      %v1161 = vpop.permute.xlu0 %1160
      %1163 = vset.pattern.permute.xlu0 13
      %1164 = vperm.xlu0 %1163, %v511
      %v1165 = vpop.permute.xlu0 %1164
      %v1167 = vmul.f32 %v1161, %v1155
      %v1168 = vmul.f32 %v1161, %v1156
      %v1169 = vmul.f32 %v1165, %v1157
      %v1170 = vmul.f32 %v1165, %v1158
      %1175 = vrot.lane.b32.xlu0 %v1167, 97
      %v1176 = vpop.permute.xlu0 %1175
      %1177 = vrot.lane.b32.xlu0 %v1168, 97
      %v1178 = vpop.permute.xlu0 %1177
      %1179 = vrot.lane.b32.xlu0 %v1169, 97
      %v1180 = vpop.permute.xlu0 %1179
      %1181 = vrot.lane.b32.xlu0 %v1170, 97
      %v1182 = vpop.permute.xlu0 %1181
      %vm1183 = vcmask 793600
      %v1184 = vsel %vm1183, %v1176, %v1178
      %v1185 = vsel %vm1183, %v1180, %v1182
      %v1190 = vadd.f32 %v1143, %v1184
      %v1191 = vadd.f32 %v1144, %v1178
      %v1192 = vadd.f32 %v1145, %v1185
      %v1193 = vadd.f32 %v1146, %v1182
      %1194 = vrot.lane.b32.xlu0 %v718, 32
      %v1195 = vpop.permute.xlu0 %1194
      %1196 = vrot.lane.b32.xlu0 %v722, 32
      %v1197 = vpop.permute.xlu0 %1196
      %vm1198 = vcmask 261120
      %v1199 = vsel %vm1198, %v1195, %v1197
      %v1202 = vmul.f32 %v505, %v1195
      %v1203 = vmul.f32 %v508, %v1199
      %v1204 = vmul.f32 %v506, %v1195
      %v1205 = vmul.f32 %v509, %v1199
      %1206 = vset.pattern.permute.xlu0 14
      %1207 = vperm.xlu0 %1206, %v510
      %v1208 = vpop.permute.xlu0 %1207
      %1210 = vset.pattern.permute.xlu0 14
      %1211 = vperm.xlu0 %1210, %v511
      %v1212 = vpop.permute.xlu0 %1211
      %v1214 = vmul.f32 %v1208, %v1202
      %v1215 = vmul.f32 %v1208, %v1203
      %v1216 = vmul.f32 %v1212, %v1204
      %v1217 = vmul.f32 %v1212, %v1205
      %1222 = vrot.lane.b32.xlu0 %v1214, 96
      %v1223 = vpop.permute.xlu0 %1222
      %1224 = vrot.lane.b32.xlu0 %v1215, 96
      %v1225 = vpop.permute.xlu0 %1224
      %1226 = vrot.lane.b32.xlu0 %v1216, 96
      %v1227 = vpop.permute.xlu0 %1226
      %1228 = vrot.lane.b32.xlu0 %v1217, 96
      %v1229 = vpop.permute.xlu0 %1228
      %vm1230 = vcmask 785408
      %v1231 = vsel %vm1230, %v1223, %v1225
      %v1232 = vsel %vm1230, %v1227, %v1229
      %v1237 = vadd.f32 %v1190, %v1231
      %v1238 = vadd.f32 %v1191, %v1225
      %v1239 = vadd.f32 %v1192, %v1232
      %v1240 = vadd.f32 %v1193, %v1229
      %1241 = vrot.lane.b32.xlu0 %v517, 42
      %v1242 = vpop.permute.xlu0 %1241
      %1243 = vrot.lane.b32.xlu0 %v521, 42
      %v1244 = vpop.permute.xlu0 %1243
      %vm1245 = vcmask 343040
      %v1246 = vsel %vm1245, %v1242, %v1244
      %v1249 = vmul.f32 %v505, %v1242
      %v1250 = vmul.f32 %v508, %v1246
      %v1251 = vmul.f32 %v506, %v1242
      %v1252 = vmul.f32 %v509, %v1246
      %1253 = vset.pattern.permute.xlu0 15
      %1254 = vperm.xlu0 %1253, %v510
      %v1255 = vpop.permute.xlu0 %1254
      %1257 = vset.pattern.permute.xlu0 15
      %1258 = vperm.xlu0 %1257, %v511
      %v1259 = vpop.permute.xlu0 %1258
      %v1261 = vmul.f32 %v1255, %v1249
      %v1262 = vmul.f32 %v1255, %v1250
      %v1263 = vmul.f32 %v1259, %v1251
      %v1264 = vmul.f32 %v1259, %v1252
      %1269 = vrot.lane.b32.xlu0 %v1261, 86
      %v1270 = vpop.permute.xlu0 %1269
      %1271 = vrot.lane.b32.xlu0 %v1262, 86
      %v1272 = vpop.permute.xlu0 %1271
      %1273 = vrot.lane.b32.xlu0 %v1263, 86
      %v1274 = vpop.permute.xlu0 %1273
      %1275 = vrot.lane.b32.xlu0 %v1264, 86
      %v1276 = vpop.permute.xlu0 %1275
      %vm1277 = vcmask 703488
      %v1278 = vsel %vm1277, %v1270, %v1272
      %v1279 = vsel %vm1277, %v1274, %v1276
      %v1284 = vadd.f32 %v1237, %v1278
      %v1285 = vadd.f32 %v1238, %v1272
      %v1286 = vadd.f32 %v1239, %v1279
      %v1287 = vadd.f32 %v1240, %v1276
      %1288 = vrot.lane.b32.xlu0 %v547, 43
      %v1289 = vpop.permute.xlu0 %1288
      %1290 = vrot.lane.b32.xlu0 %v551, 43
      %v1291 = vpop.permute.xlu0 %1290
      %vm1292 = vcmask 351232
      %v1293 = vsel %vm1292, %v1289, %v1291
      %v1296 = vmul.f32 %v505, %v1289
      %v1297 = vmul.f32 %v508, %v1293
      %v1298 = vmul.f32 %v506, %v1289
      %v1299 = vmul.f32 %v509, %v1293
      %1300 = vset.pattern.permute.xlu0 16
      %1301 = vperm.xlu0 %1300, %v510
      %v1302 = vpop.permute.xlu0 %1301
      %1304 = vset.pattern.permute.xlu0 16
      %1305 = vperm.xlu0 %1304, %v511
      %v1306 = vpop.permute.xlu0 %1305
      %v1308 = vmul.f32 %v1302, %v1296
      %v1309 = vmul.f32 %v1302, %v1297
      %v1310 = vmul.f32 %v1306, %v1298
      %v1311 = vmul.f32 %v1306, %v1299
      %1316 = vrot.lane.b32.xlu0 %v1308, 85
      %v1317 = vpop.permute.xlu0 %1316
      %1318 = vrot.lane.b32.xlu0 %v1309, 85
      %v1319 = vpop.permute.xlu0 %1318
      %1320 = vrot.lane.b32.xlu0 %v1310, 85
      %v1321 = vpop.permute.xlu0 %1320
      %1322 = vrot.lane.b32.xlu0 %v1311, 85
      %v1323 = vpop.permute.xlu0 %1322
      %vm1324 = vcmask 695296
      %v1325 = vsel %vm1324, %v1317, %v1319
      %v1326 = vsel %vm1324, %v1321, %v1323
      %v1331 = vadd.f32 %v1284, %v1325
      %v1332 = vadd.f32 %v1285, %v1319
      %v1333 = vadd.f32 %v1286, %v1326
      %v1334 = vadd.f32 %v1287, %v1323
      %1335 = vrot.lane.b32.xlu0 %v604, 44
      %v1336 = vpop.permute.xlu0 %1335
      %1337 = vrot.lane.b32.xlu0 %v608, 44
      %v1338 = vpop.permute.xlu0 %1337
      %vm1339 = vcmask 359424
      %v1340 = vsel %vm1339, %v1336, %v1338
      %v1343 = vmul.f32 %v505, %v1336
      %v1344 = vmul.f32 %v508, %v1340
      %v1345 = vmul.f32 %v506, %v1336
      %v1346 = vmul.f32 %v509, %v1340
      %1347 = vset.pattern.permute.xlu0 17
      %1348 = vperm.xlu0 %1347, %v510
      %v1349 = vpop.permute.xlu0 %1348
      %1351 = vset.pattern.permute.xlu0 17
      %1352 = vperm.xlu0 %1351, %v511
      %v1353 = vpop.permute.xlu0 %1352
      %v1355 = vmul.f32 %v1349, %v1343
      %v1356 = vmul.f32 %v1349, %v1344
      %v1357 = vmul.f32 %v1353, %v1345
      %v1358 = vmul.f32 %v1353, %v1346
      %1363 = vrot.lane.b32.xlu0 %v1355, 84
      %v1364 = vpop.permute.xlu0 %1363
      %1365 = vrot.lane.b32.xlu0 %v1356, 84
      %v1366 = vpop.permute.xlu0 %1365
      %1367 = vrot.lane.b32.xlu0 %v1357, 84
      %v1368 = vpop.permute.xlu0 %1367
      %1369 = vrot.lane.b32.xlu0 %v1358, 84
      %v1370 = vpop.permute.xlu0 %1369
      %vm1371 = vcmask 687104
      %v1372 = vsel %vm1371, %v1364, %v1366
      %v1373 = vsel %vm1371, %v1368, %v1370
      %v1378 = vadd.f32 %v1331, %v1372
      %v1379 = vadd.f32 %v1332, %v1366
      %v1380 = vadd.f32 %v1333, %v1373
      %v1381 = vadd.f32 %v1334, %v1370
      %1382 = vrot.lane.b32.xlu0 %v661, 45
      %v1383 = vpop.permute.xlu0 %1382
      %1384 = vrot.lane.b32.xlu0 %v665, 45
      %v1385 = vpop.permute.xlu0 %1384
      %vm1386 = vcmask 367616
      %v1387 = vsel %vm1386, %v1383, %v1385
      %v1390 = vmul.f32 %v505, %v1383
      %v1391 = vmul.f32 %v508, %v1387
      %v1392 = vmul.f32 %v506, %v1383
      %v1393 = vmul.f32 %v509, %v1387
      %1394 = vset.pattern.permute.xlu0 18
      %1395 = vperm.xlu0 %1394, %v510
      %v1396 = vpop.permute.xlu0 %1395
      %1398 = vset.pattern.permute.xlu0 18
      %1399 = vperm.xlu0 %1398, %v511
      %v1400 = vpop.permute.xlu0 %1399
      %v1402 = vmul.f32 %v1396, %v1390
      %v1403 = vmul.f32 %v1396, %v1391
      %v1404 = vmul.f32 %v1400, %v1392
      %v1405 = vmul.f32 %v1400, %v1393
      %1410 = vrot.lane.b32.xlu0 %v1402, 83
      %v1411 = vpop.permute.xlu0 %1410
      %1412 = vrot.lane.b32.xlu0 %v1403, 83
      %v1413 = vpop.permute.xlu0 %1412
      %1414 = vrot.lane.b32.xlu0 %v1404, 83
      %v1415 = vpop.permute.xlu0 %1414
      %1416 = vrot.lane.b32.xlu0 %v1405, 83
      %v1417 = vpop.permute.xlu0 %1416
      %vm1418 = vcmask 678912
      %v1419 = vsel %vm1418, %v1411, %v1413
      %v1420 = vsel %vm1418, %v1415, %v1417
      %v1425 = vadd.f32 %v1378, %v1419
      %v1426 = vadd.f32 %v1379, %v1413
      %v1427 = vadd.f32 %v1380, %v1420
      %v1428 = vadd.f32 %v1381, %v1417
      %1429 = vrot.lane.b32.xlu0 %v718, 46
      %v1430 = vpop.permute.xlu0 %1429
      %1431 = vrot.lane.b32.xlu0 %v722, 46
      %v1432 = vpop.permute.xlu0 %1431
      %vm1433 = vcmask 375808
      %v1434 = vsel %vm1433, %v1430, %v1432
      %v1437 = vmul.f32 %v505, %v1430
      %v1438 = vmul.f32 %v508, %v1434
      %v1439 = vmul.f32 %v506, %v1430
      %v1440 = vmul.f32 %v509, %v1434
      %1441 = vset.pattern.permute.xlu0 19
      %1442 = vperm.xlu0 %1441, %v510
      %v1443 = vpop.permute.xlu0 %1442
      %1445 = vset.pattern.permute.xlu0 19
      %1446 = vperm.xlu0 %1445, %v511
      %v1447 = vpop.permute.xlu0 %1446
      %v1449 = vmul.f32 %v1443, %v1437
      %v1450 = vmul.f32 %v1443, %v1438
      %v1451 = vmul.f32 %v1447, %v1439
      %v1452 = vmul.f32 %v1447, %v1440
      %1457 = vrot.lane.b32.xlu0 %v1449, 82
      %v1458 = vpop.permute.xlu0 %1457
      %1459 = vrot.lane.b32.xlu0 %v1450, 82
      %v1460 = vpop.permute.xlu0 %1459
      %1461 = vrot.lane.b32.xlu0 %v1451, 82
      %v1462 = vpop.permute.xlu0 %1461
      %1463 = vrot.lane.b32.xlu0 %v1452, 82
      %v1464 = vpop.permute.xlu0 %1463
      %vm1465 = vcmask 670720
      %v1466 = vsel %vm1465, %v1458, %v1460
      %v1467 = vsel %vm1465, %v1462, %v1464
      %v1472 = vadd.f32 %v1425, %v1466
      %v1473 = vadd.f32 %v1426, %v1460
      %v1474 = vadd.f32 %v1427, %v1467
      %v1475 = vadd.f32 %v1428, %v1464
      %1476 = vrot.lane.b32.xlu0 %v517, 56
      %v1477 = vpop.permute.xlu0 %1476
      %1478 = vrot.lane.b32.xlu0 %v521, 56
      %v1479 = vpop.permute.xlu0 %1478
      %vm1480 = vcmask 457728
      %v1481 = vsel %vm1480, %v1477, %v1479
      %v1484 = vmul.f32 %v505, %v1477
      %v1485 = vmul.f32 %v508, %v1481
      %v1486 = vmul.f32 %v506, %v1477
      %v1487 = vmul.f32 %v509, %v1481
      %1488 = vset.pattern.permute.xlu0 20
      %1489 = vperm.xlu0 %1488, %v510
      %v1490 = vpop.permute.xlu0 %1489
      %1492 = vset.pattern.permute.xlu0 20
      %1493 = vperm.xlu0 %1492, %v511
      %v1494 = vpop.permute.xlu0 %1493
      %v1496 = vmul.f32 %v1490, %v1484
      %v1497 = vmul.f32 %v1490, %v1485
      %v1498 = vmul.f32 %v1494, %v1486
      %v1499 = vmul.f32 %v1494, %v1487
      %1504 = vrot.lane.b32.xlu0 %v1496, 72
      %v1505 = vpop.permute.xlu0 %1504
      %1506 = vrot.lane.b32.xlu0 %v1497, 72
      %v1507 = vpop.permute.xlu0 %1506
      %1508 = vrot.lane.b32.xlu0 %v1498, 72
      %v1509 = vpop.permute.xlu0 %1508
      %1510 = vrot.lane.b32.xlu0 %v1499, 72
      %v1511 = vpop.permute.xlu0 %1510
      %vm1512 = vcmask 588800
      %v1513 = vsel %vm1512, %v1505, %v1507
      %v1514 = vsel %vm1512, %v1509, %v1511
      %v1519 = vadd.f32 %v1472, %v1513
      %v1520 = vadd.f32 %v1473, %v1507
      %v1521 = vadd.f32 %v1474, %v1514
      %v1522 = vadd.f32 %v1475, %v1511
      %1523 = vrot.lane.b32.xlu0 %v547, 57
      %v1524 = vpop.permute.xlu0 %1523
      %1525 = vrot.lane.b32.xlu0 %v551, 57
      %v1526 = vpop.permute.xlu0 %1525
      %vm1527 = vcmask 465920
      %v1528 = vsel %vm1527, %v1524, %v1526
      %v1531 = vmul.f32 %v505, %v1524
      %v1532 = vmul.f32 %v508, %v1528
      %v1533 = vmul.f32 %v506, %v1524
      %v1534 = vmul.f32 %v509, %v1528
      %1535 = vset.pattern.permute.xlu0 21
      %1536 = vperm.xlu0 %1535, %v510
      %v1537 = vpop.permute.xlu0 %1536
      %1539 = vset.pattern.permute.xlu0 21
      %1540 = vperm.xlu0 %1539, %v511
      %v1541 = vpop.permute.xlu0 %1540
      %v1543 = vmul.f32 %v1537, %v1531
      %v1544 = vmul.f32 %v1537, %v1532
      %v1545 = vmul.f32 %v1541, %v1533
      %v1546 = vmul.f32 %v1541, %v1534
      %1551 = vrot.lane.b32.xlu0 %v1543, 71
      %v1552 = vpop.permute.xlu0 %1551
      %1553 = vrot.lane.b32.xlu0 %v1544, 71
      %v1554 = vpop.permute.xlu0 %1553
      %1555 = vrot.lane.b32.xlu0 %v1545, 71
      %v1556 = vpop.permute.xlu0 %1555
      %1557 = vrot.lane.b32.xlu0 %v1546, 71
      %v1558 = vpop.permute.xlu0 %1557
      %vm1559 = vcmask 580608
      %v1560 = vsel %vm1559, %v1552, %v1554
      %v1561 = vsel %vm1559, %v1556, %v1558
      %v1566 = vadd.f32 %v1519, %v1560
      %v1567 = vadd.f32 %v1520, %v1554
      %v1568 = vadd.f32 %v1521, %v1561
      %v1569 = vadd.f32 %v1522, %v1558
      %1570 = vrot.lane.b32.xlu0 %v604, 58
      %v1571 = vpop.permute.xlu0 %1570
      %1572 = vrot.lane.b32.xlu0 %v608, 58
      %v1573 = vpop.permute.xlu0 %1572
      %vm1574 = vcmask 474112
      %v1575 = vsel %vm1574, %v1571, %v1573
      %v1578 = vmul.f32 %v505, %v1571
      %v1579 = vmul.f32 %v508, %v1575
      %v1580 = vmul.f32 %v506, %v1571
      %v1581 = vmul.f32 %v509, %v1575
      %1582 = vset.pattern.permute.xlu0 22
      %1583 = vperm.xlu0 %1582, %v510
      %v1584 = vpop.permute.xlu0 %1583
      %1586 = vset.pattern.permute.xlu0 22
      %1587 = vperm.xlu0 %1586, %v511
      %v1588 = vpop.permute.xlu0 %1587
      %v1590 = vmul.f32 %v1584, %v1578
      %v1591 = vmul.f32 %v1584, %v1579
      %v1592 = vmul.f32 %v1588, %v1580
      %v1593 = vmul.f32 %v1588, %v1581
      %1598 = vrot.lane.b32.xlu0 %v1590, 70
      %v1599 = vpop.permute.xlu0 %1598
      %1600 = vrot.lane.b32.xlu0 %v1591, 70
      %v1601 = vpop.permute.xlu0 %1600
      %1602 = vrot.lane.b32.xlu0 %v1592, 70
      %v1603 = vpop.permute.xlu0 %1602
      %1604 = vrot.lane.b32.xlu0 %v1593, 70
      %v1605 = vpop.permute.xlu0 %1604
      %vm1606 = vcmask 572416
      %v1607 = vsel %vm1606, %v1599, %v1601
      %v1608 = vsel %vm1606, %v1603, %v1605
      %v1613 = vadd.f32 %v1566, %v1607
      %v1614 = vadd.f32 %v1567, %v1601
      %v1615 = vadd.f32 %v1568, %v1608
      %v1616 = vadd.f32 %v1569, %v1605
      %1617 = vrot.lane.b32.xlu0 %v661, 59
      %v1618 = vpop.permute.xlu0 %1617
      %1619 = vrot.lane.b32.xlu0 %v665, 59
      %v1620 = vpop.permute.xlu0 %1619
      %vm1621 = vcmask 482304
      %v1622 = vsel %vm1621, %v1618, %v1620
      %v1625 = vmul.f32 %v505, %v1618
      %v1626 = vmul.f32 %v508, %v1622
      %v1627 = vmul.f32 %v506, %v1618
      %v1628 = vmul.f32 %v509, %v1622
      %1629 = vset.pattern.permute.xlu0 23
      %1630 = vperm.xlu0 %1629, %v510
      %v1631 = vpop.permute.xlu0 %1630
      %1633 = vset.pattern.permute.xlu0 23
      %1634 = vperm.xlu0 %1633, %v511
      %v1635 = vpop.permute.xlu0 %1634
      %v1637 = vmul.f32 %v1631, %v1625
      %v1638 = vmul.f32 %v1631, %v1626
      %v1639 = vmul.f32 %v1635, %v1627
      %v1640 = vmul.f32 %v1635, %v1628
      %1645 = vrot.lane.b32.xlu0 %v1637, 69
      %v1646 = vpop.permute.xlu0 %1645
      %1647 = vrot.lane.b32.xlu0 %v1638, 69
      %v1648 = vpop.permute.xlu0 %1647
      %1649 = vrot.lane.b32.xlu0 %v1639, 69
      %v1650 = vpop.permute.xlu0 %1649
      %1651 = vrot.lane.b32.xlu0 %v1640, 69
      %v1652 = vpop.permute.xlu0 %1651
      %vm1653 = vcmask 564224
      %v1654 = vsel %vm1653, %v1646, %v1648
      %v1655 = vsel %vm1653, %v1650, %v1652
      %v1660 = vadd.f32 %v1613, %v1654
      %v1661 = vadd.f32 %v1614, %v1648
      %v1662 = vadd.f32 %v1615, %v1655
      %v1663 = vadd.f32 %v1616, %v1652
      %1664 = vrot.lane.b32.xlu0 %v718, 60
      %v1665 = vpop.permute.xlu0 %1664
      %1666 = vrot.lane.b32.xlu0 %v722, 60
      %v1667 = vpop.permute.xlu0 %1666
      %vm1668 = vcmask 490496
      %v1669 = vsel %vm1668, %v1665, %v1667
      %v1672 = vmul.f32 %v505, %v1665
      %v1673 = vmul.f32 %v508, %v1669
      %v1674 = vmul.f32 %v506, %v1665
      %v1675 = vmul.f32 %v509, %v1669
      %1676 = vset.pattern.permute.xlu0 24
      %1677 = vperm.xlu0 %1676, %v510
      %v1678 = vpop.permute.xlu0 %1677
      %1680 = vset.pattern.permute.xlu0 24
      %1681 = vperm.xlu0 %1680, %v511
      %v1682 = vpop.permute.xlu0 %1681
      %v1684 = vmul.f32 %v1678, %v1672
      %v1685 = vmul.f32 %v1678, %v1673
      %v1686 = vmul.f32 %v1682, %v1674
      %v1687 = vmul.f32 %v1682, %v1675
      %1692 = vrot.lane.b32.xlu0 %v1684, 68
      %v1693 = vpop.permute.xlu0 %1692
      %1694 = vrot.lane.b32.xlu0 %v1685, 68
      %v1695 = vpop.permute.xlu0 %1694
      %1696 = vrot.lane.b32.xlu0 %v1686, 68
      %v1697 = vpop.permute.xlu0 %1696
      %1698 = vrot.lane.b32.xlu0 %v1687, 68
      %v1699 = vpop.permute.xlu0 %1698
      %vm1700 = vcmask 556032
      %v1701 = vsel %vm1700, %v1693, %v1695
      %v1702 = vsel %vm1700, %v1697, %v1699
      %v1707 = vadd.f32 %v1660, %v1701
      %v1708 = vadd.f32 %v1661, %v1695
      %v1709 = vadd.f32 %v1662, %v1702
      %v1710 = vadd.f32 %v1663, %v1699
      %v1711 = vld [vmem:[%s4] sm:$0xff]
      %v1712 = vld [vmem:[%s4 + $0x8] sm:$0xff]
      %1714 = vset.pattern.permute.xlu0 0
      %1715 = vperm.xlu0 %1714, %v1711
      %v1716 = vpop.permute.xlu0 %1715
      %1719 = vset.pattern.permute.xlu0 0
      %1720 = vperm.xlu0 %1719, %v1712
      %v1721 = vpop.permute.xlu0 %1720
      %v1723 = vadd.f32 %v1707, %v1716
      %v1724 = vadd.f32 %v1708, %v1716
      %v1725 = vadd.f32 %v1709, %v1721
      %v1726 = vadd.f32 %v1710, %v1721
      %v1727 = vpack.c.bf16 %v1723, %v1723
      %v1728 = vpack.c.bf16 %v1724, %v1724
      %v1729 = vpack.c.bf16 %v458, %v458
      %v1730 = vpack.c.bf16 %v460, %v460
      %1731 = vxpose.xlu0.c.b16.start [1/8] %v1727, 128
      %1732 = vxpose.xlu0.c.b16.cont [2/8] 0, 128
      %1733 = vxpose.xlu0.c.b16.cont [3/8] 0, 128
      %1734 = vxpose.xlu0.c.b16.cont [4/8] 0, 128
      %1735 = vxpose.xlu0.c.b16.cont [5/8] 0, 128
      %1736 = vxpose.xlu0.c.b16.cont [6/8] 0, 128
      %1737 = vxpose.xlu0.c.b16.cont [7/8] 0, 128
      %1738 = vxpose.xlu0.c.b16.end [8/8] 0, 128
      %v1739 = vpop.trf.xlu0
      %v1740 = vpop.trf.xlu0
      %v1741 = vpop.trf.xlu0
      %v1742 = vpop.trf.xlu0
      %v1743 = vpop.trf.xlu0
      %v1744 = vpop.trf.xlu0
      %v1745 = vpop.trf.xlu0
      %v1746 = vpop.trf.xlu0
      %1747 = vxpose.xlu0.c.b16.start [1/8] %v1728, 128
      %1748 = vxpose.xlu0.c.b16.cont [2/8] 0, 128
      %1749 = vxpose.xlu0.c.b16.cont [3/8] 0, 128
      %1750 = vxpose.xlu0.c.b16.cont [4/8] 0, 128
      %1751 = vxpose.xlu0.c.b16.cont [5/8] 0, 128
      %1752 = vxpose.xlu0.c.b16.cont [6/8] 0, 128
      %1753 = vxpose.xlu0.c.b16.cont [7/8] 0, 128
      %1754 = vxpose.xlu0.c.b16.end [8/8] 0, 128
      %v1755 = vpop.trf.xlu0
      %v1756 = vpop.trf.xlu0
      %v1757 = vpop.trf.xlu0
      %v1758 = vpop.trf.xlu0
      %v1759 = vpop.trf.xlu0
      %v1760 = vpop.trf.xlu0
      %v1761 = vpop.trf.xlu0
      %v1762 = vpop.trf.xlu0
      %vm1763 = vcmask 64512
      %v1765 = vsel %vm1763, %v1739, 0
      %v1768 = vsel %vm1763, %v1740, 0
      %v1771 = vsel %vm1763, %v1741, 0
      %v1774 = vsel %vm1763, %v1742, 0
      %v1777 = vsel %vm1763, %v1743, 0
      %v1780 = vsel %vm1763, %v1744, 0
      %v1783 = vsel %vm1763, %v1745, 0
      %v1786 = vsel %vm1763, %v1746, 0
      %v1789 = vsel %vm1763, %v1755, 0
      %v1792 = vsel %vm1763, %v1756, 0
      %v1795 = vsel %vm1763, %v1757, 0
      %v1798 = vsel %vm1763, %v1758, 0
      %v1801 = vsel %vm1763, %v1759, 0
      %vm1803 = vcmask 1043456
      %v1805 = vsel %vm1803, %v1729, 0
      %v1808 = vsel %vm1803, %v1730, 0
      %1810 = vmatprep.subr.bf16.mxu0 %v1808
      %1811 = vmatpush1.bf16.msra.mxu0 %v1805
      %1812 = vmatprep.subr.bf16.mxu0 0
      %1813 = vmatpush1.bf16.msra.mxu0 0
      %1814 = vmatprep.subr.bf16.mxu0 0
      %1815 = vmatpush1.bf16.msra.mxu0 0
      %1816 = vmatprep.subr.bf16.mxu0 0
      %1817 = vmatpush1.bf16.msra.mxu0 0
      %1818 = vmatprep.subr.bf16.mxu0 0
      %1819 = vmatpush1.bf16.msra.mxu0 0
      %1820 = vmatprep.subr.bf16.mxu0 0
      %1821 = vmatpush1.bf16.msra.mxu0 0
      %1822 = vmatprep.subr.bf16.mxu0 0
      %1823 = vmatpush1.bf16.msra.mxu0 0
      %1824 = vmatprep.subr.bf16.mxu0 0
      %1825 = vmatpush1.bf16.msra.mxu0 0
      %1826 = vmatprep.subr.bf16.mxu0 0
      %1827 = vmatpush1.bf16.msra.mxu0 0
      %1828 = vmatprep.subr.bf16.mxu0 0
      %1829 = vmatpush1.bf16.msra.mxu0 0
      %1830 = vmatprep.subr.bf16.mxu0 0
      %1831 = vmatpush1.bf16.msra.mxu0 0
      %1832 = vmatprep.subr.bf16.mxu0 0
      %1833 = vmatpush1.bf16.msra.mxu0 0
      %1834 = vmatprep.subr.bf16.mxu0 0
      %1835 = vmatpush1.bf16.msra.mxu0 0
      %1836 = vmatprep.subr.bf16.mxu0 0
      %1837 = vmatpush1.bf16.msra.mxu0 0
      %1838 = vmatprep.subr.bf16.mxu0 0
      %1839 = vmatpush1.bf16.msra.mxu0 0
      %1840 = vmatprep.subr.bf16.mxu0 0
      %1841 = vmatpush1.bf16.msra.mxu0 0
      %1842 = vmatprep.mubr.bf16.mxu0 0
      %1843 = vmatmul.mubr.bf16.gmra.mrb[0].mxu0 %v1765
      %v1844 = vpop.f32.mrb[0].mxu0
      %v1845 = vadd.f32 0.0, %v1844
      %v1846 = vpop.f32.mrb[0].mxu0
      %v1847 = vadd.f32 0.0, %v1846
      %v1848 = vpop.f32.mrb[0].mxu0
      %v1849 = vadd.f32 0.0, %v1848
      %v1850 = vpop.f32.mrb[0].mxu0
      %v1851 = vadd.f32 0.0, %v1850
      %1852 = vmatprep.mubr.bf16.mxu0 0
      %1853 = vmatmul.mubr.bf16.gmra.mrb[0].mxu0 %v1768
      %v1854 = vpop.f32.mrb[0].mxu0
      %v1855 = vadd.f32 0.0, %v1854
      %v1856 = vpop.f32.mrb[0].mxu0
      %v1857 = vadd.f32 0.0, %v1856
      %v1858 = vpop.f32.mrb[0].mxu0
      %v1859 = vadd.f32 0.0, %v1858
      %v1860 = vpop.f32.mrb[0].mxu0
      %v1861 = vadd.f32 0.0, %v1860
      %1862 = vmatprep.mubr.bf16.mxu0 0
      %1863 = vmatmul.mubr.bf16.gmra.mrb[0].mxu0 %v1771
      %v1864 = vpop.f32.mrb[0].mxu0
      %v1865 = vadd.f32 0.0, %v1864
      %v1866 = vpop.f32.mrb[0].mxu0
      %v1867 = vadd.f32 0.0, %v1866
      %v1868 = vpop.f32.mrb[0].mxu0
      %v1869 = vadd.f32 0.0, %v1868
      %v1870 = vpop.f32.mrb[0].mxu0
      %v1871 = vadd.f32 0.0, %v1870
      %1872 = vmatprep.mubr.bf16.mxu0 0
      %1873 = vmatmul.mubr.bf16.gmra.mrb[0].mxu0 %v1774
      %v1874 = vpop.f32.mrb[0].mxu0
      %v1875 = vadd.f32 0.0, %v1874
      %v1876 = vpop.f32.mrb[0].mxu0
      %v1877 = vadd.f32 0.0, %v1876
      %v1878 = vpop.f32.mrb[0].mxu0
      %v1879 = vadd.f32 0.0, %v1878
      %v1880 = vpop.f32.mrb[0].mxu0
      %v1881 = vadd.f32 0.0, %v1880
      %1882 = vmatprep.mubr.bf16.mxu0 0
      %1883 = vmatmul.mubr.bf16.gmra.mrb[0].mxu0 %v1777
      %v1884 = vpop.f32.mrb[0].mxu0
      %v1885 = vadd.f32 0.0, %v1884
      %v1886 = vpop.f32.mrb[0].mxu0
      %v1887 = vadd.f32 0.0, %v1886
      %v1888 = vpop.f32.mrb[0].mxu0
      %v1889 = vadd.f32 0.0, %v1888
      %v1890 = vpop.f32.mrb[0].mxu0
      %v1891 = vadd.f32 0.0, %v1890
      %1892 = vmatprep.mubr.bf16.mxu0 0
      %1893 = vmatmul.mubr.bf16.gmra.mrb[0].mxu0 %v1780
      %v1894 = vpop.f32.mrb[0].mxu0
      %v1895 = vadd.f32 0.0, %v1894
      %v1896 = vpop.f32.mrb[0].mxu0
      %v1897 = vadd.f32 0.0, %v1896
      %v1898 = vpop.f32.mrb[0].mxu0
      %v1899 = vadd.f32 0.0, %v1898
      %v1900 = vpop.f32.mrb[0].mxu0
      %v1901 = vadd.f32 0.0, %v1900
      %1902 = vmatprep.mubr.bf16.mxu0 0
      %1903 = vmatmul.mubr.bf16.gmra.mrb[0].mxu0 %v1783
      %v1904 = vpop.f32.mrb[0].mxu0
      %v1905 = vadd.f32 0.0, %v1904
      %v1906 = vpop.f32.mrb[0].mxu0
      %v1907 = vadd.f32 0.0, %v1906
      %v1908 = vpop.f32.mrb[0].mxu0
      %v1909 = vadd.f32 0.0, %v1908
      %v1910 = vpop.f32.mrb[0].mxu0
      %v1911 = vadd.f32 0.0, %v1910
      %1912 = vmatprep.mubr.bf16.mxu0 0
      %1913 = vmatmul.mubr.bf16.gmra.mrb[0].mxu0 %v1786
      %v1914 = vpop.f32.mrb[0].mxu0
      %v1915 = vadd.f32 0.0, %v1914
      %v1916 = vpop.f32.mrb[0].mxu0
      %v1917 = vadd.f32 0.0, %v1916
      %v1918 = vpop.f32.mrb[0].mxu0
      %v1919 = vadd.f32 0.0, %v1918
      %v1920 = vpop.f32.mrb[0].mxu0
      %v1921 = vadd.f32 0.0, %v1920
      %1922 = vmatprep.mubr.bf16.mxu0 0
      %1923 = vmatmul.mubr.bf16.gmra.mrb[0].mxu0 %v1789
      %v1924 = vpop.f32.mrb[0].mxu0
      %v1925 = vadd.f32 0.0, %v1924
      %v1926 = vpop.f32.mrb[0].mxu0
      %v1927 = vadd.f32 0.0, %v1926
      %v1928 = vpop.f32.mrb[0].mxu0
      %v1929 = vadd.f32 0.0, %v1928
      %v1930 = vpop.f32.mrb[0].mxu0
      %v1931 = vadd.f32 0.0, %v1930
      %1932 = vmatprep.mubr.bf16.mxu0 0
      %1933 = vmatmul.mubr.bf16.gmra.mrb[0].mxu0 %v1792
      %v1934 = vpop.f32.mrb[0].mxu0
      %v1935 = vadd.f32 0.0, %v1934
      %v1936 = vpop.f32.mrb[0].mxu0
      %v1937 = vadd.f32 0.0, %v1936
      %v1938 = vpop.f32.mrb[0].mxu0
      %v1939 = vadd.f32 0.0, %v1938
      %v1940 = vpop.f32.mrb[0].mxu0
      %v1941 = vadd.f32 0.0, %v1940
      %1942 = vmatprep.mubr.bf16.mxu0 0
      %1943 = vmatmul.mubr.bf16.gmra.mrb[0].mxu0 %v1795
      %v1944 = vpop.f32.mrb[0].mxu0
      %v1945 = vadd.f32 0.0, %v1944
      %v1946 = vpop.f32.mrb[0].mxu0
      %v1947 = vadd.f32 0.0, %v1946
      %v1948 = vpop.f32.mrb[0].mxu0
      %v1949 = vadd.f32 0.0, %v1948
      %v1950 = vpop.f32.mrb[0].mxu0
      %v1951 = vadd.f32 0.0, %v1950
      %1952 = vmatprep.mubr.bf16.mxu0 0
      %1953 = vmatmul.mubr.bf16.gmra.mrb[0].mxu0 %v1798
      %v1954 = vpop.f32.mrb[0].mxu0
      %v1955 = vadd.f32 0.0, %v1954
      %v1956 = vpop.f32.mrb[0].mxu0
      %v1957 = vadd.f32 0.0, %v1956
      %v1958 = vpop.f32.mrb[0].mxu0
      %v1959 = vadd.f32 0.0, %v1958
      %v1960 = vpop.f32.mrb[0].mxu0
      %v1961 = vadd.f32 0.0, %v1960
      %1962 = vmatprep.mubr.bf16.mxu0 0
      %1963 = vmatmul.mubr.bf16.gmra.mrb[0].mxu0 %v1801
      %v1964 = vpop.f32.mrb[0].mxu0
      %v1965 = vadd.f32 0.0, %v1964
      %v1966 = vpop.f32.mrb[0].mxu0
      %v1967 = vadd.f32 0.0, %v1966
      %v1968 = vpop.f32.mrb[0].mxu0
      %v1969 = vpop.f32.mrb[0].mxu0
      %1970 = vdwg.mxu0
      %v1971 = vmul.f32 %v1845, 0.35355338
      %v1972 = vmul.f32 %v1847, 0.35355338
      %v1973 = vmul.f32 %v1849, 0.35355338
      %v1974 = vmul.f32 %v1851, 0.35355338
      %v1975 = vmul.f32 %v1855, 0.35355338
      %v1976 = vmul.f32 %v1857, 0.35355338
      %v1977 = vmul.f32 %v1859, 0.35355338
      %v1978 = vmul.f32 %v1861, 0.35355338
      %v1979 = vmul.f32 %v1865, 0.35355338
      %v1980 = vmul.f32 %v1867, 0.35355338
      %v1981 = vmul.f32 %v1869, 0.35355338
      %v1982 = vmul.f32 %v1871, 0.35355338
      %v1983 = vmul.f32 %v1875, 0.35355338
      %v1984 = vmul.f32 %v1877, 0.35355338
      %v1985 = vmul.f32 %v1879, 0.35355338
      %v1986 = vmul.f32 %v1881, 0.35355338
      %v1987 = vmul.f32 %v1885, 0.35355338
      %v1988 = vmul.f32 %v1887, 0.35355338
      %v1989 = vmul.f32 %v1889, 0.35355338
      %v1990 = vmul.f32 %v1891, 0.35355338
      %v1991 = vmul.f32 %v1895, 0.35355338
      %v1992 = vmul.f32 %v1897, 0.35355338
      %v1993 = vmul.f32 %v1899, 0.35355338
      %v1994 = vmul.f32 %v1901, 0.35355338
      %v1995 = vmul.f32 %v1905, 0.35355338
      %v1996 = vmul.f32 %v1907, 0.35355338
      %v1997 = vmul.f32 %v1909, 0.35355338
      %v1998 = vmul.f32 %v1911, 0.35355338
      %v1999 = vmul.f32 %v1915, 0.35355338
      %v2000 = vmul.f32 %v1917, 0.35355338
      %v2001 = vmul.f32 %v1919, 0.35355338
      %v2002 = vmul.f32 %v1921, 0.35355338
      %v2003 = vmul.f32 %v1925, 0.35355338
      %v2004 = vmul.f32 %v1927, 0.35355338
      %v2005 = vmul.f32 %v1929, 0.35355338
      %v2006 = vmul.f32 %v1931, 0.35355338
      %v2007 = vmul.f32 %v1935, 0.35355338
      %v2008 = vmul.f32 %v1937, 0.35355338
      %v2009 = vmul.f32 %v1939, 0.35355338
      %v2010 = vmul.f32 %v1941, 0.35355338
      %v2011 = vmul.f32 %v1945, 0.35355338
      %v2012 = vmul.f32 %v1947, 0.35355338
      %v2013 = vmul.f32 %v1949, 0.35355338
      %v2014 = vmul.f32 %v1951, 0.35355338
      %v2015 = vmul.f32 %v1955, 0.35355338
      %v2016 = vmul.f32 %v1957, 0.35355338
      %v2017 = vmul.f32 %v1959, 0.35355338
      %v2018 = vmul.f32 %v1961, 0.35355338
      %v2019 = vmul.f32 %v1965, 0.35355338
      %v2020 = vmul.f32 %v1967, 0.35355338
      %v2021 = vld [vmem:[%s6] sm:$0xff]
      %v2022 = vld [vmem:[%s6 + $0x8] sm:$0xff]
      %v2023 = vld [vmem:[%s6 + $0x10] sm:$0xff]
      %v2024 = vld [vmem:[%s6 + $0x18] sm:$0xff]
      %v2025 = vld [vmem:[%s6 + $0x20] sm:$0xff]
      %v2026 = vld [vmem:[%s6 + $0x28] sm:$0xff]
      %v2027 = vld [vmem:[%s6 + $0x30] sm:$0xff]
      %v2028 = vld [vmem:[%s6 + $0x38] sm:$0xff]
      %v2029 = vld [vmem:[%s6 + $0x40] sm:$0xff]
      %v2030 = vld [vmem:[%s6 + $0x48] sm:$0xff]
      %v2031 = vld [vmem:[%s6 + $0x50] sm:$0xff]
      %v2032 = vld [vmem:[%s6 + $0x58] sm:$0xff]
      %v2033 = vld [vmem:[%s6 + $0x60] sm:$0xff]
      %v2034 = vld [vmem:[%s6 + $0x68] sm:$0xff]
      %v2035 = vld [vmem:[%s6 + $0x70] sm:$0xff]
      %v2036 = vld [vmem:[%s6 + $0x78] sm:$0xff]
      %v2037 = vld [vmem:[%s6 + $0x80] sm:$0xff]
      %v2038 = vld [vmem:[%s6 + $0x88] sm:$0xff]
      %v2039 = vld [vmem:[%s6 + $0x90] sm:$0xff]
      %v2040 = vld [vmem:[%s6 + $0x98] sm:$0xff]
      %v2041 = vld [vmem:[%s6 + $0xa0] sm:$0xff]
      %v2042 = vld [vmem:[%s6 + $0xa8] sm:$0xff]
      %v2043 = vld [vmem:[%s6 + $0xb0] sm:$0xff]
      %v2044 = vld [vmem:[%s6 + $0xb8] sm:$0xff]
      %v2045 = vld [vmem:[%s6 + $0xc0] sm:$0xff]
      %v2046 = vld [vmem:[%s6 + $0xc8] sm:$0xff]
      %v2047 = vld [vmem:[%s6 + $0xd0] sm:$0xff]
      %v2048 = vld [vmem:[%s6 + $0xd8] sm:$0xff]
      %v2049 = vld [vmem:[%s6 + $0xe0] sm:$0xff]
      %v2050 = vld [vmem:[%s6 + $0xe8] sm:$0xff]
      %v2051 = vld [vmem:[%s6 + $0xf0] sm:$0xff]
      %v2052 = vld [vmem:[%s6 + $0xf8] sm:$0xff]
      %v2053 = vld [vmem:[%s6 + $0x100] sm:$0xff]
      %v2054 = vld [vmem:[%s6 + $0x108] sm:$0xff]
      %v2055 = vld [vmem:[%s6 + $0x110] sm:$0xff]
      %v2056 = vld [vmem:[%s6 + $0x118] sm:$0xff]
      %v2057 = vld [vmem:[%s6 + $0x120] sm:$0xff]
      %v2058 = vld [vmem:[%s6 + $0x128] sm:$0xff]
      %v2059 = vld [vmem:[%s6 + $0x130] sm:$0xff]
      %v2060 = vld [vmem:[%s6 + $0x138] sm:$0xff]
      %v2061 = vld [vmem:[%s6 + $0x140] sm:$0xff]
      %v2062 = vld [vmem:[%s6 + $0x148] sm:$0xff]
      %v2063 = vld [vmem:[%s6 + $0x150] sm:$0xff]
      %v2064 = vld [vmem:[%s6 + $0x158] sm:$0xff]
      %v2065 = vld [vmem:[%s6 + $0x160] sm:$0xff]
      %v2066 = vld [vmem:[%s6 + $0x168] sm:$0xff]
      %v2067 = vld [vmem:[%s6 + $0x170] sm:$0xff]
      %v2068 = vld [vmem:[%s6 + $0x178] sm:$0xff]
      %v2069 = vld [vmem:[%s6 + $0x180] sm:$0xf]
      %v2070 = vld [vmem:[%s6 + $0x188] sm:$0xf]
      %v2071 = vadd.f32 %v1971, %v2021
      %v2072 = vadd.f32 %v1972, %v2022
      %v2073 = vadd.f32 %v1973, %v2023
      %v2074 = vadd.f32 %v1974, %v2024
      %v2075 = vadd.f32 %v1975, %v2025
      %v2076 = vadd.f32 %v1976, %v2026
      %v2077 = vadd.f32 %v1977, %v2027
      %v2078 = vadd.f32 %v1978, %v2028
      %v2079 = vadd.f32 %v1979, %v2029
      %v2080 = vadd.f32 %v1980, %v2030
      %v2081 = vadd.f32 %v1981, %v2031
      %v2082 = vadd.f32 %v1982, %v2032
      %v2083 = vadd.f32 %v1983, %v2033
      %v2084 = vadd.f32 %v1984, %v2034
      %v2085 = vadd.f32 %v1985, %v2035
      %v2086 = vadd.f32 %v1986, %v2036
      %v2087 = vadd.f32 %v1987, %v2037
      %v2088 = vadd.f32 %v1988, %v2038
      %v2089 = vadd.f32 %v1989, %v2039
      %v2090 = vadd.f32 %v1990, %v2040
      %v2091 = vadd.f32 %v1991, %v2041
      %v2092 = vadd.f32 %v1992, %v2042
      %v2093 = vadd.f32 %v1993, %v2043
      %v2094 = vadd.f32 %v1994, %v2044
      %v2095 = vadd.f32 %v1995, %v2045
      %v2096 = vadd.f32 %v1996, %v2046
      %v2097 = vadd.f32 %v1997, %v2047
      %v2098 = vadd.f32 %v1998, %v2048
      %v2099 = vadd.f32 %v1999, %v2049
      %v2100 = vadd.f32 %v2000, %v2050
      %v2101 = vadd.f32 %v2001, %v2051
      %v2102 = vadd.f32 %v2002, %v2052
      %v2103 = vadd.f32 %v2003, %v2053
      %v2104 = vadd.f32 %v2004, %v2054
      %v2105 = vadd.f32 %v2005, %v2055
      %v2106 = vadd.f32 %v2006, %v2056
      %v2107 = vadd.f32 %v2007, %v2057
      %v2108 = vadd.f32 %v2008, %v2058
      %v2109 = vadd.f32 %v2009, %v2059
      %v2110 = vadd.f32 %v2010, %v2060
      %v2111 = vadd.f32 %v2011, %v2061
      %v2112 = vadd.f32 %v2012, %v2062
      %v2113 = vadd.f32 %v2013, %v2063
      %v2114 = vadd.f32 %v2014, %v2064
      %v2115 = vadd.f32 %v2015, %v2065
      %v2116 = vadd.f32 %v2016, %v2066
      %v2117 = vadd.f32 %v2017, %v2067
      %v2118 = vadd.f32 %v2018, %v2068
      %v2119 = vadd.f32 %v2019, %v2069
      %v2120 = vadd.f32 %v2020, %v2070
      %v2121 = vsel %vm1700, %v2072, -inf
      %v2122 = vmax.f32 %v2071, %v2121
      %2123 = vmax.xlane.f32.xlu0 %v2122
      %v2124 = vpop.xlane.xlu0 %2123
      %v2125 = vsel %vm1700, %v2074, -inf
      %v2126 = vmax.f32 %v2073, %v2125
      %2127 = vmax.xlane.f32.xlu0 %v2126
      %v2128 = vpop.xlane.xlu0 %2127
      %v2129 = vsel %vm1700, %v2076, -inf
      %v2130 = vmax.f32 %v2075, %v2129
      %2131 = vmax.xlane.f32.xlu0 %v2130
      %v2132 = vpop.xlane.xlu0 %2131
      %v2133 = vsel %vm1700, %v2078, -inf
      %v2134 = vmax.f32 %v2077, %v2133
      %2135 = vmax.xlane.f32.xlu0 %v2134
      %v2136 = vpop.xlane.xlu0 %2135
      %v2137 = vsel %vm1700, %v2080, -inf
      %v2138 = vmax.f32 %v2079, %v2137
      %2139 = vmax.xlane.f32.xlu0 %v2138
      %v2140 = vpop.xlane.xlu0 %2139
      %v2141 = vsel %vm1700, %v2082, -inf
      %v2142 = vmax.f32 %v2081, %v2141
      %2143 = vmax.xlane.f32.xlu0 %v2142
      %v2144 = vpop.xlane.xlu0 %2143
      %v2145 = vsel %vm1700, %v2084, -inf
      %v2146 = vmax.f32 %v2083, %v2145
      %2147 = vmax.xlane.f32.xlu0 %v2146
      %v2148 = vpop.xlane.xlu0 %2147
      %v2149 = vsel %vm1700, %v2086, -inf
      %v2150 = vmax.f32 %v2085, %v2149
      %2151 = vmax.xlane.f32.xlu0 %v2150
      %v2152 = vpop.xlane.xlu0 %2151
      %v2153 = vsel %vm1700, %v2088, -inf
      %v2154 = vmax.f32 %v2087, %v2153
      %2155 = vmax.xlane.f32.xlu0 %v2154
      %v2156 = vpop.xlane.xlu0 %2155
      %v2157 = vsel %vm1700, %v2090, -inf
      %v2158 = vmax.f32 %v2089, %v2157
      %2159 = vmax.xlane.f32.xlu0 %v2158
      %v2160 = vpop.xlane.xlu0 %2159
      %v2161 = vsel %vm1700, %v2092, -inf
      %v2162 = vmax.f32 %v2091, %v2161
      %2163 = vmax.xlane.f32.xlu0 %v2162
      %v2164 = vpop.xlane.xlu0 %2163
      %v2165 = vsel %vm1700, %v2094, -inf
      %v2166 = vmax.f32 %v2093, %v2165
      %2167 = vmax.xlane.f32.xlu0 %v2166
      %v2168 = vpop.xlane.xlu0 %2167
      %v2169 = vsel %vm1700, %v2096, -inf
      %v2170 = vmax.f32 %v2095, %v2169
      %2171 = vmax.xlane.f32.xlu0 %v2170
      %v2172 = vpop.xlane.xlu0 %2171
      %v2173 = vsel %vm1700, %v2098, -inf
      %v2174 = vmax.f32 %v2097, %v2173
      %2175 = vmax.xlane.f32.xlu0 %v2174
      %v2176 = vpop.xlane.xlu0 %2175
      %v2177 = vsel %vm1700, %v2100, -inf
      %v2178 = vmax.f32 %v2099, %v2177
      %2179 = vmax.xlane.f32.xlu0 %v2178
      %v2180 = vpop.xlane.xlu0 %2179
      %v2181 = vsel %vm1700, %v2102, -inf
      %v2182 = vmax.f32 %v2101, %v2181
      %2183 = vmax.xlane.f32.xlu0 %v2182
      %v2184 = vpop.xlane.xlu0 %2183
      %v2185 = vsel %vm1700, %v2104, -inf
      %v2186 = vmax.f32 %v2103, %v2185
      %2187 = vmax.xlane.f32.xlu0 %v2186
      %v2188 = vpop.xlane.xlu0 %2187
      %v2189 = vsel %vm1700, %v2106, -inf
      %v2190 = vmax.f32 %v2105, %v2189
      %2191 = vmax.xlane.f32.xlu0 %v2190
      %v2192 = vpop.xlane.xlu0 %2191
      %v2193 = vsel %vm1700, %v2108, -inf
      %v2194 = vmax.f32 %v2107, %v2193
      %2195 = vmax.xlane.f32.xlu0 %v2194
      %v2196 = vpop.xlane.xlu0 %2195
      %v2197 = vsel %vm1700, %v2110, -inf
      %v2198 = vmax.f32 %v2109, %v2197
      %2199 = vmax.xlane.f32.xlu0 %v2198
      %v2200 = vpop.xlane.xlu0 %2199
      %v2201 = vsel %vm1700, %v2112, -inf
      %v2202 = vmax.f32 %v2111, %v2201
      %2203 = vmax.xlane.f32.xlu0 %v2202
      %v2204 = vpop.xlane.xlu0 %2203
      %v2205 = vsel %vm1700, %v2114, -inf
      %v2206 = vmax.f32 %v2113, %v2205
      %2207 = vmax.xlane.f32.xlu0 %v2206
      %v2208 = vpop.xlane.xlu0 %2207
      %v2209 = vsel %vm1700, %v2116, -inf
      %v2210 = vmax.f32 %v2115, %v2209
      %2211 = vmax.xlane.f32.xlu0 %v2210
      %v2212 = vpop.xlane.xlu0 %2211
      %v2213 = vsel %vm1700, %v2118, -inf
      %v2214 = vmax.f32 %v2117, %v2213
      %2215 = vmax.xlane.f32.xlu0 %v2214
      %v2216 = vpop.xlane.xlu0 %2215
      %v2217 = vsel %vm1803, %v2119, -inf
      %vm2218 = vcmask 551936
      %v2219 = vsel %vm2218, %v2120, -inf
      %v2220 = vmax.f32 %v2217, %v2219
      %2221 = vmax.xlane.f32.xlu0 %v2220
      %v2222 = vpop.xlane.xlu0 %2221
      %v2223 = vsub.f32 %v2071, %v2124
      %v2224 = vsub.f32 %v2072, %v2124
      %v2225 = vsub.f32 %v2073, %v2128
      %v2226 = vsub.f32 %v2074, %v2128
      %v2227 = vsub.f32 %v2075, %v2132
      %v2228 = vsub.f32 %v2076, %v2132
      %v2229 = vsub.f32 %v2077, %v2136
      %v2230 = vsub.f32 %v2078, %v2136
      %v2231 = vsub.f32 %v2079, %v2140
      %v2232 = vsub.f32 %v2080, %v2140
      %v2233 = vsub.f32 %v2081, %v2144
      %v2234 = vsub.f32 %v2082, %v2144
      %v2235 = vsub.f32 %v2083, %v2148
      %v2236 = vsub.f32 %v2084, %v2148
      %v2237 = vsub.f32 %v2085, %v2152
      %v2238 = vsub.f32 %v2086, %v2152
      %v2239 = vsub.f32 %v2087, %v2156
      %v2240 = vsub.f32 %v2088, %v2156
      %v2241 = vsub.f32 %v2089, %v2160
      %v2242 = vsub.f32 %v2090, %v2160
      %v2243 = vsub.f32 %v2091, %v2164
      %v2244 = vsub.f32 %v2092, %v2164
      %v2245 = vsub.f32 %v2093, %v2168
      %v2246 = vsub.f32 %v2094, %v2168
      %v2247 = vsub.f32 %v2095, %v2172
      %v2248 = vsub.f32 %v2096, %v2172
      %v2249 = vsub.f32 %v2097, %v2176
      %v2250 = vsub.f32 %v2098, %v2176
      %v2251 = vsub.f32 %v2099, %v2180
      %v2252 = vsub.f32 %v2100, %v2180
      %v2253 = vsub.f32 %v2101, %v2184
      %v2254 = vsub.f32 %v2102, %v2184
      %v2255 = vsub.f32 %v2103, %v2188
      %v2256 = vsub.f32 %v2104, %v2188
      %v2257 = vsub.f32 %v2105, %v2192
      %v2258 = vsub.f32 %v2106, %v2192
      %v2259 = vsub.f32 %v2107, %v2196
      %v2260 = vsub.f32 %v2108, %v2196
      %v2261 = vsub.f32 %v2109, %v2200
      %v2262 = vsub.f32 %v2110, %v2200
      %v2263 = vsub.f32 %v2111, %v2204
      %v2264 = vsub.f32 %v2112, %v2204
      %v2265 = vsub.f32 %v2113, %v2208
      %v2266 = vsub.f32 %v2114, %v2208
      %v2267 = vsub.f32 %v2115, %v2212
      %v2268 = vsub.f32 %v2116, %v2212
      %v2269 = vsub.f32 %v2117, %v2216
      %v2270 = vsub.f32 %v2118, %v2216
      %v2271 = vsub.f32 %v2119, %v2222
      %v2272 = vsub.f32 %v2120, %v2222
      %v2273 = vmul.f32 %v2223, 1.442695
      %v2274 = vpow.pop %v2273
      %v2275 = vmul.f32 %v2224, 1.442695
      %v2276 = vpow.pop %v2275
      %v2277 = vmul.f32 %v2225, 1.442695
      %v2278 = vpow.pop %v2277
      %v2279 = vmul.f32 %v2226, 1.442695
      %v2280 = vpow.pop %v2279
      %v2281 = vmul.f32 %v2227, 1.442695
      %v2282 = vpow.pop %v2281
      %v2283 = vmul.f32 %v2228, 1.442695
      %v2284 = vpow.pop %v2283
      %v2285 = vmul.f32 %v2229, 1.442695
      %v2286 = vpow.pop %v2285
      %v2287 = vmul.f32 %v2230, 1.442695
      %v2288 = vpow.pop %v2287
      %v2289 = vmul.f32 %v2231, 1.442695
      %v2290 = vpow.pop %v2289
      %v2291 = vmul.f32 %v2232, 1.442695
      %v2292 = vpow.pop %v2291
      %v2293 = vmul.f32 %v2233, 1.442695
      %v2294 = vpow.pop %v2293
      %v2295 = vmul.f32 %v2234, 1.442695
      %v2296 = vpow.pop %v2295
      %v2297 = vmul.f32 %v2235, 1.442695
      %v2298 = vpow.pop %v2297
      %v2299 = vmul.f32 %v2236, 1.442695
      %v2300 = vpow.pop %v2299
      %v2301 = vmul.f32 %v2237, 1.442695
      %v2302 = vpow.pop %v2301
      %v2303 = vmul.f32 %v2238, 1.442695
      %v2304 = vpow.pop %v2303
      %v2305 = vmul.f32 %v2239, 1.442695
      %v2306 = vpow.pop %v2305
      %v2307 = vmul.f32 %v2240, 1.442695
      %v2308 = vpow.pop %v2307
      %v2309 = vmul.f32 %v2241, 1.442695
      %v2310 = vpow.pop %v2309
      %v2311 = vmul.f32 %v2242, 1.442695
      %v2312 = vpow.pop %v2311
      %v2313 = vmul.f32 %v2243, 1.442695
      %v2314 = vpow.pop %v2313
      %v2315 = vmul.f32 %v2244, 1.442695
      %v2316 = vpow.pop %v2315
      %v2317 = vmul.f32 %v2245, 1.442695
      %v2318 = vpow.pop %v2317
      %v2319 = vmul.f32 %v2246, 1.442695
      %v2320 = vpow.pop %v2319
      %v2321 = vmul.f32 %v2247, 1.442695
      %v2322 = vpow.pop %v2321
      %v2323 = vmul.f32 %v2248, 1.442695
      %v2324 = vpow.pop %v2323
      %v2325 = vmul.f32 %v2249, 1.442695
      %v2326 = vpow.pop %v2325
      %v2327 = vmul.f32 %v2250, 1.442695
      %v2328 = vpow.pop %v2327
      %v2329 = vmul.f32 %v2251, 1.442695
      %v2330 = vpow.pop %v2329
      %v2331 = vmul.f32 %v2252, 1.442695
      %v2332 = vpow.pop %v2331
      %v2333 = vmul.f32 %v2253, 1.442695
      %v2334 = vpow.pop %v2333
      %v2335 = vmul.f32 %v2254, 1.442695
      %v2336 = vpow.pop %v2335
      %v2337 = vmul.f32 %v2255, 1.442695
      %v2338 = vpow.pop %v2337
      %v2339 = vmul.f32 %v2256, 1.442695
      %v2340 = vpow.pop %v2339
      %v2341 = vmul.f32 %v2257, 1.442695
      %v2342 = vpow.pop %v2341
      %v2343 = vmul.f32 %v2258, 1.442695
      %v2344 = vpow.pop %v2343
      %v2345 = vmul.f32 %v2259, 1.442695
      %v2346 = vpow.pop %v2345
      %v2347 = vmul.f32 %v2260, 1.442695
      %v2348 = vpow.pop %v2347
      %v2349 = vmul.f32 %v2261, 1.442695
      %v2350 = vpow.pop %v2349
      %v2351 = vmul.f32 %v2262, 1.442695
      %v2352 = vpow.pop %v2351
      %v2353 = vmul.f32 %v2263, 1.442695
      %v2354 = vpow.pop %v2353
      %v2355 = vmul.f32 %v2264, 1.442695
      %v2356 = vpow.pop %v2355
      %v2357 = vmul.f32 %v2265, 1.442695
      %v2358 = vpow.pop %v2357
      %v2359 = vmul.f32 %v2266, 1.442695
      %v2360 = vpow.pop %v2359
      %v2361 = vmul.f32 %v2267, 1.442695
      %v2362 = vpow.pop %v2361
      %v2363 = vmul.f32 %v2268, 1.442695
      %v2364 = vpow.pop %v2363
      %v2365 = vmul.f32 %v2269, 1.442695
      %v2366 = vpow.pop %v2365
      %v2367 = vmul.f32 %v2270, 1.442695
      %v2368 = vpow.pop %v2367
      %v2369 = vmul.f32 %v2271, 1.442695
      %v2370 = vpow.pop %v2369
      %v2371 = vmul.f32 %v2272, 1.442695
      %v2372 = vpow.pop %v2371
      %v2373 = vsel %vm1700, %v2276, 0.0
      %v2374 = vadd.f32 %v2274, %v2373
      %2375 = vadd.xlane.f32.xlu0 %v2374
      %v2376 = vpop.xlane.xlu0 %2375
      %v2377 = vsel %vm1700, %v2280, 0.0
      %v2378 = vadd.f32 %v2278, %v2377
      %2379 = vadd.xlane.f32.xlu0 %v2378
      %v2380 = vpop.xlane.xlu0 %2379
      %v2381 = vsel %vm1700, %v2284, 0.0
      %v2382 = vadd.f32 %v2282, %v2381
      %2383 = vadd.xlane.f32.xlu0 %v2382
      %v2384 = vpop.xlane.xlu0 %2383
      %v2385 = vsel %vm1700, %v2288, 0.0
      %v2386 = vadd.f32 %v2286, %v2385
      %2387 = vadd.xlane.f32.xlu0 %v2386
      %v2388 = vpop.xlane.xlu0 %2387
      %v2389 = vsel %vm1700, %v2292, 0.0
      %v2390 = vadd.f32 %v2290, %v2389
      %2391 = vadd.xlane.f32.xlu0 %v2390
      %v2392 = vpop.xlane.xlu0 %2391
      %v2393 = vsel %vm1700, %v2296, 0.0
      %v2394 = vadd.f32 %v2294, %v2393
      %2395 = vadd.xlane.f32.xlu0 %v2394
      %v2396 = vpop.xlane.xlu0 %2395
      %v2397 = vsel %vm1700, %v2300, 0.0
      %v2398 = vadd.f32 %v2298, %v2397
      %2399 = vadd.xlane.f32.xlu0 %v2398
      %v2400 = vpop.xlane.xlu0 %2399
      %v2401 = vsel %vm1700, %v2304, 0.0
      %v2402 = vadd.f32 %v2302, %v2401
      %2403 = vadd.xlane.f32.xlu0 %v2402
      %v2404 = vpop.xlane.xlu0 %2403
      %v2405 = vsel %vm1700, %v2308, 0.0
      %v2406 = vadd.f32 %v2306, %v2405
      %2407 = vadd.xlane.f32.xlu0 %v2406
      %v2408 = vpop.xlane.xlu0 %2407
      %v2409 = vsel %vm1700, %v2312, 0.0
      %v2410 = vadd.f32 %v2310, %v2409
      %2411 = vadd.xlane.f32.xlu0 %v2410
      %v2412 = vpop.xlane.xlu0 %2411
      %v2413 = vsel %vm1700, %v2316, 0.0
      %v2414 = vadd.f32 %v2314, %v2413
      %2415 = vadd.xlane.f32.xlu0 %v2414
      %v2416 = vpop.xlane.xlu0 %2415
      %v2417 = vsel %vm1700, %v2320, 0.0
      %v2418 = vadd.f32 %v2318, %v2417
      %2419 = vadd.xlane.f32.xlu0 %v2418
      %v2420 = vpop.xlane.xlu0 %2419
      %v2421 = vsel %vm1700, %v2324, 0.0
      %v2422 = vadd.f32 %v2322, %v2421
      %2423 = vadd.xlane.f32.xlu0 %v2422
      %v2424 = vpop.xlane.xlu0 %2423
      %v2425 = vsel %vm1700, %v2328, 0.0
      %v2426 = vadd.f32 %v2326, %v2425
      %2427 = vadd.xlane.f32.xlu0 %v2426
      %v2428 = vpop.xlane.xlu0 %2427
      %v2429 = vsel %vm1700, %v2332, 0.0
      %v2430 = vadd.f32 %v2330, %v2429
      %2431 = vadd.xlane.f32.xlu0 %v2430
      %v2432 = vpop.xlane.xlu0 %2431
      %v2433 = vsel %vm1700, %v2336, 0.0
      %v2434 = vadd.f32 %v2334, %v2433
      %2435 = vadd.xlane.f32.xlu0 %v2434
      %v2436 = vpop.xlane.xlu0 %2435
      %v2437 = vsel %vm1700, %v2340, 0.0
      %v2438 = vadd.f32 %v2338, %v2437
      %2439 = vadd.xlane.f32.xlu0 %v2438
      %v2440 = vpop.xlane.xlu0 %2439
      %v2441 = vsel %vm1700, %v2344, 0.0
      %v2442 = vadd.f32 %v2342, %v2441
      %2443 = vadd.xlane.f32.xlu0 %v2442
      %v2444 = vpop.xlane.xlu0 %2443
      %v2445 = vsel %vm1700, %v2348, 0.0
      %v2446 = vadd.f32 %v2346, %v2445
      %2447 = vadd.xlane.f32.xlu0 %v2446
      %v2448 = vpop.xlane.xlu0 %2447
      %v2449 = vsel %vm1700, %v2352, 0.0
      %v2450 = vadd.f32 %v2350, %v2449
      %2451 = vadd.xlane.f32.xlu0 %v2450
      %v2452 = vpop.xlane.xlu0 %2451
      %v2453 = vsel %vm1700, %v2356, 0.0
      %v2454 = vadd.f32 %v2354, %v2453
      %2455 = vadd.xlane.f32.xlu0 %v2454
      %v2456 = vpop.xlane.xlu0 %2455
      %v2457 = vsel %vm1700, %v2360, 0.0
      %v2458 = vadd.f32 %v2358, %v2457
      %2459 = vadd.xlane.f32.xlu0 %v2458
      %v2460 = vpop.xlane.xlu0 %2459
      %v2461 = vsel %vm1700, %v2364, 0.0
      %v2462 = vadd.f32 %v2362, %v2461
      %2463 = vadd.xlane.f32.xlu0 %v2462
      %v2464 = vpop.xlane.xlu0 %2463
      %v2465 = vsel %vm1700, %v2368, 0.0
      %v2466 = vadd.f32 %v2366, %v2465
      %2467 = vadd.xlane.f32.xlu0 %v2466
      %v2468 = vpop.xlane.xlu0 %2467
      %v2469 = vsel %vm1803, %v2370, 0.0
      %v2470 = vsel %vm2218, %v2372, 0.0
      %v2471 = vadd.f32 %v2469, %v2470
      %2472 = vadd.xlane.f32.xlu0 %v2471
      %v2473 = vpop.xlane.xlu0 %2472
      %v2474 = vrcp.pop %v2376
      %v2475 = vrcp.pop %v2380
      %v2476 = vrcp.pop %v2384
      %v2477 = vrcp.pop %v2388
      %v2478 = vrcp.pop %v2392
      %v2479 = vrcp.pop %v2396
      %v2480 = vrcp.pop %v2400
      %v2481 = vrcp.pop %v2404
      %v2482 = vrcp.pop %v2408
      %v2483 = vrcp.pop %v2412
      %v2484 = vrcp.pop %v2416
      %v2485 = vrcp.pop %v2420
      %v2486 = vrcp.pop %v2424
      %v2487 = vrcp.pop %v2428
      %v2488 = vrcp.pop %v2432
      %v2489 = vrcp.pop %v2436
      %v2490 = vrcp.pop %v2440
      %v2491 = vrcp.pop %v2444
      %v2492 = vrcp.pop %v2448
      %v2493 = vrcp.pop %v2452
      %v2494 = vrcp.pop %v2456
      %v2495 = vrcp.pop %v2460
      %v2496 = vrcp.pop %v2464
      %v2497 = vrcp.pop %v2468
      %v2498 = vrcp.pop %v2473
      %v2499 = vmul.f32 %v2274, %v2474
      %v2500 = vmul.f32 %v2276, %v2474
      %v2501 = vmul.f32 %v2278, %v2475
      %v2502 = vmul.f32 %v2280, %v2475
      %v2503 = vmul.f32 %v2282, %v2476
      %v2504 = vmul.f32 %v2284, %v2476
      %v2505 = vmul.f32 %v2286, %v2477
      %v2506 = vmul.f32 %v2288, %v2477
      %v2507 = vmul.f32 %v2290, %v2478
      %v2508 = vmul.f32 %v2292, %v2478
      %v2509 = vmul.f32 %v2294, %v2479
      %v2510 = vmul.f32 %v2296, %v2479
      %v2511 = vmul.f32 %v2298, %v2480
      %v2512 = vmul.f32 %v2300, %v2480
      %v2513 = vmul.f32 %v2302, %v2481
      %v2514 = vmul.f32 %v2304, %v2481
      %v2515 = vmul.f32 %v2306, %v2482
      %v2516 = vmul.f32 %v2308, %v2482
      %v2517 = vmul.f32 %v2310, %v2483
      %v2518 = vmul.f32 %v2312, %v2483
      %v2519 = vmul.f32 %v2314, %v2484
      %v2520 = vmul.f32 %v2316, %v2484
      %v2521 = vmul.f32 %v2318, %v2485
      %v2522 = vmul.f32 %v2320, %v2485
      %v2523 = vmul.f32 %v2322, %v2486
      %v2524 = vmul.f32 %v2324, %v2486
      %v2525 = vmul.f32 %v2326, %v2487
      %v2526 = vmul.f32 %v2328, %v2487
      %v2527 = vmul.f32 %v2330, %v2488
      %v2528 = vmul.f32 %v2332, %v2488
      %v2529 = vmul.f32 %v2334, %v2489
      %v2530 = vmul.f32 %v2336, %v2489
      %v2531 = vmul.f32 %v2338, %v2490
      %v2532 = vmul.f32 %v2340, %v2490
      %v2533 = vmul.f32 %v2342, %v2491
      %v2534 = vmul.f32 %v2344, %v2491
      %v2535 = vmul.f32 %v2346, %v2492
      %v2536 = vmul.f32 %v2348, %v2492
      %v2537 = vmul.f32 %v2350, %v2493
      %v2538 = vmul.f32 %v2352, %v2493
      %v2539 = vmul.f32 %v2354, %v2494
      %v2540 = vmul.f32 %v2356, %v2494
      %v2541 = vmul.f32 %v2358, %v2495
      %v2542 = vmul.f32 %v2360, %v2495
      %v2543 = vmul.f32 %v2362, %v2496
      %v2544 = vmul.f32 %v2364, %v2496
      %v2545 = vmul.f32 %v2366, %v2497
      %v2546 = vmul.f32 %v2368, %v2497
      %v2547 = vmul.f32 %v2370, %v2498
      %v2548 = vmul.f32 %v2372, %v2498
      %v2549 = vpack.c.bf16 %v472, %v468
      %v2550 = vpack.c.bf16 %v474, %v470
      %v2551 = vpack.c.bf16 %v2501, %v2499
      %v2552 = vpack.c.bf16 %v2502, %v2500
      %v2553 = vpack.c.bf16 %v2505, %v2503
      %v2554 = vpack.c.bf16 %v2506, %v2504
      %v2555 = vpack.c.bf16 %v2509, %v2507
      %v2556 = vpack.c.bf16 %v2510, %v2508
      %v2557 = vpack.c.bf16 %v2513, %v2511
      %v2558 = vpack.c.bf16 %v2514, %v2512
      %v2559 = vpack.c.bf16 %v2517, %v2515
      %v2560 = vpack.c.bf16 %v2518, %v2516
      %v2561 = vpack.c.bf16 %v2521, %v2519
      %v2562 = vpack.c.bf16 %v2522, %v2520
      %v2563 = vpack.c.bf16 %v2525, %v2523
      %v2564 = vpack.c.bf16 %v2526, %v2524
      %v2565 = vpack.c.bf16 %v2529, %v2527
      %v2566 = vpack.c.bf16 %v2530, %v2528
      %v2567 = vpack.c.bf16 %v2533, %v2531
      %v2568 = vpack.c.bf16 %v2534, %v2532
      %v2569 = vpack.c.bf16 %v2537, %v2535
      %v2570 = vpack.c.bf16 %v2538, %v2536
      %v2571 = vpack.c.bf16 %v2541, %v2539
      %v2572 = vpack.c.bf16 %v2542, %v2540
      %v2573 = vpack.c.bf16 %v2545, %v2543
      %v2574 = vpack.c.bf16 %v2546, %v2544
      %v2575 = vpack.c.bf16 %v2547, %v2547
      %v2576 = vpack.c.bf16 %v2548, %v2548
      %v2578 = vsel %vm1700, %v2550, 0
      %v2581 = vsel %vm1700, %v2552, 0
      %v2584 = vsel %vm1700, %v2554, 0
      %v2587 = vsel %vm1700, %v2556, 0
      %v2590 = vsel %vm1700, %v2558, 0
      %v2593 = vsel %vm1700, %v2560, 0
      %v2596 = vsel %vm1700, %v2562, 0
      %v2599 = vsel %vm1700, %v2564, 0
      %v2602 = vsel %vm1700, %v2566, 0
      %v2605 = vsel %vm1700, %v2568, 0
      %v2608 = vsel %vm1700, %v2570, 0
      %v2611 = vsel %vm1700, %v2572, 0
      %v2614 = vsel %vm1700, %v2574, 0
      %v2617 = vsel %vm1700, %v2576, 0
      %2619 = vmatprep.subr.bf16.mxu0 %v2581
      %2620 = vmatpush1.bf16.xpose.msra.mxu0 %v2551
      %2621 = vmatprep.subr.bf16.mxu0 %v2584
      %2622 = vmatpush1.bf16.xpose.msra.mxu0 %v2553
      %2623 = vmatprep.subr.bf16.mxu0 %v2587
      %2624 = vmatpush1.bf16.xpose.msra.mxu0 %v2555
      %2625 = vmatprep.subr.bf16.mxu0 %v2590
      %2626 = vmatpush1.bf16.xpose.msra.mxu0 %v2557
      %2627 = vmatprep.subr.bf16.mxu0 %v2593
      %2628 = vmatpush1.bf16.xpose.msra.mxu0 %v2559
      %2629 = vmatprep.subr.bf16.mxu0 %v2596
      %2630 = vmatpush1.bf16.xpose.msra.mxu0 %v2561
      %2631 = vmatprep.subr.bf16.mxu0 %v2599
      %2632 = vmatpush1.bf16.xpose.msra.mxu0 %v2563
      %2633 = vmatprep.subr.bf16.mxu0 %v2602
      %2634 = vmatpush1.bf16.xpose.msra.mxu0 %v2565
      %2635 = vmatprep.subr.bf16.mxu0 %v2605
      %2636 = vmatpush1.bf16.xpose.msra.mxu0 %v2567
      %2637 = vmatprep.subr.bf16.mxu0 %v2608
      %2638 = vmatpush1.bf16.xpose.msra.mxu0 %v2569
      %2639 = vmatprep.subr.bf16.mxu0 %v2611
      %2640 = vmatpush1.bf16.xpose.msra.mxu0 %v2571
      %2641 = vmatprep.subr.bf16.mxu0 %v2614
      %2642 = vmatpush1.bf16.xpose.msra.mxu0 %v2573
      %2643 = vmatprep.subr.bf16.mxu0 %v2617
      %2644 = vmatpush1.bf16.xpose.msra.mxu0 %v2575
      %2645 = vmatprep.subr.bf16.mxu0 0
      %2646 = vmatpush1.bf16.xpose.msra.mxu0 0
      %2647 = vmatprep.subr.bf16.mxu0 0
      %2648 = vmatpush1.bf16.xpose.msra.mxu0 0
      %2649 = vmatprep.subr.bf16.mxu0 0
      %2650 = vmatpush1.bf16.xpose.msra.mxu0 0
      %2651 = vmatprep.mubr.bf16.mxu0 %v2578
      %2652 = vmatmul.mubr.bf16.gmra.mrb[0].mxu0 %v2549
      %v2653 = vpop.f32.mrb[0].mxu0
      %v2654 = vadd.f32 0.0, %v2653
      %v2655 = vpop.f32.mrb[0].mxu0
      %v2656 = vadd.f32 0.0, %v2655
      %v2657 = vpop.f32.mrb[0].mxu0
      %v2658 = vadd.f32 0.0, %v2657
      %v2659 = vpop.f32.mrb[0].mxu0
      %v2660 = vadd.f32 0.0, %v2659
      %2661 = vdwg.mxu0
      %v2662 = vpack.c.bf16 %v1725, %v1725
      %v2663 = vpack.c.bf16 %v1726, %v1726
      %v2664 = vpack.c.bf16 %v462, %v462
      %v2665 = vpack.c.bf16 %v464, %v464
      %2666 = vxpose.xlu0.c.b16.start [1/8] %v2662, 128
      %2667 = vxpose.xlu0.c.b16.cont [2/8] 0, 128
      %2668 = vxpose.xlu0.c.b16.cont [3/8] 0, 128
      %2669 = vxpose.xlu0.c.b16.cont [4/8] 0, 128
      %2670 = vxpose.xlu0.c.b16.cont [5/8] 0, 128
      %2671 = vxpose.xlu0.c.b16.cont [6/8] 0, 128
      %2672 = vxpose.xlu0.c.b16.cont [7/8] 0, 128
      %2673 = vxpose.xlu0.c.b16.end [8/8] 0, 128
      %v2674 = vpop.trf.xlu0
      %v2675 = vpop.trf.xlu0
      %v2676 = vpop.trf.xlu0
      %v2677 = vpop.trf.xlu0
      %v2678 = vpop.trf.xlu0
      %v2679 = vpop.trf.xlu0
      %v2680 = vpop.trf.xlu0
      %v2681 = vpop.trf.xlu0
      %2682 = vxpose.xlu0.c.b16.start [1/8] %v2663, 128
      %2683 = vxpose.xlu0.c.b16.cont [2/8] 0, 128
      %2684 = vxpose.xlu0.c.b16.cont [3/8] 0, 128
      %2685 = vxpose.xlu0.c.b16.cont [4/8] 0, 128
      %2686 = vxpose.xlu0.c.b16.cont [5/8] 0, 128
      %2687 = vxpose.xlu0.c.b16.cont [6/8] 0, 128
      %2688 = vxpose.xlu0.c.b16.cont [7/8] 0, 128
      %2689 = vxpose.xlu0.c.b16.end [8/8] 0, 128
      %v2690 = vpop.trf.xlu0
      %v2691 = vpop.trf.xlu0
      %v2692 = vpop.trf.xlu0
      %v2693 = vpop.trf.xlu0
      %v2694 = vpop.trf.xlu0
      %v2695 = vpop.trf.xlu0
      %v2696 = vpop.trf.xlu0
      %v2697 = vpop.trf.xlu0
      %v2699 = vsel %vm1763, %v2674, 0
      %v2702 = vsel %vm1763, %v2675, 0
      %v2705 = vsel %vm1763, %v2676, 0
      %v2708 = vsel %vm1763, %v2677, 0
      %v2711 = vsel %vm1763, %v2678, 0
      %v2714 = vsel %vm1763, %v2679, 0
      %v2717 = vsel %vm1763, %v2680, 0
      %v2720 = vsel %vm1763, %v2681, 0
      %v2723 = vsel %vm1763, %v2690, 0
      %v2726 = vsel %vm1763, %v2691, 0
      %v2729 = vsel %vm1763, %v2692, 0
      %v2732 = vsel %vm1763, %v2693, 0
      %v2735 = vsel %vm1763, %v2694, 0
      %v2738 = vsel %vm1803, %v2664, 0
      %v2741 = vsel %vm1803, %v2665, 0
      %2743 = vmatprep.subr.bf16.mxu0 %v2741
      %2744 = vmatpush1.bf16.msra.mxu0 %v2738
      %2745 = vmatprep.subr.bf16.mxu0 0
      %2746 = vmatpush1.bf16.msra.mxu0 0
      %2747 = vmatprep.subr.bf16.mxu0 0
      %2748 = vmatpush1.bf16.msra.mxu0 0
      %2749 = vmatprep.subr.bf16.mxu0 0
      %2750 = vmatpush1.bf16.msra.mxu0 0
      %2751 = vmatprep.subr.bf16.mxu0 0
      %2752 = vmatpush1.bf16.msra.mxu0 0
      %2753 = vmatprep.subr.bf16.mxu0 0
      %2754 = vmatpush1.bf16.msra.mxu0 0
      %2755 = vmatprep.subr.bf16.mxu0 0
      %2756 = vmatpush1.bf16.msra.mxu0 0
      %2757 = vmatprep.subr.bf16.mxu0 0
      %2758 = vmatpush1.bf16.msra.mxu0 0
      %2759 = vmatprep.subr.bf16.mxu0 0
      %2760 = vmatpush1.bf16.msra.mxu0 0
      %2761 = vmatprep.subr.bf16.mxu0 0
      %2762 = vmatpush1.bf16.msra.mxu0 0
      %2763 = vmatprep.subr.bf16.mxu0 0
      %2764 = vmatpush1.bf16.msra.mxu0 0
      %2765 = vmatprep.subr.bf16.mxu0 0
      %2766 = vmatpush1.bf16.msra.mxu0 0
      %2767 = vmatprep.subr.bf16.mxu0 0
      %2768 = vmatpush1.bf16.msra.mxu0 0
      %2769 = vmatprep.subr.bf16.mxu0 0
      %2770 = vmatpush1.bf16.msra.mxu0 0
      %2771 = vmatprep.subr.bf16.mxu0 0
      %2772 = vmatpush1.bf16.msra.mxu0 0
      %2773 = vmatprep.subr.bf16.mxu0 0
      %2774 = vmatpush1.bf16.msra.mxu0 0
      %2775 = vmatprep.mubr.bf16.mxu0 0
      %2776 = vmatmul.mubr.bf16.gmra.mrb[0].mxu0 %v2699
      %v2777 = vpop.f32.mrb[0].mxu0
      %v2778 = vadd.f32 0.0, %v2777
      %v2779 = vpop.f32.mrb[0].mxu0
      %v2780 = vadd.f32 0.0, %v2779
      %v2781 = vpop.f32.mrb[0].mxu0
      %v2782 = vadd.f32 0.0, %v2781
      %v2783 = vpop.f32.mrb[0].mxu0
      %v2784 = vadd.f32 0.0, %v2783
      %2785 = vmatprep.mubr.bf16.mxu0 0
      %2786 = vmatmul.mubr.bf16.gmra.mrb[0].mxu0 %v2702
      %v2787 = vpop.f32.mrb[0].mxu0
      %v2788 = vadd.f32 0.0, %v2787
      %v2789 = vpop.f32.mrb[0].mxu0
      %v2790 = vadd.f32 0.0, %v2789
      %v2791 = vpop.f32.mrb[0].mxu0
      %v2792 = vadd.f32 0.0, %v2791
      %v2793 = vpop.f32.mrb[0].mxu0
      %v2794 = vadd.f32 0.0, %v2793
      %2795 = vmatprep.mubr.bf16.mxu0 0
      %2796 = vmatmul.mubr.bf16.gmra.mrb[0].mxu0 %v2705
      %v2797 = vpop.f32.mrb[0].mxu0
      %v2798 = vadd.f32 0.0, %v2797
      %v2799 = vpop.f32.mrb[0].mxu0
      %v2800 = vadd.f32 0.0, %v2799
      %v2801 = vpop.f32.mrb[0].mxu0
      %v2802 = vadd.f32 0.0, %v2801
      %v2803 = vpop.f32.mrb[0].mxu0
      %v2804 = vadd.f32 0.0, %v2803
      %2805 = vmatprep.mubr.bf16.mxu0 0
      %2806 = vmatmul.mubr.bf16.gmra.mrb[0].mxu0 %v2708
      %v2807 = vpop.f32.mrb[0].mxu0
      %v2808 = vadd.f32 0.0, %v2807
      %v2809 = vpop.f32.mrb[0].mxu0
      %v2810 = vadd.f32 0.0, %v2809
      %v2811 = vpop.f32.mrb[0].mxu0
      %v2812 = vadd.f32 0.0, %v2811
      %v2813 = vpop.f32.mrb[0].mxu0
      %v2814 = vadd.f32 0.0, %v2813
      %2815 = vmatprep.mubr.bf16.mxu0 0
      %2816 = vmatmul.mubr.bf16.gmra.mrb[0].mxu0 %v2711
      %v2817 = vpop.f32.mrb[0].mxu0
      %v2818 = vadd.f32 0.0, %v2817
      %v2819 = vpop.f32.mrb[0].mxu0
      %v2820 = vadd.f32 0.0, %v2819
      %v2821 = vpop.f32.mrb[0].mxu0
      %v2822 = vadd.f32 0.0, %v2821
      %v2823 = vpop.f32.mrb[0].mxu0
      %v2824 = vadd.f32 0.0, %v2823
      %2825 = vmatprep.mubr.bf16.mxu0 0
      %2826 = vmatmul.mubr.bf16.gmra.mrb[0].mxu0 %v2714
      %v2827 = vpop.f32.mrb[0].mxu0
      %v2828 = vadd.f32 0.0, %v2827
      %v2829 = vpop.f32.mrb[0].mxu0
      %v2830 = vadd.f32 0.0, %v2829
      %v2831 = vpop.f32.mrb[0].mxu0
      %v2832 = vadd.f32 0.0, %v2831
      %v2833 = vpop.f32.mrb[0].mxu0
      %v2834 = vadd.f32 0.0, %v2833
      %2835 = vmatprep.mubr.bf16.mxu0 0
      %2836 = vmatmul.mubr.bf16.gmra.mrb[0].mxu0 %v2717
      %v2837 = vpop.f32.mrb[0].mxu0
      %v2838 = vadd.f32 0.0, %v2837
      %v2839 = vpop.f32.mrb[0].mxu0
      %v2840 = vadd.f32 0.0, %v2839
      %v2841 = vpop.f32.mrb[0].mxu0
      %v2842 = vadd.f32 0.0, %v2841
      %v2843 = vpop.f32.mrb[0].mxu0
      %v2844 = vadd.f32 0.0, %v2843
      %2845 = vmatprep.mubr.bf16.mxu0 0
      %2846 = vmatmul.mubr.bf16.gmra.mrb[0].mxu0 %v2720
      %v2847 = vpop.f32.mrb[0].mxu0
      %v2848 = vadd.f32 0.0, %v2847
      %v2849 = vpop.f32.mrb[0].mxu0
      %v2850 = vadd.f32 0.0, %v2849
      %v2851 = vpop.f32.mrb[0].mxu0
      %v2852 = vadd.f32 0.0, %v2851
      %v2853 = vpop.f32.mrb[0].mxu0
      %v2854 = vadd.f32 0.0, %v2853
      %2855 = vmatprep.mubr.bf16.mxu0 0
      %2856 = vmatmul.mubr.bf16.gmra.mrb[0].mxu0 %v2723
      %v2857 = vpop.f32.mrb[0].mxu0
      %v2858 = vadd.f32 0.0, %v2857
      %v2859 = vpop.f32.mrb[0].mxu0
      %v2860 = vadd.f32 0.0, %v2859
      %v2861 = vpop.f32.mrb[0].mxu0
      %v2862 = vadd.f32 0.0, %v2861
      %v2863 = vpop.f32.mrb[0].mxu0
      %v2864 = vadd.f32 0.0, %v2863
      %2865 = vmatprep.mubr.bf16.mxu0 0
      %2866 = vmatmul.mubr.bf16.gmra.mrb[0].mxu0 %v2726
      %v2867 = vpop.f32.mrb[0].mxu0
      %v2868 = vadd.f32 0.0, %v2867
      %v2869 = vpop.f32.mrb[0].mxu0
      %v2870 = vadd.f32 0.0, %v2869
      %v2871 = vpop.f32.mrb[0].mxu0
      %v2872 = vadd.f32 0.0, %v2871
      %v2873 = vpop.f32.mrb[0].mxu0
      %v2874 = vadd.f32 0.0, %v2873
      %2875 = vmatprep.mubr.bf16.mxu0 0
      %2876 = vmatmul.mubr.bf16.gmra.mrb[0].mxu0 %v2729
      %v2877 = vpop.f32.mrb[0].mxu0
      %v2878 = vadd.f32 0.0, %v2877
      %v2879 = vpop.f32.mrb[0].mxu0
      %v2880 = vadd.f32 0.0, %v2879
      %v2881 = vpop.f32.mrb[0].mxu0
      %v2882 = vadd.f32 0.0, %v2881
      %v2883 = vpop.f32.mrb[0].mxu0
      %v2884 = vadd.f32 0.0, %v2883
      %2885 = vmatprep.mubr.bf16.mxu0 0
      %2886 = vmatmul.mubr.bf16.gmra.mrb[0].mxu0 %v2732
      %v2887 = vpop.f32.mrb[0].mxu0
      %v2888 = vadd.f32 0.0, %v2887
      %v2889 = vpop.f32.mrb[0].mxu0
      %v2890 = vadd.f32 0.0, %v2889
      %v2891 = vpop.f32.mrb[0].mxu0
      %v2892 = vadd.f32 0.0, %v2891
      %v2893 = vpop.f32.mrb[0].mxu0
      %v2894 = vadd.f32 0.0, %v2893
      %2895 = vmatprep.mubr.bf16.mxu0 0
      %2896 = vmatmul.mubr.bf16.gmra.mrb[0].mxu0 %v2735
      %v2897 = vpop.f32.mrb[0].mxu0
      %v2898 = vadd.f32 0.0, %v2897
      %v2899 = vpop.f32.mrb[0].mxu0
      %v2900 = vadd.f32 0.0, %v2899
      %v2901 = vpop.f32.mrb[0].mxu0
      %v2902 = vpop.f32.mrb[0].mxu0
      %2903 = vdwg.mxu0
      %v2904 = vmul.f32 %v2778, 0.35355338
      %v2905 = vmul.f32 %v2780, 0.35355338
      %v2906 = vmul.f32 %v2782, 0.35355338
      %v2907 = vmul.f32 %v2784, 0.35355338
      %v2908 = vmul.f32 %v2788, 0.35355338
      %v2909 = vmul.f32 %v2790, 0.35355338
      %v2910 = vmul.f32 %v2792, 0.35355338
      %v2911 = vmul.f32 %v2794, 0.35355338
      %v2912 = vmul.f32 %v2798, 0.35355338
      %v2913 = vmul.f32 %v2800, 0.35355338
      %v2914 = vmul.f32 %v2802, 0.35355338
      %v2915 = vmul.f32 %v2804, 0.35355338
      %v2916 = vmul.f32 %v2808, 0.35355338
      %v2917 = vmul.f32 %v2810, 0.35355338
      %v2918 = vmul.f32 %v2812, 0.35355338
      %v2919 = vmul.f32 %v2814, 0.35355338
      %v2920 = vmul.f32 %v2818, 0.35355338
      %v2921 = vmul.f32 %v2820, 0.35355338
      %v2922 = vmul.f32 %v2822, 0.35355338
      %v2923 = vmul.f32 %v2824, 0.35355338
      %v2924 = vmul.f32 %v2828, 0.35355338
      %v2925 = vmul.f32 %v2830, 0.35355338
      %v2926 = vmul.f32 %v2832, 0.35355338
      %v2927 = vmul.f32 %v2834, 0.35355338
      %v2928 = vmul.f32 %v2838, 0.35355338
      %v2929 = vmul.f32 %v2840, 0.35355338
      %v2930 = vmul.f32 %v2842, 0.35355338
      %v2931 = vmul.f32 %v2844, 0.35355338
      %v2932 = vmul.f32 %v2848, 0.35355338
      %v2933 = vmul.f32 %v2850, 0.35355338
      %v2934 = vmul.f32 %v2852, 0.35355338
      %v2935 = vmul.f32 %v2854, 0.35355338
      %v2936 = vmul.f32 %v2858, 0.35355338
      %v2937 = vmul.f32 %v2860, 0.35355338
      %v2938 = vmul.f32 %v2862, 0.35355338
      %v2939 = vmul.f32 %v2864, 0.35355338
      %v2940 = vmul.f32 %v2868, 0.35355338
      %v2941 = vmul.f32 %v2870, 0.35355338
      %v2942 = vmul.f32 %v2872, 0.35355338
      %v2943 = vmul.f32 %v2874, 0.35355338
      %v2944 = vmul.f32 %v2878, 0.35355338
      %v2945 = vmul.f32 %v2880, 0.35355338
      %v2946 = vmul.f32 %v2882, 0.35355338
      %v2947 = vmul.f32 %v2884, 0.35355338
      %v2948 = vmul.f32 %v2888, 0.35355338
      %v2949 = vmul.f32 %v2890, 0.35355338
      %v2950 = vmul.f32 %v2892, 0.35355338
      %v2951 = vmul.f32 %v2894, 0.35355338
      %v2952 = vmul.f32 %v2898, 0.35355338
      %v2953 = vmul.f32 %v2900, 0.35355338
      %s2954 = scalar_lea.vmem %s6, 400
      %v2955 = vld [vmem:[%s2954] sm:$0xff]
      %v2956 = vld [vmem:[%s2954 + $0x8] sm:$0xff]
      %v2957 = vld [vmem:[%s2954 + $0x10] sm:$0xff]
      %v2958 = vld [vmem:[%s2954 + $0x18] sm:$0xff]
      %v2959 = vld [vmem:[%s2954 + $0x20] sm:$0xff]
      %v2960 = vld [vmem:[%s2954 + $0x28] sm:$0xff]
      %v2961 = vld [vmem:[%s2954 + $0x30] sm:$0xff]
      %v2962 = vld [vmem:[%s2954 + $0x38] sm:$0xff]
      %v2963 = vld [vmem:[%s2954 + $0x40] sm:$0xff]
      %v2964 = vld [vmem:[%s2954 + $0x48] sm:$0xff]
      %v2965 = vld [vmem:[%s2954 + $0x50] sm:$0xff]
      %v2966 = vld [vmem:[%s2954 + $0x58] sm:$0xff]
      %v2967 = vld [vmem:[%s2954 + $0x60] sm:$0xff]
      %v2968 = vld [vmem:[%s2954 + $0x68] sm:$0xff]
      %v2969 = vld [vmem:[%s2954 + $0x70] sm:$0xff]
      %v2970 = vld [vmem:[%s2954 + $0x78] sm:$0xff]
      %v2971 = vld [vmem:[%s2954 + $0x80] sm:$0xff]
      %v2972 = vld [vmem:[%s2954 + $0x88] sm:$0xff]
      %v2973 = vld [vmem:[%s2954 + $0x90] sm:$0xff]
      %v2974 = vld [vmem:[%s2954 + $0x98] sm:$0xff]
      %v2975 = vld [vmem:[%s2954 + $0xa0] sm:$0xff]
      %v2976 = vld [vmem:[%s2954 + $0xa8] sm:$0xff]
      %v2977 = vld [vmem:[%s2954 + $0xb0] sm:$0xff]
      %v2978 = vld [vmem:[%s2954 + $0xb8] sm:$0xff]
      %v2979 = vld [vmem:[%s2954 + $0xc0] sm:$0xff]
      %v2980 = vld [vmem:[%s2954 + $0xc8] sm:$0xff]
      %v2981 = vld [vmem:[%s2954 + $0xd0] sm:$0xff]
      %v2982 = vld [vmem:[%s2954 + $0xd8] sm:$0xff]
      %v2983 = vld [vmem:[%s2954 + $0xe0] sm:$0xff]
      %v2984 = vld [vmem:[%s2954 + $0xe8] sm:$0xff]
      %v2985 = vld [vmem:[%s2954 + $0xf0] sm:$0xff]
      %v2986 = vld [vmem:[%s2954 + $0xf8] sm:$0xff]
      %v2987 = vld [vmem:[%s2954 + $0x100] sm:$0xff]
      %v2988 = vld [vmem:[%s2954 + $0x108] sm:$0xff]
      %v2989 = vld [vmem:[%s2954 + $0x110] sm:$0xff]
      %v2990 = vld [vmem:[%s2954 + $0x118] sm:$0xff]
      %v2991 = vld [vmem:[%s2954 + $0x120] sm:$0xff]
      %v2992 = vld [vmem:[%s2954 + $0x128] sm:$0xff]
      %v2993 = vld [vmem:[%s2954 + $0x130] sm:$0xff]
      %v2994 = vld [vmem:[%s2954 + $0x138] sm:$0xff]
      %v2995 = vld [vmem:[%s2954 + $0x140] sm:$0xff]
      %v2996 = vld [vmem:[%s2954 + $0x148] sm:$0xff]
      %v2997 = vld [vmem:[%s2954 + $0x150] sm:$0xff]
      %v2998 = vld [vmem:[%s2954 + $0x158] sm:$0xff]
      %v2999 = vld [vmem:[%s2954 + $0x160] sm:$0xff]
      %v3000 = vld [vmem:[%s2954 + $0x168] sm:$0xff]
      %v3001 = vld [vmem:[%s2954 + $0x170] sm:$0xff]
      %v3002 = vld [vmem:[%s2954 + $0x178] sm:$0xff]
      %v3003 = vld [vmem:[%s2954 + $0x180] sm:$0xf]
      %v3004 = vld [vmem:[%s2954 + $0x188] sm:$0xf]
      %v3005 = vadd.f32 %v2904, %v2955
      %v3006 = vadd.f32 %v2905, %v2956
      %v3007 = vadd.f32 %v2906, %v2957
      %v3008 = vadd.f32 %v2907, %v2958
      %v3009 = vadd.f32 %v2908, %v2959
      %v3010 = vadd.f32 %v2909, %v2960
      %v3011 = vadd.f32 %v2910, %v2961
      %v3012 = vadd.f32 %v2911, %v2962
      %v3013 = vadd.f32 %v2912, %v2963
      %v3014 = vadd.f32 %v2913, %v2964
      %v3015 = vadd.f32 %v2914, %v2965
      %v3016 = vadd.f32 %v2915, %v2966
      %v3017 = vadd.f32 %v2916, %v2967
      %v3018 = vadd.f32 %v2917, %v2968
      %v3019 = vadd.f32 %v2918, %v2969
      %v3020 = vadd.f32 %v2919, %v2970
      %v3021 = vadd.f32 %v2920, %v2971
      %v3022 = vadd.f32 %v2921, %v2972
      %v3023 = vadd.f32 %v2922, %v2973
      %v3024 = vadd.f32 %v2923, %v2974
      %v3025 = vadd.f32 %v2924, %v2975
      %v3026 = vadd.f32 %v2925, %v2976
      %v3027 = vadd.f32 %v2926, %v2977
      %v3028 = vadd.f32 %v2927, %v2978
      %v3029 = vadd.f32 %v2928, %v2979
      %v3030 = vadd.f32 %v2929, %v2980
      %v3031 = vadd.f32 %v2930, %v2981
      %v3032 = vadd.f32 %v2931, %v2982
      %v3033 = vadd.f32 %v2932, %v2983
      %v3034 = vadd.f32 %v2933, %v2984
      %v3035 = vadd.f32 %v2934, %v2985
      %v3036 = vadd.f32 %v2935, %v2986
      %v3037 = vadd.f32 %v2936, %v2987
      %v3038 = vadd.f32 %v2937, %v2988
      %v3039 = vadd.f32 %v2938, %v2989
      %v3040 = vadd.f32 %v2939, %v2990
      %v3041 = vadd.f32 %v2940, %v2991
      %v3042 = vadd.f32 %v2941, %v2992
      %v3043 = vadd.f32 %v2942, %v2993
      %v3044 = vadd.f32 %v2943, %v2994
      %v3045 = vadd.f32 %v2944, %v2995
      %v3046 = vadd.f32 %v2945, %v2996
      %v3047 = vadd.f32 %v2946, %v2997
      %v3048 = vadd.f32 %v2947, %v2998
      %v3049 = vadd.f32 %v2948, %v2999
      %v3050 = vadd.f32 %v2949, %v3000
      %v3051 = vadd.f32 %v2950, %v3001
      %v3052 = vadd.f32 %v2951, %v3002
      %v3053 = vadd.f32 %v2952, %v3003
      %v3054 = vadd.f32 %v2953, %v3004
      %v3055 = vsel %vm1700, %v3006, -inf
      %v3056 = vmax.f32 %v3005, %v3055
      %3057 = vmax.xlane.f32.xlu0 %v3056
      %v3058 = vpop.xlane.xlu0 %3057
      %v3059 = vsel %vm1700, %v3008, -inf
      %v3060 = vmax.f32 %v3007, %v3059
      %3061 = vmax.xlane.f32.xlu0 %v3060
      %v3062 = vpop.xlane.xlu0 %3061
      %v3063 = vsel %vm1700, %v3010, -inf
      %v3064 = vmax.f32 %v3009, %v3063
      %3065 = vmax.xlane.f32.xlu0 %v3064
      %v3066 = vpop.xlane.xlu0 %3065
      %v3067 = vsel %vm1700, %v3012, -inf
      %v3068 = vmax.f32 %v3011, %v3067
      %3069 = vmax.xlane.f32.xlu0 %v3068
      %v3070 = vpop.xlane.xlu0 %3069
      %v3071 = vsel %vm1700, %v3014, -inf
      %v3072 = vmax.f32 %v3013, %v3071
      %3073 = vmax.xlane.f32.xlu0 %v3072
      %v3074 = vpop.xlane.xlu0 %3073
      %v3075 = vsel %vm1700, %v3016, -inf
      %v3076 = vmax.f32 %v3015, %v3075
      %3077 = vmax.xlane.f32.xlu0 %v3076
      %v3078 = vpop.xlane.xlu0 %3077
      %v3079 = vsel %vm1700, %v3018, -inf
      %v3080 = vmax.f32 %v3017, %v3079
      %3081 = vmax.xlane.f32.xlu0 %v3080
      %v3082 = vpop.xlane.xlu0 %3081
      %v3083 = vsel %vm1700, %v3020, -inf
      %v3084 = vmax.f32 %v3019, %v3083
      %3085 = vmax.xlane.f32.xlu0 %v3084
      %v3086 = vpop.xlane.xlu0 %3085
      %v3087 = vsel %vm1700, %v3022, -inf
      %v3088 = vmax.f32 %v3021, %v3087
      %3089 = vmax.xlane.f32.xlu0 %v3088
      %v3090 = vpop.xlane.xlu0 %3089
      %v3091 = vsel %vm1700, %v3024, -inf
      %v3092 = vmax.f32 %v3023, %v3091
      %3093 = vmax.xlane.f32.xlu0 %v3092
      %v3094 = vpop.xlane.xlu0 %3093
      %v3095 = vsel %vm1700, %v3026, -inf
      %v3096 = vmax.f32 %v3025, %v3095
      %3097 = vmax.xlane.f32.xlu0 %v3096
      %v3098 = vpop.xlane.xlu0 %3097
      %v3099 = vsel %vm1700, %v3028, -inf
      %v3100 = vmax.f32 %v3027, %v3099
      %3101 = vmax.xlane.f32.xlu0 %v3100
      %v3102 = vpop.xlane.xlu0 %3101
      %v3103 = vsel %vm1700, %v3030, -inf
      %v3104 = vmax.f32 %v3029, %v3103
      %3105 = vmax.xlane.f32.xlu0 %v3104
      %v3106 = vpop.xlane.xlu0 %3105
      %v3107 = vsel %vm1700, %v3032, -inf
      %v3108 = vmax.f32 %v3031, %v3107
      %3109 = vmax.xlane.f32.xlu0 %v3108
      %v3110 = vpop.xlane.xlu0 %3109
      %v3111 = vsel %vm1700, %v3034, -inf
      %v3112 = vmax.f32 %v3033, %v3111
      %3113 = vmax.xlane.f32.xlu0 %v3112
      %v3114 = vpop.xlane.xlu0 %3113
      %v3115 = vsel %vm1700, %v3036, -inf
      %v3116 = vmax.f32 %v3035, %v3115
      %3117 = vmax.xlane.f32.xlu0 %v3116
      %v3118 = vpop.xlane.xlu0 %3117
      %v3119 = vsel %vm1700, %v3038, -inf
      %v3120 = vmax.f32 %v3037, %v3119
      %3121 = vmax.xlane.f32.xlu0 %v3120
      %v3122 = vpop.xlane.xlu0 %3121
      %v3123 = vsel %vm1700, %v3040, -inf
      %v3124 = vmax.f32 %v3039, %v3123
      %3125 = vmax.xlane.f32.xlu0 %v3124
      %v3126 = vpop.xlane.xlu0 %3125
      %v3127 = vsel %vm1700, %v3042, -inf
      %v3128 = vmax.f32 %v3041, %v3127
      %3129 = vmax.xlane.f32.xlu0 %v3128
      %v3130 = vpop.xlane.xlu0 %3129
      %v3131 = vsel %vm1700, %v3044, -inf
      %v3132 = vmax.f32 %v3043, %v3131
      %3133 = vmax.xlane.f32.xlu0 %v3132
      %v3134 = vpop.xlane.xlu0 %3133
      %v3135 = vsel %vm1700, %v3046, -inf
      %v3136 = vmax.f32 %v3045, %v3135
      %3137 = vmax.xlane.f32.xlu0 %v3136
      %v3138 = vpop.xlane.xlu0 %3137
      %v3139 = vsel %vm1700, %v3048, -inf
      %v3140 = vmax.f32 %v3047, %v3139
      %3141 = vmax.xlane.f32.xlu0 %v3140
      %v3142 = vpop.xlane.xlu0 %3141
      %v3143 = vsel %vm1700, %v3050, -inf
      %v3144 = vmax.f32 %v3049, %v3143
      %3145 = vmax.xlane.f32.xlu0 %v3144
      %v3146 = vpop.xlane.xlu0 %3145
      %v3147 = vsel %vm1700, %v3052, -inf
      %v3148 = vmax.f32 %v3051, %v3147
      %3149 = vmax.xlane.f32.xlu0 %v3148
      %v3150 = vpop.xlane.xlu0 %3149
      %v3151 = vsel %vm1803, %v3053, -inf
      %v3152 = vsel %vm2218, %v3054, -inf
      %v3153 = vmax.f32 %v3151, %v3152
      %3154 = vmax.xlane.f32.xlu0 %v3153
      %v3155 = vpop.xlane.xlu0 %3154
      %v3156 = vsub.f32 %v3005, %v3058
      %v3157 = vsub.f32 %v3006, %v3058
      %v3158 = vsub.f32 %v3007, %v3062
      %v3159 = vsub.f32 %v3008, %v3062
      %v3160 = vsub.f32 %v3009, %v3066
      %v3161 = vsub.f32 %v3010, %v3066
      %v3162 = vsub.f32 %v3011, %v3070
      %v3163 = vsub.f32 %v3012, %v3070
      %v3164 = vsub.f32 %v3013, %v3074
      %v3165 = vsub.f32 %v3014, %v3074
      %v3166 = vsub.f32 %v3015, %v3078
      %v3167 = vsub.f32 %v3016, %v3078
      %v3168 = vsub.f32 %v3017, %v3082
      %v3169 = vsub.f32 %v3018, %v3082
      %v3170 = vsub.f32 %v3019, %v3086
      %v3171 = vsub.f32 %v3020, %v3086
      %v3172 = vsub.f32 %v3021, %v3090
      %v3173 = vsub.f32 %v3022, %v3090
      %v3174 = vsub.f32 %v3023, %v3094
      %v3175 = vsub.f32 %v3024, %v3094
      %v3176 = vsub.f32 %v3025, %v3098
      %v3177 = vsub.f32 %v3026, %v3098
      %v3178 = vsub.f32 %v3027, %v3102
      %v3179 = vsub.f32 %v3028, %v3102
      %v3180 = vsub.f32 %v3029, %v3106
      %v3181 = vsub.f32 %v3030, %v3106
      %v3182 = vsub.f32 %v3031, %v3110
      %v3183 = vsub.f32 %v3032, %v3110
      %v3184 = vsub.f32 %v3033, %v3114
      %v3185 = vsub.f32 %v3034, %v3114
      %v3186 = vsub.f32 %v3035, %v3118
      %v3187 = vsub.f32 %v3036, %v3118
      %v3188 = vsub.f32 %v3037, %v3122
      %v3189 = vsub.f32 %v3038, %v3122
      %v3190 = vsub.f32 %v3039, %v3126
      %v3191 = vsub.f32 %v3040, %v3126
      %v3192 = vsub.f32 %v3041, %v3130
      %v3193 = vsub.f32 %v3042, %v3130
      %v3194 = vsub.f32 %v3043, %v3134
      %v3195 = vsub.f32 %v3044, %v3134
      %v3196 = vsub.f32 %v3045, %v3138
      %v3197 = vsub.f32 %v3046, %v3138
      %v3198 = vsub.f32 %v3047, %v3142
      %v3199 = vsub.f32 %v3048, %v3142
      %v3200 = vsub.f32 %v3049, %v3146
      %v3201 = vsub.f32 %v3050, %v3146
      %v3202 = vsub.f32 %v3051, %v3150
      %v3203 = vsub.f32 %v3052, %v3150
      %v3204 = vsub.f32 %v3053, %v3155
      %v3205 = vsub.f32 %v3054, %v3155
      %v3206 = vmul.f32 %v3156, 1.442695
      %v3207 = vpow.pop %v3206
      %v3208 = vmul.f32 %v3157, 1.442695
      %v3209 = vpow.pop %v3208
      %v3210 = vmul.f32 %v3158, 1.442695
      %v3211 = vpow.pop %v3210
      %v3212 = vmul.f32 %v3159, 1.442695
      %v3213 = vpow.pop %v3212
      %v3214 = vmul.f32 %v3160, 1.442695
      %v3215 = vpow.pop %v3214
      %v3216 = vmul.f32 %v3161, 1.442695
      %v3217 = vpow.pop %v3216
      %v3218 = vmul.f32 %v3162, 1.442695
      %v3219 = vpow.pop %v3218
      %v3220 = vmul.f32 %v3163, 1.442695
      %v3221 = vpow.pop %v3220
      %v3222 = vmul.f32 %v3164, 1.442695
      %v3223 = vpow.pop %v3222
      %v3224 = vmul.f32 %v3165, 1.442695
      %v3225 = vpow.pop %v3224
      %v3226 = vmul.f32 %v3166, 1.442695
      %v3227 = vpow.pop %v3226
      %v3228 = vmul.f32 %v3167, 1.442695
      %v3229 = vpow.pop %v3228
      %v3230 = vmul.f32 %v3168, 1.442695
      %v3231 = vpow.pop %v3230
      %v3232 = vmul.f32 %v3169, 1.442695
      %v3233 = vpow.pop %v3232
      %v3234 = vmul.f32 %v3170, 1.442695
      %v3235 = vpow.pop %v3234
      %v3236 = vmul.f32 %v3171, 1.442695
      %v3237 = vpow.pop %v3236
      %v3238 = vmul.f32 %v3172, 1.442695
      %v3239 = vpow.pop %v3238
      %v3240 = vmul.f32 %v3173, 1.442695
      %v3241 = vpow.pop %v3240
      %v3242 = vmul.f32 %v3174, 1.442695
      %v3243 = vpow.pop %v3242
      %v3244 = vmul.f32 %v3175, 1.442695
      %v3245 = vpow.pop %v3244
      %v3246 = vmul.f32 %v3176, 1.442695
      %v3247 = vpow.pop %v3246
      %v3248 = vmul.f32 %v3177, 1.442695
      %v3249 = vpow.pop %v3248
      %v3250 = vmul.f32 %v3178, 1.442695
      %v3251 = vpow.pop %v3250
      %v3252 = vmul.f32 %v3179, 1.442695
      %v3253 = vpow.pop %v3252
      %v3254 = vmul.f32 %v3180, 1.442695
      %v3255 = vpow.pop %v3254
      %v3256 = vmul.f32 %v3181, 1.442695
      %v3257 = vpow.pop %v3256
      %v3258 = vmul.f32 %v3182, 1.442695
      %v3259 = vpow.pop %v3258
      %v3260 = vmul.f32 %v3183, 1.442695
      %v3261 = vpow.pop %v3260
      %v3262 = vmul.f32 %v3184, 1.442695
      %v3263 = vpow.pop %v3262
      %v3264 = vmul.f32 %v3185, 1.442695
      %v3265 = vpow.pop %v3264
      %v3266 = vmul.f32 %v3186, 1.442695
      %v3267 = vpow.pop %v3266
      %v3268 = vmul.f32 %v3187, 1.442695
      %v3269 = vpow.pop %v3268
      %v3270 = vmul.f32 %v3188, 1.442695
      %v3271 = vpow.pop %v3270
      %v3272 = vmul.f32 %v3189, 1.442695
      %v3273 = vpow.pop %v3272
      %v3274 = vmul.f32 %v3190, 1.442695
      %v3275 = vpow.pop %v3274
      %v3276 = vmul.f32 %v3191, 1.442695
      %v3277 = vpow.pop %v3276
      %v3278 = vmul.f32 %v3192, 1.442695
      %v3279 = vpow.pop %v3278
      %v3280 = vmul.f32 %v3193, 1.442695
      %v3281 = vpow.pop %v3280
      %v3282 = vmul.f32 %v3194, 1.442695
      %v3283 = vpow.pop %v3282
      %v3284 = vmul.f32 %v3195, 1.442695
      %v3285 = vpow.pop %v3284
      %v3286 = vmul.f32 %v3196, 1.442695
      %v3287 = vpow.pop %v3286
      %v3288 = vmul.f32 %v3197, 1.442695
      %v3289 = vpow.pop %v3288
      %v3290 = vmul.f32 %v3198, 1.442695
      %v3291 = vpow.pop %v3290
      %v3292 = vmul.f32 %v3199, 1.442695
      %v3293 = vpow.pop %v3292
      %v3294 = vmul.f32 %v3200, 1.442695
      %v3295 = vpow.pop %v3294
      %v3296 = vmul.f32 %v3201, 1.442695
      %v3297 = vpow.pop %v3296
      %v3298 = vmul.f32 %v3202, 1.442695
      %v3299 = vpow.pop %v3298
      %v3300 = vmul.f32 %v3203, 1.442695
      %v3301 = vpow.pop %v3300
      %v3302 = vmul.f32 %v3204, 1.442695
      %v3303 = vpow.pop %v3302
      %v3304 = vmul.f32 %v3205, 1.442695
      %v3305 = vpow.pop %v3304
      %v3306 = vsel %vm1700, %v3209, 0.0
      %v3307 = vadd.f32 %v3207, %v3306
      %3308 = vadd.xlane.f32.xlu0 %v3307
      %v3309 = vpop.xlane.xlu0 %3308
      %v3310 = vsel %vm1700, %v3213, 0.0
      %v3311 = vadd.f32 %v3211, %v3310
      %3312 = vadd.xlane.f32.xlu0 %v3311
      %v3313 = vpop.xlane.xlu0 %3312
      %v3314 = vsel %vm1700, %v3217, 0.0
      %v3315 = vadd.f32 %v3215, %v3314
      %3316 = vadd.xlane.f32.xlu0 %v3315
      %v3317 = vpop.xlane.xlu0 %3316
      %v3318 = vsel %vm1700, %v3221, 0.0
      %v3319 = vadd.f32 %v3219, %v3318
      %3320 = vadd.xlane.f32.xlu0 %v3319
      %v3321 = vpop.xlane.xlu0 %3320
      %v3322 = vsel %vm1700, %v3225, 0.0
      %v3323 = vadd.f32 %v3223, %v3322
      %3324 = vadd.xlane.f32.xlu0 %v3323
      %v3325 = vpop.xlane.xlu0 %3324
      %v3326 = vsel %vm1700, %v3229, 0.0
      %v3327 = vadd.f32 %v3227, %v3326
      %3328 = vadd.xlane.f32.xlu0 %v3327
      %v3329 = vpop.xlane.xlu0 %3328
      %v3330 = vsel %vm1700, %v3233, 0.0
      %v3331 = vadd.f32 %v3231, %v3330
      %3332 = vadd.xlane.f32.xlu0 %v3331
      %v3333 = vpop.xlane.xlu0 %3332
      %v3334 = vsel %vm1700, %v3237, 0.0
      %v3335 = vadd.f32 %v3235, %v3334
      %3336 = vadd.xlane.f32.xlu0 %v3335
      %v3337 = vpop.xlane.xlu0 %3336
      %v3338 = vsel %vm1700, %v3241, 0.0
      %v3339 = vadd.f32 %v3239, %v3338
      %3340 = vadd.xlane.f32.xlu0 %v3339
      %v3341 = vpop.xlane.xlu0 %3340
      %v3342 = vsel %vm1700, %v3245, 0.0
      %v3343 = vadd.f32 %v3243, %v3342
      %3344 = vadd.xlane.f32.xlu0 %v3343
      %v3345 = vpop.xlane.xlu0 %3344
      %v3346 = vsel %vm1700, %v3249, 0.0
      %v3347 = vadd.f32 %v3247, %v3346
      %3348 = vadd.xlane.f32.xlu0 %v3347
      %v3349 = vpop.xlane.xlu0 %3348
      %v3350 = vsel %vm1700, %v3253, 0.0
      %v3351 = vadd.f32 %v3251, %v3350
      %3352 = vadd.xlane.f32.xlu0 %v3351
      %v3353 = vpop.xlane.xlu0 %3352
      %v3354 = vsel %vm1700, %v3257, 0.0
      %v3355 = vadd.f32 %v3255, %v3354
      %3356 = vadd.xlane.f32.xlu0 %v3355
      %v3357 = vpop.xlane.xlu0 %3356
      %v3358 = vsel %vm1700, %v3261, 0.0
      %v3359 = vadd.f32 %v3259, %v3358
      %3360 = vadd.xlane.f32.xlu0 %v3359
      %v3361 = vpop.xlane.xlu0 %3360
      %v3362 = vsel %vm1700, %v3265, 0.0
      %v3363 = vadd.f32 %v3263, %v3362
      %3364 = vadd.xlane.f32.xlu0 %v3363
      %v3365 = vpop.xlane.xlu0 %3364
      %v3366 = vsel %vm1700, %v3269, 0.0
      %v3367 = vadd.f32 %v3267, %v3366
      %3368 = vadd.xlane.f32.xlu0 %v3367
      %v3369 = vpop.xlane.xlu0 %3368
      %v3370 = vsel %vm1700, %v3273, 0.0
      %v3371 = vadd.f32 %v3271, %v3370
      %3372 = vadd.xlane.f32.xlu0 %v3371
      %v3373 = vpop.xlane.xlu0 %3372
      %v3374 = vsel %vm1700, %v3277, 0.0
      %v3375 = vadd.f32 %v3275, %v3374
      %3376 = vadd.xlane.f32.xlu0 %v3375
      %v3377 = vpop.xlane.xlu0 %3376
      %v3378 = vsel %vm1700, %v3281, 0.0
      %v3379 = vadd.f32 %v3279, %v3378
      %3380 = vadd.xlane.f32.xlu0 %v3379
      %v3381 = vpop.xlane.xlu0 %3380
      %v3382 = vsel %vm1700, %v3285, 0.0
      %v3383 = vadd.f32 %v3283, %v3382
      %3384 = vadd.xlane.f32.xlu0 %v3383
      %v3385 = vpop.xlane.xlu0 %3384
      %v3386 = vsel %vm1700, %v3289, 0.0
      %v3387 = vadd.f32 %v3287, %v3386
      %3388 = vadd.xlane.f32.xlu0 %v3387
      %v3389 = vpop.xlane.xlu0 %3388
      %v3390 = vsel %vm1700, %v3293, 0.0
      %v3391 = vadd.f32 %v3291, %v3390
      %3392 = vadd.xlane.f32.xlu0 %v3391
      %v3393 = vpop.xlane.xlu0 %3392
      %v3394 = vsel %vm1700, %v3297, 0.0
      %v3395 = vadd.f32 %v3295, %v3394
      %3396 = vadd.xlane.f32.xlu0 %v3395
      %v3397 = vpop.xlane.xlu0 %3396
      %v3398 = vsel %vm1700, %v3301, 0.0
      %v3399 = vadd.f32 %v3299, %v3398
      %3400 = vadd.xlane.f32.xlu0 %v3399
      %v3401 = vpop.xlane.xlu0 %3400
      %v3402 = vsel %vm1803, %v3303, 0.0
      %v3403 = vsel %vm2218, %v3305, 0.0
      %v3404 = vadd.f32 %v3402, %v3403
      %3405 = vadd.xlane.f32.xlu0 %v3404
      %v3406 = vpop.xlane.xlu0 %3405
      %v3407 = vrcp.pop %v3309
      %v3408 = vrcp.pop %v3313
      %v3409 = vrcp.pop %v3317
      %v3410 = vrcp.pop %v3321
      %v3411 = vrcp.pop %v3325
      %v3412 = vrcp.pop %v3329
      %v3413 = vrcp.pop %v3333
      %v3414 = vrcp.pop %v3337
      %v3415 = vrcp.pop %v3341
      %v3416 = vrcp.pop %v3345
      %v3417 = vrcp.pop %v3349
      %v3418 = vrcp.pop %v3353
      %v3419 = vrcp.pop %v3357
      %v3420 = vrcp.pop %v3361
      %v3421 = vrcp.pop %v3365
      %v3422 = vrcp.pop %v3369
      %v3423 = vrcp.pop %v3373
      %v3424 = vrcp.pop %v3377
      %v3425 = vrcp.pop %v3381
      %v3426 = vrcp.pop %v3385
      %v3427 = vrcp.pop %v3389
      %v3428 = vrcp.pop %v3393
      %v3429 = vrcp.pop %v3397
      %v3430 = vrcp.pop %v3401
      %v3431 = vrcp.pop %v3406
      %v3432 = vmul.f32 %v3207, %v3407
      %v3433 = vmul.f32 %v3209, %v3407
      %v3434 = vmul.f32 %v3211, %v3408
      %v3435 = vmul.f32 %v3213, %v3408
      %v3436 = vmul.f32 %v3215, %v3409
      %v3437 = vmul.f32 %v3217, %v3409
      %v3438 = vmul.f32 %v3219, %v3410
      %v3439 = vmul.f32 %v3221, %v3410
      %v3440 = vmul.f32 %v3223, %v3411
      %v3441 = vmul.f32 %v3225, %v3411
      %v3442 = vmul.f32 %v3227, %v3412
      %v3443 = vmul.f32 %v3229, %v3412
      %v3444 = vmul.f32 %v3231, %v3413
      %v3445 = vmul.f32 %v3233, %v3413
      %v3446 = vmul.f32 %v3235, %v3414
      %v3447 = vmul.f32 %v3237, %v3414
      %v3448 = vmul.f32 %v3239, %v3415
      %v3449 = vmul.f32 %v3241, %v3415
      %v3450 = vmul.f32 %v3243, %v3416
      %v3451 = vmul.f32 %v3245, %v3416
      %v3452 = vmul.f32 %v3247, %v3417
      %v3453 = vmul.f32 %v3249, %v3417
      %v3454 = vmul.f32 %v3251, %v3418
      %v3455 = vmul.f32 %v3253, %v3418
      %v3456 = vmul.f32 %v3255, %v3419
      %v3457 = vmul.f32 %v3257, %v3419
      %v3458 = vmul.f32 %v3259, %v3420
      %v3459 = vmul.f32 %v3261, %v3420
      %v3460 = vmul.f32 %v3263, %v3421
      %v3461 = vmul.f32 %v3265, %v3421
      %v3462 = vmul.f32 %v3267, %v3422
      %v3463 = vmul.f32 %v3269, %v3422
      %v3464 = vmul.f32 %v3271, %v3423
      %v3465 = vmul.f32 %v3273, %v3423
      %v3466 = vmul.f32 %v3275, %v3424
      %v3467 = vmul.f32 %v3277, %v3424
      %v3468 = vmul.f32 %v3279, %v3425
      %v3469 = vmul.f32 %v3281, %v3425
      %v3470 = vmul.f32 %v3283, %v3426
      %v3471 = vmul.f32 %v3285, %v3426
      %v3472 = vmul.f32 %v3287, %v3427
      %v3473 = vmul.f32 %v3289, %v3427
      %v3474 = vmul.f32 %v3291, %v3428
      %v3475 = vmul.f32 %v3293, %v3428
      %v3476 = vmul.f32 %v3295, %v3429
      %v3477 = vmul.f32 %v3297, %v3429
      %v3478 = vmul.f32 %v3299, %v3430
      %v3479 = vmul.f32 %v3301, %v3430
      %v3480 = vmul.f32 %v3303, %v3431
      %v3481 = vmul.f32 %v3305, %v3431
      %v3482 = vpack.c.bf16 %v482, %v478
      %v3483 = vpack.c.bf16 %v484, %v480
      %v3484 = vpack.c.bf16 %v3434, %v3432
      %v3485 = vpack.c.bf16 %v3435, %v3433
      %v3486 = vpack.c.bf16 %v3438, %v3436
      %v3487 = vpack.c.bf16 %v3439, %v3437
      %v3488 = vpack.c.bf16 %v3442, %v3440
      %v3489 = vpack.c.bf16 %v3443, %v3441
      %v3490 = vpack.c.bf16 %v3446, %v3444
      %v3491 = vpack.c.bf16 %v3447, %v3445
      %v3492 = vpack.c.bf16 %v3450, %v3448
      %v3493 = vpack.c.bf16 %v3451, %v3449
      %v3494 = vpack.c.bf16 %v3454, %v3452
      %v3495 = vpack.c.bf16 %v3455, %v3453
      %v3496 = vpack.c.bf16 %v3458, %v3456
      %v3497 = vpack.c.bf16 %v3459, %v3457
      %v3498 = vpack.c.bf16 %v3462, %v3460
      %v3499 = vpack.c.bf16 %v3463, %v3461
      %v3500 = vpack.c.bf16 %v3466, %v3464
      %v3501 = vpack.c.bf16 %v3467, %v3465
      %v3502 = vpack.c.bf16 %v3470, %v3468
      %v3503 = vpack.c.bf16 %v3471, %v3469
      %v3504 = vpack.c.bf16 %v3474, %v3472
      %v3505 = vpack.c.bf16 %v3475, %v3473
      %v3506 = vpack.c.bf16 %v3478, %v3476
      %v3507 = vpack.c.bf16 %v3479, %v3477
      %v3508 = vpack.c.bf16 %v3480, %v3480
      %v3509 = vpack.c.bf16 %v3481, %v3481
      %v3511 = vsel %vm1700, %v3483, 0
      %v3514 = vsel %vm1700, %v3485, 0
      %v3517 = vsel %vm1700, %v3487, 0
      %v3520 = vsel %vm1700, %v3489, 0
      %v3523 = vsel %vm1700, %v3491, 0
      %v3526 = vsel %vm1700, %v3493, 0
      %v3529 = vsel %vm1700, %v3495, 0
      %v3532 = vsel %vm1700, %v3497, 0
      %v3535 = vsel %vm1700, %v3499, 0
      %v3538 = vsel %vm1700, %v3501, 0
      %v3541 = vsel %vm1700, %v3503, 0
      %v3544 = vsel %vm1700, %v3505, 0
      %v3547 = vsel %vm1700, %v3507, 0
      %v3550 = vsel %vm1700, %v3509, 0
      %3552 = vmatprep.subr.bf16.mxu0 %v3514
      %3553 = vmatpush1.bf16.xpose.msra.mxu0 %v3484
      %3554 = vmatprep.subr.bf16.mxu0 %v3517
      %3555 = vmatpush1.bf16.xpose.msra.mxu0 %v3486
      %3556 = vmatprep.subr.bf16.mxu0 %v3520
      %3557 = vmatpush1.bf16.xpose.msra.mxu0 %v3488
      %3558 = vmatprep.subr.bf16.mxu0 %v3523
      %3559 = vmatpush1.bf16.xpose.msra.mxu0 %v3490
      %3560 = vmatprep.subr.bf16.mxu0 %v3526
      %3561 = vmatpush1.bf16.xpose.msra.mxu0 %v3492
      %3562 = vmatprep.subr.bf16.mxu0 %v3529
      %3563 = vmatpush1.bf16.xpose.msra.mxu0 %v3494
      %3564 = vmatprep.subr.bf16.mxu0 %v3532
      %3565 = vmatpush1.bf16.xpose.msra.mxu0 %v3496
      %3566 = vmatprep.subr.bf16.mxu0 %v3535
      %3567 = vmatpush1.bf16.xpose.msra.mxu0 %v3498
      %3568 = vmatprep.subr.bf16.mxu0 %v3538
      %3569 = vmatpush1.bf16.xpose.msra.mxu0 %v3500
      %3570 = vmatprep.subr.bf16.mxu0 %v3541
      %3571 = vmatpush1.bf16.xpose.msra.mxu0 %v3502
      %3572 = vmatprep.subr.bf16.mxu0 %v3544
      %3573 = vmatpush1.bf16.xpose.msra.mxu0 %v3504
      %3574 = vmatprep.subr.bf16.mxu0 %v3547
      %3575 = vmatpush1.bf16.xpose.msra.mxu0 %v3506
      %3576 = vmatprep.subr.bf16.mxu0 %v3550
      %3577 = vmatpush1.bf16.xpose.msra.mxu0 %v3508
      %3578 = vmatprep.subr.bf16.mxu0 0
      %3579 = vmatpush1.bf16.xpose.msra.mxu0 0
      %3580 = vmatprep.subr.bf16.mxu0 0
      %3581 = vmatpush1.bf16.xpose.msra.mxu0 0
      %3582 = vmatprep.subr.bf16.mxu0 0
      %3583 = vmatpush1.bf16.xpose.msra.mxu0 0
      %3584 = vmatprep.mubr.bf16.mxu0 %v3511
      %3585 = vmatmul.mubr.bf16.gmra.mrb[0].mxu0 %v3482
      %v3586 = vpop.f32.mrb[0].mxu0
      %v3587 = vadd.f32 0.0, %v3586
      %v3588 = vpop.f32.mrb[0].mxu0
      %v3589 = vadd.f32 0.0, %v3588
      %v3590 = vpop.f32.mrb[0].mxu0
      %v3591 = vadd.f32 0.0, %v3590
      %v3592 = vpop.f32.mrb[0].mxu0
      %v3593 = vadd.f32 0.0, %v3592
      %3594 = vdwg.mxu0
      %v3595 = vmax.f32 %v2654, 0.0
      %v3596 = vmax.f32 %v2656, 0.0
      %v3597 = vmax.f32 %v2658, 0.0
      %v3598 = vmax.f32 %v2660, 0.0
      %v3599 = vmax.f32 %v3587, 0.0
      %v3600 = vmax.f32 %v3589, 0.0
      %v3601 = vmax.f32 %v3591, 0.0
      %v3602 = vmax.f32 %v3593, 0.0
      %v3603 = vld [vmem:[%s7] sm:$0xff]
      %v3604 = vld [vmem:[%s7 + $0x8] sm:$0xff]
      %v3605 = vpack.c.bf16 %v3604, %v3603
      %v3606 = vpack.c.bf16 %v3597, %v3595
      %v3607 = vpack.c.bf16 %v3598, %v3596
      %v3608 = vpack.c.bf16 %v3601, %v3599
      %v3609 = vpack.c.bf16 %v3602, %v3600
      %v3610 = vld [vmem:[%s8] sm:$0xff]
      %v3611 = vld [vmem:[%s8 + $0x8] sm:$0xff]
      %3613 = vset.pattern.permute.xlu0 0
      %3614 = vperm.xlu0 %3613, %v3610
      %v3615 = vpop.permute.xlu0 %3614
      %3618 = vset.pattern.permute.xlu0 0
      %3619 = vperm.xlu0 %3618, %v3611
      %v3620 = vpop.permute.xlu0 %3619
      %v3623 = vsel %vm1198, %v3605, 0
      %3625 = vmatprep.subr.bf16.mxu0 %v3607
      %3626 = vmatpush1.bf16.msra.mxu0 %v3606
      %3627 = vmatprep.subr.bf16.mxu0 %v3609
      %3628 = vmatpush1.bf16.msra.mxu0 %v3608
      %3629 = vmatprep.subr.bf16.mxu0 0
      %3630 = vmatpush1.bf16.msra.mxu0 0
      %3631 = vmatprep.subr.bf16.mxu0 0
      %3632 = vmatpush1.bf16.msra.mxu0 0
      %3633 = vmatprep.subr.bf16.mxu0 0
      %3634 = vmatpush1.bf16.msra.mxu0 0
      %3635 = vmatprep.subr.bf16.mxu0 0
      %3636 = vmatpush1.bf16.msra.mxu0 0
      %3637 = vmatprep.subr.bf16.mxu0 0
      %3638 = vmatpush1.bf16.msra.mxu0 0
      %3639 = vmatprep.subr.bf16.mxu0 0
      %3640 = vmatpush1.bf16.msra.mxu0 0
      %3641 = vmatprep.subr.bf16.mxu0 0
      %3642 = vmatpush1.bf16.msra.mxu0 0
      %3643 = vmatprep.subr.bf16.mxu0 0
      %3644 = vmatpush1.bf16.msra.mxu0 0
      %3645 = vmatprep.subr.bf16.mxu0 0
      %3646 = vmatpush1.bf16.msra.mxu0 0
      %3647 = vmatprep.subr.bf16.mxu0 0
      %3648 = vmatpush1.bf16.msra.mxu0 0
      %3649 = vmatprep.subr.bf16.mxu0 0
      %3650 = vmatpush1.bf16.msra.mxu0 0
      %3651 = vmatprep.subr.bf16.mxu0 0
      %3652 = vmatpush1.bf16.msra.mxu0 0
      %3653 = vmatprep.subr.bf16.mxu0 0
      %3654 = vmatpush1.bf16.msra.mxu0 0
      %3655 = vmatprep.subr.bf16.mxu0 0
      %3656 = vmatpush1.bf16.msra.mxu0 0
      %3657 = vmatprep.mubr.bf16.mxu0 0
      %3658 = vmatmul.mubr.bf16.gmra.mrb[0].mxu0 %v3623
      %v3659 = vpop.f32.mrb[0].mxu0
      %v3660 = vadd.f32 %v3615, %v3659
      %v3661 = vpop.f32.mrb[0].mxu0
      %v3662 = vadd.f32 %v3615, %v3661
      %v3663 = vpop.f32.mrb[0].mxu0
      %v3664 = vadd.f32 %v3620, %v3663
      %v3665 = vpop.f32.mrb[0].mxu0
      %v3666 = vadd.f32 %v3620, %v3665
      %3667 = vdwg.mxu0
      %3668 = vst [vmem:[%s332] sm:$0xff] %v3660
      %3669 = vst.msk [vmem:[%s332 + $0x8] sm:$0xff] %vm1700, %v3662
      %3670 = vst [vmem:[%s332 + $0x10] sm:$0xff] %v3664
      %3671 = vst.msk [vmem:[%s332 + $0x18] sm:$0xff] %vm1700, %v3666
      %p3672 = scmp.lt.s32.totalorder %s20, 1
      %s3673 = scalar_select %p3672, %s20, 1
      %s3674 = smul.addr %s3673, 4
      %s3675 = smul.addr %s3674, 8
      %s3676 = scalar_lea.vmem %s9, %s3675
      // Predicated region
      $region57: #{_lambda_.1} parent=55 // pred_check
        %p3677 = pneg %p232
      $region58: #{_lambda_.1} parent=55 // pred_check_branch
        %3679 = sbr.rel (%p3677) target = $region60
      $region59: #{_lambda_.1} parent=55 // pred_region
        _
      $region60: #{_lambda_.1} parent=55 // pred_fallthru
        _
    $region56: #{_lambda_.1} parent=5 // pred_fallthru
      _
    %p3680 = scmp.le.s32.totalorder 2, %s15
    // Predicated region
    $region61: #{_lambda_.1} parent=5 // pred_check
      %p3681 = pneg %p3680
    $region62: #{_lambda_.1} parent=5 // pred_check_branch
      %3683 = sbr.rel (%p3681) target = $region64
    $region63: #{_lambda_.1} parent=5 // pred_region
      %s3684 = ssub.s32 %s15, 2
      // Predicated region
      $region65: #{_lambda_.1} parent=63 // pred_check
        %p3685 = pneg %p238
      $region66: #{_lambda_.1} parent=63 // pred_check_branch
        %3687 = sbr.rel (%p3685) target = $region68
      $region67: #{_lambda_.1} parent=63 // pred_region
        %p3688 = scmp.lt.s32.totalorder %s21, 1
        %s3689 = scalar_select %p3688, %s21, 1
        %s3690 = smul.addr %s3689, 4
        %s3691 = smul.addr %s3690, 8
        %s3692 = scalar_lea.vmem %s9, %s3691
      $region68: #{_lambda_.1} parent=63 // pred_fallthru
        _
    $region64: #{_lambda_.1} parent=5 // pred_fallthru
      _
  $region6: #{_lambda_.1} parent=0 // loop_footer
    %s19 = sadd.s32 1, %s15
  $region7: #{_lambda_.1} parent=0 // loop_footer_branch
    %14 = sbr.rel target = $region3
  $region8: #{_lambda_.1} parent=0 // loop_exit
    _

</llo_original>
